<compile_context>
chip_gen: v7x
topology: tpu7x:2x2x1
jax: 0.10.0
libtpu: 0.0.40
codegen_flags: <defaults>
</compile_context>

<pallas_src>
import functools
import math

import jax
import jax.numpy as jnp
from jax import lax
from jax.experimental import pallas as pl
from jax.experimental.pallas import tpu as pltpu

_MIB = 1024 * 1024
_VMEM_LIMIT_CACHE = None


def _vmem_limit():
    """Generation-aware VMEM budget (v7x has 64 MiB/TC, v5e/v6e have 128 MiB)."""
    global _VMEM_LIMIT_CACHE
    if _VMEM_LIMIT_CACHE is None:
        try:
            cap = pltpu.get_tpu_info().vmem_capacity_bytes
            if cap >= 100 * _MIB:
                _VMEM_LIMIT_CACHE = 96 * _MIB        # v5e / v6e
            else:
                _VMEM_LIMIT_CACHE = max(32 * _MIB, int(cap * 0.6))  # v7x ~38 MiB
        except Exception:
            _VMEM_LIMIT_CACHE = 32 * _MIB            # conservative fallback
    return _VMEM_LIMIT_CACHE


def _pick_tile(dim, target, align):
    """Largest tile <= target that divides `dim` and is `align`-aligned, else full dim."""
    if dim <= target:
        return dim
    t = (target // align) * align
    while t >= align:
        if dim % t == 0:
            return t
        t -= align
    return dim


# ----------------------------------------------------------------------------
# Tiled linear kernel: bf16 MXU inputs, f32 VMEM accumulator.
# Fused into the last-K finalize: bias, ReLU, residual-add + LayerNorm, log_softmax.
# ----------------------------------------------------------------------------
def _make_linear_kernel(*, has_bias, relu, fuse_ln, fuse_logsoftmax, ln_eps):
    def kernel(*refs):
        refs = list(refs)
        x_ref = refs.pop(0)
        w_ref = refs.pop(0)
        b_ref = refs.pop(0) if has_bias else None
        if fuse_ln:
            res_ref = refs.pop(0)
            g_ref = refs.pop(0)
            beta_ref = refs.pop(0)
        o_ref = refs.pop(0)
        acc_ref = refs.pop(0)

        k = pl.program_id(2)

        @pl.when(k == 0)
        def _init():
            acc_ref[...] = jnp.zeros(acc_ref.shape, acc_ref.dtype)

        # operands are already bf16 in HBM -> no per-tile cast work
        acc_ref[...] += jnp.dot(x_ref[...], w_ref[...],
                                preferred_element_type=jnp.float32)

        @pl.when(k == pl.num_programs(2) - 1)
        def _finalize():
            r = acc_ref[...]
            if has_bias:
                r = r + b_ref[...].astype(jnp.float32)
            if relu:
                r = jnp.maximum(r, 0.0)
            if fuse_ln:
                # residual-add + LayerNorm fused here (saves an HBM round trip)
                z = r + res_ref[...].astype(jnp.float32)
                mean = jnp.mean(z, axis=-1, keepdims=True)
                zc = z - mean
                var = jnp.mean(zc * zc, axis=-1, keepdims=True)
                r = (zc * lax.rsqrt(var + ln_eps)
                     * g_ref[...].astype(jnp.float32)
                     + beta_ref[...].astype(jnp.float32))
            if fuse_logsoftmax:
                m = jnp.max(r, axis=-1, keepdims=True)
                lse = jnp.log(jnp.sum(jnp.exp(r - m), axis=-1, keepdims=True)) + m
                r = r - lse
            o_ref[...] = r.astype(o_ref.dtype)

    return kernel


def pallas_linear(x, w, b=None, *, relu=False, residual=None, ln_gamma=None,
                  ln_beta=None, ln_eps=1e-5, log_softmax=False,
                  out_dtype=jnp.bfloat16, tm=256, tn=256, tk=1024):
    """x:(M,K) @ w:(K,N) [+bias][ReLU][+residual,LayerNorm][log_softmax] -> (M,N)."""
    m, k = x.shape
    kw, n = w.shape
    assert k == kw
    fuse_ln = residual is not None
    if fuse_ln or log_softmax:
        # row statistics need the whole output row in one tile
        # TODO(synk): for very large N (e.g. 32k+ vocab) switch to an N-blocked
        # two-pass logsumexp / LayerNorm instead of forcing tn == N.
        tn = n
    tm = _pick_tile(m, tm, 8)
    tn = _pick_tile(n, tn, 128)
    tk = _pick_tile(k, tk, 128)
    grid = (m // tm, n // tn, k // tk)

    in_specs = [
        pl.BlockSpec((tm, tk), lambda i, j, kk: (i, kk)),
        pl.BlockSpec((tk, tn), lambda i, j, kk: (kk, j)),
    ]
    args = [x, w]
    if b is not None:
        in_specs.append(pl.BlockSpec((1, tn), lambda i, j, kk: (0, j)))
        args.append(b.reshape(1, n))
    if fuse_ln:
        in_specs.append(pl.BlockSpec((tm, tn), lambda i, j, kk: (i, j)))
        args.append(residual)
        in_specs.append(pl.BlockSpec((1, tn), lambda i, j, kk: (0, j)))
        args.append(ln_gamma.reshape(1, n))
        in_specs.append(pl.BlockSpec((1, tn), lambda i, j, kk: (0, j)))
        args.append(ln_beta.reshape(1, n))

    kernel = _make_linear_kernel(has_bias=b is not None, relu=relu,
                                 fuse_ln=fuse_ln, fuse_logsoftmax=log_softmax,
                                 ln_eps=ln_eps)
    # TODO(synk): consider pipeline_mode=pl.Buffered(3) on the K-varying inputs for
    # deeper DMA overlap once shapes are large enough to expose DMA latency.
    return pl.pallas_call(
        kernel,
        out_shape=jax.ShapeDtypeStruct((m, n), out_dtype),
        grid_spec=pltpu.PrefetchScalarGridSpec(
            num_scalar_prefetch=0,
            grid=grid,
            in_specs=in_specs,
            out_specs=pl.BlockSpec((tm, tn), lambda i, j, kk: (i, j)),
            scratch_shapes=[pltpu.VMEM((tm, tn), jnp.float32)],
        ),
        compiler_params=pltpu.CompilerParams(
            dimension_semantics=("parallel", "parallel", "arbitrary"),
            vmem_limit_bytes=_vmem_limit()),
    )(*args)


# ----------------------------------------------------------------------------
# Fused QKV projection: x read once, three bf16 outputs (head-major columns).
# 1/sqrt(head_dim) is folded into w_q at parameter-prep time.
# ----------------------------------------------------------------------------
def _qkv_proj_kernel(x_ref, wq_ref, wk_ref, wv_ref, q_ref, k_ref, v_ref,
                     qacc, kacc, vacc):
    kk = pl.program_id(2)

    @pl.when(kk == 0)
    def _init():
        qacc[...] = jnp.zeros(qacc.shape, qacc.dtype)
        kacc[...] = jnp.zeros(kacc.shape, kacc.dtype)
        vacc[...] = jnp.zeros(vacc.shape, vacc.dtype)

    x = x_ref[...]
    qacc[...] += jnp.dot(x, wq_ref[...], preferred_element_type=jnp.float32)
    kacc[...] += jnp.dot(x, wk_ref[...], preferred_element_type=jnp.float32)
    vacc[...] += jnp.dot(x, wv_ref[...], preferred_element_type=jnp.float32)

    @pl.when(kk == pl.num_programs(2) - 1)
    def _finalize():
        q_ref[...] = qacc[...].astype(q_ref.dtype)
        k_ref[...] = kacc[...].astype(k_ref.dtype)
        v_ref[...] = vacc[...].astype(v_ref.dtype)


def pallas_qkv_proj(x, wq, wk, wv, *, tm=256, tn=256, tk=1024):
    m, k = x.shape
    n = wq.shape[1]
    tm = _pick_tile(m, tm, 8)
    tn = _pick_tile(n, tn, 128)
    tk = _pick_tile(k, tk, 128)
    grid = (m // tm, n // tn, k // tk)
    spec_x = pl.BlockSpec((tm, tk), lambda i, j, kk: (i, kk))
    spec_w = pl.BlockSpec((tk, tn), lambda i, j, kk: (kk, j))
    spec_o = pl.BlockSpec((tm, tn), lambda i, j, kk: (i, j))
    out_sd = jax.ShapeDtypeStruct((m, n), jnp.bfloat16)
    return pl.pallas_call(
        _qkv_proj_kernel,
        out_shape=(out_sd, out_sd, out_sd),
        grid_spec=pltpu.PrefetchScalarGridSpec(
            num_scalar_prefetch=0,
            grid=grid,
            in_specs=[spec_x, spec_w, spec_w, spec_w],
            out_specs=(spec_o, spec_o, spec_o),
            scratch_shapes=[pltpu.VMEM((tm, tn), jnp.float32) for _ in range(3)],
        ),
        compiler_params=pltpu.CompilerParams(
            dimension_semantics=("parallel", "parallel", "arbitrary"),
            vmem_limit_bytes=_vmem_limit()),
    )(x, wq, wk, wv)


# ----------------------------------------------------------------------------
# Flash-style causal attention: G heads per grid step (lane-dense output),
# KV DMA skipped above the diagonal, mask applied on diagonal tiles only.
# ----------------------------------------------------------------------------
def _flash_attn_kernel(q_ref, k_ref, v_ref, o_ref, m_sc, l_sc, acc_sc, *,
                       head_dim, nheads_blk):
    qi = pl.program_id(2)
    ki = pl.program_id(3)
    tq = q_ref.shape[1]
    tkv = k_ref.shape[1]

    @pl.when(ki == 0)
    def _init():
        m_sc[...] = jnp.full(m_sc.shape, -jnp.inf, m_sc.dtype)
        l_sc[...] = jnp.zeros(l_sc.shape, l_sc.dtype)
        acc_sc[...] = jnp.zeros(acc_sc.shape, acc_sc.dtype)

    def update(masked):
        if masked:
            # diagonal tile (tq == tkv) -> purely local lower-triangular mask
            keep = (lax.broadcasted_iota(jnp.int32, (tq, tkv), 1)
                    <= lax.broadcasted_iota(jnp.int32, (tq, tkv), 0))
        for g in range(nheads_blk):
            lo = g * head_dim
            hi = lo + head_dim
            q = q_ref[0, :, lo:hi]       # (tq, hd) bf16; 1/sqrt(hd) folded into w_q
            kk = k_ref[0, :, lo:hi]      # (tkv, hd) bf16
            v = v_ref[0, :, lo:hi]       # (tkv, hd) bf16
            s = lax.dot_general(q, kk, (((1,), (1,)), ((), ())),
                                preferred_element_type=jnp.float32)   # (tq, tkv)
            if masked:
                s = jnp.where(keep, s, -1e30)
            # TODO(synk): on v6e/v7x run the exp path in bf16 (EUP slot); keep f32 on v5e.
            m_prev = m_sc[g]
            m_new = jnp.maximum(m_prev, jnp.max(s, axis=-1, keepdims=True))
            alpha = jnp.exp(m_prev - m_new)
            p = jnp.exp(s - m_new)
            l_sc[g] = alpha * l_sc[g] + jnp.sum(p, axis=-1, keepdims=True)
            acc_sc[g] = alpha * acc_sc[g] + lax.dot_general(
                p.astype(jnp.bfloat16), v, (((1,), (0,)), ((), ())),
                preferred_element_type=jnp.float32)
            m_sc[g] = m_new

    @pl.when(ki < qi)          # fully-unmasked tile below the diagonal: no mask work
    def _():
        update(masked=False)

    @pl.when(ki == qi)         # diagonal tile: apply the causal mask here only
    def _():
        update(masked=True)

    # ki > qi tiles: compute skipped; DMA also skipped (kv index_map clamped).

    @pl.when(ki == pl.num_programs(3) - 1)
    def _finalize():
        for g in range(nheads_blk):
            inv = pl.reciprocal(l_sc[g], approx=True)   # EUP, off the VPU path
            o_ref[0, :, g * head_dim:(g + 1) * head_dim] = (
                acc_sc[g] * inv).astype(o_ref.dtype)


def pallas_causal_attention(q, k, v, nheads):
    """q, k, v: (B, S, E) bf16 with head-major columns -> (B, S, E) bf16."""
    bsz, seq, emb = q.shape
    hd = emb // nheads
    # heads per grid step: smallest divisor of H making the block lane-dense
    # (G*hd a multiple of 128); otherwise all heads (block == full E, still legal).
    g_heads = nheads
    for d in range(1, nheads + 1):
        if nheads % d == 0 and (d * hd) % 128 == 0:
            g_heads = d
            break
    blk_e = g_heads * hd
    tq = _pick_tile(seq, 128, 8)
    tkv = tq                      # equal tiles: diagonal tile handles all masking
    nq, nkv = seq // tq, seq // tkv

    q_spec = pl.BlockSpec((1, tq, blk_e), lambda b, hg, qi, ki: (b, qi, hg))
    # clamp KV block index above the diagonal -> Pallas skips the redundant DMA
    kv_spec = pl.BlockSpec((1, tkv, blk_e),
                           lambda b, hg, qi, ki: (b, jnp.minimum(qi, ki), hg))
    out_spec = pl.BlockSpec((1, tq, blk_e), lambda b, hg, qi, ki: (b, qi, hg))

    kernel = functools.partial(_flash_attn_kernel, head_dim=hd, nheads_blk=g_heads)
    return pl.pallas_call(
        kernel,
        out_shape=jax.ShapeDtypeStruct((bsz, seq, emb), q.dtype),
        grid_spec=pltpu.PrefetchScalarGridSpec(
            num_scalar_prefetch=0,
            grid=(bsz, nheads // g_heads, nq, nkv),
            in_specs=[q_spec, kv_spec, kv_spec],
            out_specs=out_spec,
            scratch_shapes=[
                pltpu.VMEM((g_heads, tq, 1), jnp.float32),    # running max
                pltpu.VMEM((g_heads, tq, 1), jnp.float32),    # running denominator
                pltpu.VMEM((g_heads, tq, hd), jnp.float32),   # running numerator
            ],
        ),
        compiler_params=pltpu.CompilerParams(
            dimension_semantics=("parallel", "parallel", "parallel", "arbitrary"),
            vmem_limit_bytes=_vmem_limit()),
    )(q, k, v)


# ----------------------------------------------------------------------------
# Full Transformer forward (matches the PyTorch module, eval mode)
# ----------------------------------------------------------------------------
def transformer_forward(tokens, params, *, nheads):
    bsz, seq = tokens.shape
    emb = params["emb"].shape[1]

    # embedding gather + positional encoding (plain-JAX glue), bf16 activations
    x = (params["emb"][tokens] + params["pos_enc"][:seq][None]).astype(jnp.bfloat16)

    for blk in params["blocks"]:
        h_in = x.reshape(bsz * seq, emb)
        q, k, v = pallas_qkv_proj(h_in, blk["w_q"], blk["w_k"], blk["w_v"])
        att = pallas_causal_attention(q.reshape(bsz, seq, emb),
                                      k.reshape(bsz, seq, emb),
                                      v.reshape(bsz, seq, emb), nheads)
        # nn.Dropout -> identity at inference
        # out-projection + bias + residual-add + LayerNorm fused into one kernel
        n1 = pallas_linear(att.reshape(bsz * seq, emb), blk["w_proj"], blk["b_proj"],
                           residual=h_in, ln_gamma=blk["ln1_g"], ln_beta=blk["ln1_b"])
        ff = pallas_linear(n1, blk["w_ff1"], blk["b_ff1"], relu=True)
        n2 = pallas_linear(ff, blk["w_ff2"], blk["b_ff2"],
                           residual=n1, ln_gamma=blk["ln2_g"], ln_beta=blk["ln2_b"])
        x = n2.reshape(bsz, seq, emb)

    # logits matmul with log_softmax fused into the finalize (no (M, vocab) round trip)
    logp = pallas_linear(x.reshape(bsz * seq, emb), params["w_out"], params["b_out"],
                         log_softmax=True, out_dtype=jnp.float32)
    return logp.reshape(bsz, seq, -1)


# ----------------------------------------------------------------------------
# Parameter init (torch-style packed layout) + one-time kernel-friendly prep
# ----------------------------------------------------------------------------
def _linear_params(key, fan_in, fan_out, bias=True):
    kw, kb = jax.random.split(key)
    bound = 1.0 / math.sqrt(fan_in)
    w = jax.random.uniform(kw, (fan_in, fan_out), minval=-bound, maxval=bound,
                           dtype=jnp.float32)
    if not bias:
        return w, None
    b = jax.random.uniform(kb, (fan_out,), minval=-bound, maxval=bound,
                           dtype=jnp.float32)
    return w, b


def _positional_encoding(max_len, emb):
    position = jnp.arange(max_len, dtype=jnp.float32)[:, None]
    div_term = jnp.exp(jnp.arange(0, emb, 2, dtype=jnp.float32)
                       * (-math.log(10000.0) / emb))
    pe = jnp.zeros((max_len, emb), dtype=jnp.float32)
    pe = pe.at[:, 0::2].set(jnp.sin(position * div_term))
    pe = pe.at[:, 1::2].set(jnp.cos(position * div_term))
    return pe


def init_raw_params(key, *, vocab, emb, nblocks, ff_hidden, max_seq):
    keys = jax.random.split(key, 2 + nblocks)
    params = {
        "emb": jax.random.normal(keys[0], (vocab, emb), dtype=jnp.float32),
        "pos_enc": _positional_encoding(max_seq, emb),
    }
    blocks = []
    for i in range(nblocks):
        bk = jax.random.split(keys[2 + i], 4)
        w_qkv, _ = _linear_params(bk[0], emb, 3 * emb, bias=False)
        w_proj, b_proj = _linear_params(bk[1], emb, emb)
        w_ff1, b_ff1 = _linear_params(bk[2], emb, ff_hidden)
        w_ff2, b_ff2 = _linear_params(bk[3], ff_hidden, emb)
        blocks.append({
            "w_qkv": w_qkv,
            "w_proj": w_proj, "b_proj": b_proj,
            "ln1_g": jnp.ones((emb,), jnp.float32),
            "ln1_b": jnp.zeros((emb,), jnp.float32),
            "w_ff1": w_ff1, "b_ff1": b_ff1,
            "w_ff2": w_ff2, "b_ff2": b_ff2,
            "ln2_g": jnp.ones((emb,), jnp.float32),
            "ln2_b": jnp.zeros((emb,), jnp.float32),
        })
    params["blocks"] = blocks
    w_out, b_out = _linear_params(keys[1], emb, vocab)
    params["w_out"] = w_out
    params["b_out"] = b_out
    return params


def prepare_params(raw, *, nheads):
    """One-time, offline: bf16 weights, torch [h][q|k|v] columns split into per-head
    head-major w_q/w_k/w_v, and 1/sqrt(head_dim) folded into w_q."""
    emb = raw["emb"].shape[1]
    hd = emb // nheads
    scale = 1.0 / math.sqrt(hd)
    prepped = {
        "emb": raw["emb"],
        "pos_enc": raw["pos_enc"],
        "w_out": raw["w_out"].astype(jnp.bfloat16),
        "b_out": raw["b_out"],
    }
    blocks = []
    for blk in raw["blocks"]:
        w_qkv = blk["w_qkv"].reshape(emb, nheads, 3, hd)
        w_q = (w_qkv[:, :, 0, :] * scale).reshape(emb, emb).astype(jnp.bfloat16)
        w_k = w_qkv[:, :, 1, :].reshape(emb, emb).astype(jnp.bfloat16)
        w_v = w_qkv[:, :, 2, :].reshape(emb, emb).astype(jnp.bfloat16)
        blocks.append({
            "w_q": w_q, "w_k": w_k, "w_v": w_v,
            "w_proj": blk["w_proj"].astype(jnp.bfloat16), "b_proj": blk["b_proj"],
            "ln1_g": blk["ln1_g"], "ln1_b": blk["ln1_b"],
            "w_ff1": blk["w_ff1"].astype(jnp.bfloat16), "b_ff1": blk["b_ff1"],
            "w_ff2": blk["w_ff2"].astype(jnp.bfloat16), "b_ff2": blk["b_ff2"],
            "ln2_g": blk["ln2_g"], "ln2_b": blk["ln2_b"],
        })
    prepped["blocks"] = blocks
    return prepped


# ----------------------------------------------------------------------------
# Pure-JAX reference (same math as the PyTorch module; bf16 rounding points mirror
# the kernels so the comparison is tight)
# ----------------------------------------------------------------------------
def reference_forward(tokens, params, *, nheads):
    bsz, seq = tokens.shape
    emb = params["emb"].shape[1]
    hd = emb // nheads
    x = (params["emb"][tokens] + params["pos_enc"][:seq][None]).astype(jnp.bfloat16)

    def mm(a, w):
        return jnp.dot(a, w, preferred_element_type=jnp.float32)

    def layernorm(z, g, b, eps=1e-5):
        mu = jnp.mean(z, axis=-1, keepdims=True)
        zc = z - mu
        var = jnp.mean(zc * zc, axis=-1, keepdims=True)
        return zc * lax.rsqrt(var + eps) * g + b

    for blk in params["blocks"]:
        h_in = x.reshape(bsz * seq, emb)
        q = mm(h_in, blk["w_q"]).astype(jnp.bfloat16)   # scale already folded in
        k = mm(h_in, blk["w_k"]).astype(jnp.bfloat16)
        v = mm(h_in, blk["w_v"]).astype(jnp.bfloat16)
        q = q.reshape(bsz, seq, nheads, hd).transpose(0, 2, 1, 3)
        k = k.reshape(bsz, seq, nheads, hd).transpose(0, 2, 1, 3)
        v = v.reshape(bsz, seq, nheads, hd).transpose(0, 2, 1, 3)
        s = jnp.einsum("bhqd,bhkd->bhqk", q, k, preferred_element_type=jnp.float32)
        tri = jnp.tril(jnp.ones((seq, seq), dtype=jnp.float32))
        s = jnp.where(tri == 0.0, -1e30, s)
        p = jax.nn.softmax(s, axis=-1)
        o = jnp.einsum("bhqk,bhkd->bhqd", p.astype(jnp.bfloat16), v,
                       preferred_element_type=jnp.float32)
        att = o.transpose(0, 2, 1, 3).reshape(bsz * seq, emb).astype(jnp.bfloat16)
        y = mm(att, blk["w_proj"]) + blk["b_proj"]
        n1 = layernorm(y + h_in.astype(jnp.float32),
                       blk["ln1_g"], blk["ln1_b"]).astype(jnp.bfloat16)
        f = jnp.maximum(mm(n1, blk["w_ff1"]) + blk["b_ff1"], 0.0).astype(jnp.bfloat16)
        y2 = mm(f, blk["w_ff2"]) + blk["b_ff2"]
        n2 = layernorm(y2 + n1.astype(jnp.float32),
                       blk["ln2_g"], blk["ln2_b"]).astype(jnp.bfloat16)
        x = n2.reshape(bsz, seq, emb)

    logits = mm(x.reshape(bsz * seq, emb), params["w_out"]) + params["b_out"]
    return jax.nn.log_softmax(logits, axis=-1).reshape(bsz, seq, -1)


if __name__ == "__main__":
    VOCAB, EMB, NHEADS, NBLOCKS, FF_HIDDEN = 241, 32, 4, 2, 64
    MAX_SEQ, B, S = 16, 2, 8

    key = jax.random.PRNGKey(0)
    k_tok, k_par = jax.random.split(key)
    tokens = jax.random.randint(k_tok, (B, S), 0, VOCAB, dtype=jnp.int32)
    raw = init_raw_params(k_par, vocab=VOCAB, emb=EMB, nblocks=NBLOCKS,
                          ff_hidden=FF_HIDDEN, max_seq=MAX_SEQ)
    params = prepare_params(raw, nheads=NHEADS)

    fwd = jax.jit(functools.partial(transformer_forward, nheads=NHEADS))
    out = jax.block_until_ready(fwd(tokens, params))

    ref = reference_forward(tokens, params, nheads=NHEADS)
    assert out.shape == (B, S, VOCAB)
    assert bool(jnp.all(jnp.isfinite(out)))
    max_err = float(jnp.max(jnp.abs(out - ref)))
    assert jnp.allclose(out, ref, atol=5e-2, rtol=5e-2), f"mismatch, max_err={max_err}"

    print("KERNEL_OK")
</pallas_src>

<mosaic_0001>
module attributes {stable_mosaic.version = 11 : i64} {
  func.func @_qkv_proj_kernel(%arg0: i32, %arg1: i32, %arg2: i32, %arg3: memref<16x32xbf16, #tpu.memory_space<vmem>>, %arg4: memref<32x32xbf16, #tpu.memory_space<vmem>>, %arg5: memref<32x32xbf16, #tpu.memory_space<vmem>>, %arg6: memref<32x32xbf16, #tpu.memory_space<vmem>>, %arg7: memref<16x32xbf16, #tpu.memory_space<vmem>>, %arg8: memref<16x32xbf16, #tpu.memory_space<vmem>>, %arg9: memref<16x32xbf16, #tpu.memory_space<vmem>>, %arg10: memref<16x32xf32, #tpu.memory_space<vmem>>, %arg11: memref<16x32xf32, #tpu.memory_space<vmem>>, %arg12: memref<16x32xf32, #tpu.memory_space<vmem>>) attributes {dimension_semantics = [#tpu.dimension_semantics<parallel>, #tpu.dimension_semantics<parallel>, #tpu.dimension_semantics<arbitrary>], iteration_bounds = array<i64: 1, 1, 1>, scalar_prefetch = 0 : i64, scratch_operands = 3 : i64, tpu.core_type = #tpu.core_type<tc>, window_params = [{transform_indices = @transform_0, window_bounds = array<i64: 16, 32>}, {transform_indices = @transform_1, window_bounds = array<i64: 32, 32>}, {transform_indices = @transform_2, window_bounds = array<i64: 32, 32>}, {transform_indices = @transform_3, window_bounds = array<i64: 32, 32>}, {transform_indices = @transform_4, window_bounds = array<i64: 16, 32>}, {transform_indices = @transform_5, window_bounds = array<i64: 16, 32>}, {transform_indices = @transform_6, window_bounds = array<i64: 16, 32>}]} {
    %c0_i32 = arith.constant 0 : i32
    %0 = arith.cmpi eq, %arg2, %c0_i32 : i32
    %1 = arith.extui %0 : i1 to i32
    %c0_i32_0 = arith.constant 0 : i32
    %2 = arith.cmpi ne, %1, %c0_i32_0 : i32
    scf.if %2 {
      %cst_24 = arith.constant 0.000000e+00 : f32
      %22 = vector.broadcast %cst_24 : f32 to vector<16x32xf32>
      %c0_25 = arith.constant 0 : index
      %c0_26 = arith.constant 0 : index
      %23 = vector.load %arg10[%c0_25, %c0_26] : memref<16x32xf32, #tpu.memory_space<vmem>>, vector<16x32xf32>
      tpu.vector_store %arg10[%c0_25, %c0_26], %22 {strides = array<i32>} : memref<16x32xf32, #tpu.memory_space<vmem>>, vector<16x32xf32>,
      %cst_27 = arith.constant 0.000000e+00 : f32
      %24 = vector.broadcast %cst_27 : f32 to vector<16x32xf32>
      %c0_28 = arith.constant 0 : index
      %c0_29 = arith.constant 0 : index
      %25 = vector.load %arg11[%c0_28, %c0_29] : memref<16x32xf32, #tpu.memory_space<vmem>>, vector<16x32xf32>
      tpu.vector_store %arg11[%c0_28, %c0_29], %24 {strides = array<i32>} : memref<16x32xf32, #tpu.memory_space<vmem>>, vector<16x32xf32>,
      %cst_30 = arith.constant 0.000000e+00 : f32
      %26 = vector.broadcast %cst_30 : f32 to vector<16x32xf32>
      %c0_31 = arith.constant 0 : index
      %c0_32 = arith.constant 0 : index
      %27 = vector.load %arg12[%c0_31, %c0_32] : memref<16x32xf32, #tpu.memory_space<vmem>>, vector<16x32xf32>
      tpu.vector_store %arg12[%c0_31, %c0_32], %26 {strides = array<i32>} : memref<16x32xf32, #tpu.memory_space<vmem>>, vector<16x32xf32>,
    } else {
    }
    %c0 = arith.constant 0 : index
    %c0_1 = arith.constant 0 : index
    %3 = vector.load %arg3[%c0, %c0_1] : memref<16x32xbf16, #tpu.memory_space<vmem>>, vector<16x32xbf16>
    %c0_2 = arith.constant 0 : index
    %c0_3 = arith.constant 0 : index
    %4 = vector.load %arg10[%c0_2, %c0_3] : memref<16x32xf32, #tpu.memory_space<vmem>>, vector<16x32xf32>
    %c0_4 = arith.constant 0 : index
    %c0_5 = arith.constant 0 : index
    %5 = vector.load %arg4[%c0_4, %c0_5] : memref<32x32xbf16, #tpu.memory_space<vmem>>, vector<32x32xbf16>
    %cst = arith.constant dense<0.000000e+00> : vector<16x32xf32>
    %6 = tpu.matmul %3, %5, %cst {dimension_numbers = #tpu.dot_dimension_numbers<[1], [0], [0], [1], [0, 0, 1, 1], [], []>} : vector<16x32xbf16>, vector<32x32xbf16>, vector<16x32xf32> -> vector<16x32xf32>
    %7 = arith.addf %4, %6 : vector<16x32xf32>
    %c0_6 = arith.constant 0 : index
    %c0_7 = arith.constant 0 : index
    %8 = vector.load %arg10[%c0_6, %c0_7] : memref<16x32xf32, #tpu.memory_space<vmem>>, vector<16x32xf32>
    tpu.vector_store %arg10[%c0_6, %c0_7], %7 {strides = array<i32>} : memref<16x32xf32, #tpu.memory_space<vmem>>, vector<16x32xf32>,
    %c0_8 = arith.constant 0 : index
    %c0_9 = arith.constant 0 : index
    %9 = vector.load %arg11[%c0_8, %c0_9] : memref<16x32xf32, #tpu.memory_space<vmem>>, vector<16x32xf32>
    %c0_10 = arith.constant 0 : index
    %c0_11 = arith.constant 0 : index
    %10 = vector.load %arg5[%c0_10, %c0_11] : memref<32x32xbf16, #tpu.memory_space<vmem>>, vector<32x32xbf16>
    %cst_12 = arith.constant dense<0.000000e+00> : vector<16x32xf32>
    %11 = tpu.matmul %3, %10, %cst_12 {dimension_numbers = #tpu.dot_dimension_numbers<[1], [0], [0], [1], [0, 0, 1, 1], [], []>} : vector<16x32xbf16>, vector<32x32xbf16>, vector<16x32xf32> -> vector<16x32xf32>
    %12 = arith.addf %9, %11 : vector<16x32xf32>
    %c0_13 = arith.constant 0 : index
    %c0_14 = arith.constant 0 : index
    %13 = vector.load %arg11[%c0_13, %c0_14] : memref<16x32xf32, #tpu.memory_space<vmem>>, vector<16x32xf32>
    tpu.vector_store %arg11[%c0_13, %c0_14], %12 {strides = array<i32>} : memref<16x32xf32, #tpu.memory_space<vmem>>, vector<16x32xf32>,
    %c0_15 = arith.constant 0 : index
    %c0_16 = arith.constant 0 : index
    %14 = vector.load %arg12[%c0_15, %c0_16] : memref<16x32xf32, #tpu.memory_space<vmem>>, vector<16x32xf32>
    %c0_17 = arith.constant 0 : index
    %c0_18 = arith.constant 0 : index
    %15 = vector.load %arg6[%c0_17, %c0_18] : memref<32x32xbf16, #tpu.memory_space<vmem>>, vector<32x32xbf16>
    %cst_19 = arith.constant dense<0.000000e+00> : vector<16x32xf32>
    %16 = tpu.matmul %3, %15, %cst_19 {dimension_numbers = #tpu.dot_dimension_numbers<[1], [0], [0], [1], [0, 0, 1, 1], [], []>} : vector<16x32xbf16>, vector<32x32xbf16>, vector<16x32xf32> -> vector<16x32xf32>
    %17 = arith.addf %14, %16 : vector<16x32xf32>
    %c0_20 = arith.constant 0 : index
    %c0_21 = arith.constant 0 : index
    %18 = vector.load %arg12[%c0_20, %c0_21] : memref<16x32xf32, #tpu.memory_space<vmem>>, vector<16x32xf32>
    tpu.vector_store %arg12[%c0_20, %c0_21], %17 {strides = array<i32>} : memref<16x32xf32, #tpu.memory_space<vmem>>, vector<16x32xf32>,
    %c0_i32_22 = arith.constant 0 : i32
    %19 = arith.cmpi eq, %arg2, %c0_i32_22 : i32
    %20 = arith.extui %19 : i1 to i32
    %c0_i32_23 = arith.constant 0 : i32
    %21 = arith.cmpi ne, %20, %c0_i32_23 : i32
    scf.if %21 {
      %c0_24 = arith.constant 0 : index
      %c0_25 = arith.constant 0 : index
      %22 = vector.load %arg10[%c0_24, %c0_25] : memref<16x32xf32, #tpu.memory_space<vmem>>, vector<16x32xf32>
      %23 = arith.truncf %22 : vector<16x32xf32> to vector<16x32xbf16>
      %c0_26 = arith.constant 0 : index
      %c0_27 = arith.constant 0 : index
      %24 = vector.load %arg7[%c0_26, %c0_27] : memref<16x32xbf16, #tpu.memory_space<vmem>>, vector<16x32xbf16>
      tpu.vector_store %arg7[%c0_26, %c0_27], %23 {strides = array<i32>} : memref<16x32xbf16, #tpu.memory_space<vmem>>, vector<16x32xbf16>,
      %c0_28 = arith.constant 0 : index
      %c0_29 = arith.constant 0 : index
      %25 = vector.load %arg11[%c0_28, %c0_29] : memref<16x32xf32, #tpu.memory_space<vmem>>, vector<16x32xf32>
      %26 = arith.truncf %25 : vector<16x32xf32> to vector<16x32xbf16>
      %c0_30 = arith.constant 0 : index
      %c0_31 = arith.constant 0 : index
      %27 = vector.load %arg8[%c0_30, %c0_31] : memref<16x32xbf16, #tpu.memory_space<vmem>>, vector<16x32xbf16>
      tpu.vector_store %arg8[%c0_30, %c0_31], %26 {strides = array<i32>} : memref<16x32xbf16, #tpu.memory_space<vmem>>, vector<16x32xbf16>,
      %c0_32 = arith.constant 0 : index
      %c0_33 = arith.constant 0 : index
      %28 = vector.load %arg12[%c0_32, %c0_33] : memref<16x32xf32, #tpu.memory_space<vmem>>, vector<16x32xf32>
      %29 = arith.truncf %28 : vector<16x32xf32> to vector<16x32xbf16>
      %c0_34 = arith.constant 0 : index
      %c0_35 = arith.constant 0 : index
      %30 = vector.load %arg9[%c0_34, %c0_35] : memref<16x32xbf16, #tpu.memory_space<vmem>>, vector<16x32xbf16>
      tpu.vector_store %arg9[%c0_34, %c0_35], %29 {strides = array<i32>} : memref<16x32xbf16, #tpu.memory_space<vmem>>, vector<16x32xbf16>,
    } else {
    }
    return
  }
  func.func @transform_0(%arg0: i32, %arg1: i32, %arg2: i32) -> (i32, i32) {
    %c0_i32 = arith.constant 0 : i32
    return %arg0, %arg2 : i32, i32
  }
  func.func @transform_1(%arg0: i32, %arg1: i32, %arg2: i32) -> (i32, i32) {
    %c0_i32 = arith.constant 0 : i32
    return %arg2, %arg1 : i32, i32
  }
  func.func @transform_2(%arg0: i32, %arg1: i32, %arg2: i32) -> (i32, i32) {
    %c0_i32 = arith.constant 0 : i32
    return %arg2, %arg1 : i32, i32
  }
  func.func @transform_3(%arg0: i32, %arg1: i32, %arg2: i32) -> (i32, i32) {
    %c0_i32 = arith.constant 0 : i32
    return %arg2, %arg1 : i32, i32
  }
  func.func @transform_4(%arg0: i32, %arg1: i32, %arg2: i32) -> (i32, i32) {
    %c0_i32 = arith.constant 0 : i32
    return %arg0, %arg1 : i32, i32
  }
  func.func @transform_5(%arg0: i32, %arg1: i32, %arg2: i32) -> (i32, i32) {
    %c0_i32 = arith.constant 0 : i32
    return %arg0, %arg1 : i32, i32
  }
  func.func @transform_6(%arg0: i32, %arg1: i32, %arg2: i32) -> (i32, i32) {
    %c0_i32 = arith.constant 0 : i32
    return %arg0, %arg1 : i32, i32
  }
}

module attributes {stable_mosaic.version = 11 : i64} {
  func.func @kernel(%arg0: i32, %arg1: i32, %arg2: i32, %arg3: memref<16x32xbf16, #tpu.memory_space<vmem>>, %arg4: memref<32x32xbf16, #tpu.memory_space<vmem>>, %arg5: memref<1x32xf32, #tpu.memory_space<vmem>>, %arg6: memref<16x32xbf16, #tpu.memory_space<vmem>>, %arg7: memref<1x32xf32, #tpu.memory_space<vmem>>, %arg8: memref<1x32xf32, #tpu.memory_space<vmem>>, %arg9: memref<16x32xbf16, #tpu.memory_space<vmem>>, %arg10: memref<16x32xf32, #tpu.memory_space<vmem>>) attributes {dimension_semantics = [#tpu.dimension_semantics<parallel>, #tpu.dimension_semantics<parallel>, #tpu.dimension_semantics<arbitrary>], iteration_bounds = array<i64: 1, 1, 1>, scalar_prefetch = 0 : i64, scratch_operands = 1 : i64, tpu.core_type = #tpu.core_type<tc>, window_params = [{transform_indices = @transform_0, window_bounds = array<i64: 16, 32>}, {transform_indices = @transform_1, window_bounds = array<i64: 32, 32>}, {transform_indices = @transform_2, window_bounds = array<i64: 1, 32>}, {transform_indices = @transform_3, window_bounds = array<i64: 16, 32>}, {transform_indices = @transform_4, window_bounds = array<i64: 1, 32>}, {transform_indices = @transform_5, window_bounds = array<i64: 1, 32>}, {transform_indices = @transform_6, window_bounds = array<i64: 16, 32>}]} {
    %c0_i32 = arith.constant 0 : i32
    %0 = arith.cmpi eq, %arg2, %c0_i32 : i32
    %1 = arith.extui %0 : i1 to i32
    %c0_i32_0 = arith.constant 0 : i32
    %2 = arith.cmpi ne, %1, %c0_i32_0 : i32
    scf.if %2 {
      %cst_10 = arith.constant 0.000000e+00 : f32
      %12 = vector.broadcast %cst_10 : f32 to vector<16x32xf32>
      %c0_11 = arith.constant 0 : index
      %c0_12 = arith.constant 0 : index
      %13 = vector.load %arg10[%c0_11, %c0_12] : memref<16x32xf32, #tpu.memory_space<vmem>>, vector<16x32xf32>
      tpu.vector_store %arg10[%c0_11, %c0_12], %12 {strides = array<i32>} : memref<16x32xf32, #tpu.memory_space<vmem>>, vector<16x32xf32>,
    } else {
    }
    %c0 = arith.constant 0 : index
    %c0_1 = arith.constant 0 : index
    %3 = vector.load %arg10[%c0, %c0_1] : memref<16x32xf32, #tpu.memory_space<vmem>>, vector<16x32xf32>
    %c0_2 = arith.constant 0 : index
    %c0_3 = arith.constant 0 : index
    %4 = vector.load %arg3[%c0_2, %c0_3] : memref<16x32xbf16, #tpu.memory_space<vmem>>, vector<16x32xbf16>
    %c0_4 = arith.constant 0 : index
    %c0_5 = arith.constant 0 : index
    %5 = vector.load %arg4[%c0_4, %c0_5] : memref<32x32xbf16, #tpu.memory_space<vmem>>, vector<32x32xbf16>
    %cst = arith.constant dense<0.000000e+00> : vector<16x32xf32>
    %6 = tpu.matmul %4, %5, %cst {dimension_numbers = #tpu.dot_dimension_numbers<[1], [0], [0], [1], [0, 0, 1, 1], [], []>} : vector<16x32xbf16>, vector<32x32xbf16>, vector<16x32xf32> -> vector<16x32xf32>
    %7 = arith.addf %3, %6 : vector<16x32xf32>
    %c0_6 = arith.constant 0 : index
    %c0_7 = arith.constant 0 : index
    %8 = vector.load %arg10[%c0_6, %c0_7] : memref<16x32xf32, #tpu.memory_space<vmem>>, vector<16x32xf32>
    tpu.vector_store %arg10[%c0_6, %c0_7], %7 {strides = array<i32>} : memref<16x32xf32, #tpu.memory_space<vmem>>, vector<16x32xf32>,
    %c0_i32_8 = arith.constant 0 : i32
    %9 = arith.cmpi eq, %arg2, %c0_i32_8 : i32
    %10 = arith.extui %9 : i1 to i32
    %c0_i32_9 = arith.constant 0 : i32
    %11 = arith.cmpi ne, %10, %c0_i32_9 : i32
    scf.if %11 {
      %c0_10 = arith.constant 0 : index
      %c0_11 = arith.constant 0 : index
      %12 = vector.load %arg10[%c0_10, %c0_11] : memref<16x32xf32, #tpu.memory_space<vmem>>, vector<16x32xf32>
      %c0_12 = arith.constant 0 : index
      %c0_13 = arith.constant 0 : index
      %13 = vector.load %arg5[%c0_12, %c0_13] : memref<1x32xf32, #tpu.memory_space<vmem>>, vector<1x32xf32>
      %14 = vector.broadcast %13 : vector<1x32xf32> to vector<16x32xf32>
      %15 = arith.addf %12, %14 : vector<16x32xf32>
      %c0_14 = arith.constant 0 : index
      %c0_15 = arith.constant 0 : index
      %16 = vector.load %arg6[%c0_14, %c0_15] : memref<16x32xbf16, #tpu.memory_space<vmem>>, vector<16x32xbf16>
      %17 = arith.extf %16 : vector<16x32xbf16> to vector<16x32xf32>
      %18 = arith.addf %15, %17 : vector<16x32xf32>
      %cst_16 = arith.constant dense<0.000000e+00> : vector<16xf32>
      %19 = vector.multi_reduction <add>, %18, %cst_16 [1] : vector<16x32xf32> to vector<16xf32>
      %20 = vector.shape_cast %19 : vector<16xf32> to vector<16x1xf32>
      %cst_17 = arith.constant 3.200000e+01 : f32
      %21 = vector.broadcast %cst_17 : f32 to vector<16x1xf32>
      %22 = arith.divf %20, %21 : vector<16x1xf32>
      %23 = vector.broadcast %22 : vector<16x1xf32> to vector<16x32xf32>
      %24 = arith.subf %18, %23 : vector<16x32xf32>
      %25 = arith.mulf %24, %24 : vector<16x32xf32>
      %cst_18 = arith.constant dense<0.000000e+00> : vector<16xf32>
      %26 = vector.multi_reduction <add>, %25, %cst_18 [1] : vector<16x32xf32> to vector<16xf32>
      %27 = vector.shape_cast %26 : vector<16xf32> to vector<16x1xf32>
      %cst_19 = arith.constant 3.200000e+01 : f32
      %28 = vector.broadcast %cst_19 : f32 to vector<16x1xf32>
      %29 = arith.divf %27, %28 : vector<16x1xf32>
      %cst_20 = arith.constant 9.99999974E-6 : f32
      %30 = vector.broadcast %cst_20 : f32 to vector<16x1xf32>
      %31 = arith.addf %29, %30 : vector<16x1xf32>
      %32 = math.rsqrt %31 : vector<16x1xf32>
      %33 = vector.broadcast %32 : vector<16x1xf32> to vector<16x32xf32>
      %34 = arith.mulf %24, %33 : vector<16x32xf32>
      %c0_21 = arith.constant 0 : index
      %c0_22 = arith.constant 0 : index
      %35 = vector.load %arg7[%c0_21, %c0_22] : memref<1x32xf32, #tpu.memory_space<vmem>>, vector<1x32xf32>
      %36 = vector.broadcast %35 : vector<1x32xf32> to vector<16x32xf32>
      %37 = arith.mulf %34, %36 : vector<16x32xf32>
      %c0_23 = arith.constant 0 : index
      %c0_24 = arith.constant 0 : index
      %38 = vector.load %arg8[%c0_23, %c0_24] : memref<1x32xf32, #tpu.memory_space<vmem>>, vector<1x32xf32>
      %39 = vector.broadcast %38 : vector<1x32xf32> to vector<16x32xf32>
      %40 = arith.addf %37, %39 : vector<16x32xf32>
      %41 = arith.truncf %40 : vector<16x32xf32> to vector<16x32xbf16>
      %c0_25 = arith.constant 0 : index
      %c0_26 = arith.constant 0 : index
      %42 = vector.load %arg9[%c0_25, %c0_26] : memref<16x32xbf16, #tpu.memory_space<vmem>>, vector<16x32xbf16>
      tpu.vector_store %arg9[%c0_25, %c0_26], %41 {strides = array<i32>} : memref<16x32xbf16, #tpu.memory_space<vmem>>, vector<16x32xbf16>,
    } else {
    }
    return
  }
  func.func @transform_0(%arg0: i32, %arg1: i32, %arg2: i32) -> (i32, i32) {
    %c0_i32 = arith.constant 0 : i32
    return %arg0, %arg2 : i32, i32
  }
  func.func @transform_1(%arg0: i32, %arg1: i32, %arg2: i32) -> (i32, i32) {
    %c0_i32 = arith.constant 0 : i32
    return %arg2, %arg1 : i32, i32
  }
  func.func @transform_2(%arg0: i32, %arg1: i32, %arg2: i32) -> (i32, i32) {
    %c0_i32 = arith.constant 0 : i32
    %c0_i32_0 = arith.constant 0 : i32
    return %c0_i32, %arg1 : i32, i32
  }
  func.func @transform_3(%arg0: i32, %arg1: i32, %arg2: i32) -> (i32, i32) {
    %c0_i32 = arith.constant 0 : i32
    return %arg0, %arg1 : i32, i32
  }
  func.func @transform_4(%arg0: i32, %arg1: i32, %arg2: i32) -> (i32, i32) {
    %c0_i32 = arith.constant 0 : i32
    %c0_i32_0 = arith.constant 0 : i32
    return %c0_i32, %arg1 : i32, i32
  }
  func.func @transform_5(%arg0: i32, %arg1: i32, %arg2: i32) -> (i32, i32) {
    %c0_i32 = arith.constant 0 : i32
    %c0_i32_0 = arith.constant 0 : i32
    return %c0_i32, %arg1 : i32, i32
  }
  func.func @transform_6(%arg0: i32, %arg1: i32, %arg2: i32) -> (i32, i32) {
    %c0_i32 = arith.constant 0 : i32
    return %arg0, %arg1 : i32, i32
  }
}

module attributes {stable_mosaic.version = 11 : i64} {
  func.func @kernel(%arg0: i32, %arg1: i32, %arg2: i32, %arg3: memref<16x32xbf16, #tpu.memory_space<vmem>>, %arg4: memref<32x64xbf16, #tpu.memory_space<vmem>>, %arg5: memref<1x64xf32, #tpu.memory_space<vmem>>, %arg6: memref<16x64xbf16, #tpu.memory_space<vmem>>, %arg7: memref<16x64xf32, #tpu.memory_space<vmem>>) attributes {dimension_semantics = [#tpu.dimension_semantics<parallel>, #tpu.dimension_semantics<parallel>, #tpu.dimension_semantics<arbitrary>], iteration_bounds = array<i64: 1, 1, 1>, scalar_prefetch = 0 : i64, scratch_operands = 1 : i64, tpu.core_type = #tpu.core_type<tc>, window_params = [{transform_indices = @transform_0, window_bounds = array<i64: 16, 32>}, {transform_indices = @transform_1, window_bounds = array<i64: 32, 64>}, {transform_indices = @transform_2, window_bounds = array<i64: 1, 64>}, {transform_indices = @transform_3, window_bounds = array<i64: 16, 64>}]} {
    %c0_i32 = arith.constant 0 : i32
    %0 = arith.cmpi eq, %arg2, %c0_i32 : i32
    %1 = arith.extui %0 : i1 to i32
    %c0_i32_0 = arith.constant 0 : i32
    %2 = arith.cmpi ne, %1, %c0_i32_0 : i32
    scf.if %2 {
      %cst_10 = arith.constant 0.000000e+00 : f32
      %12 = vector.broadcast %cst_10 : f32 to vector<16x64xf32>
      %c0_11 = arith.constant 0 : index
      %c0_12 = arith.constant 0 : index
      %13 = vector.load %arg7[%c0_11, %c0_12] : memref<16x64xf32, #tpu.memory_space<vmem>>, vector<16x64xf32>
      tpu.vector_store %arg7[%c0_11, %c0_12], %12 {strides = array<i32>} : memref<16x64xf32, #tpu.memory_space<vmem>>, vector<16x64xf32>,
    } else {
    }
    %c0 = arith.constant 0 : index
    %c0_1 = arith.constant 0 : index
    %3 = vector.load %arg7[%c0, %c0_1] : memref<16x64xf32, #tpu.memory_space<vmem>>, vector<16x64xf32>
    %c0_2 = arith.constant 0 : index
    %c0_3 = arith.constant 0 : index
    %4 = vector.load %arg3[%c0_2, %c0_3] : memref<16x32xbf16, #tpu.memory_space<vmem>>, vector<16x32xbf16>
    %c0_4 = arith.constant 0 : index
    %c0_5 = arith.constant 0 : index
    %5 = vector.load %arg4[%c0_4, %c0_5] : memref<32x64xbf16, #tpu.memory_space<vmem>>, vector<32x64xbf16>
    %cst = arith.constant dense<0.000000e+00> : vector<16x64xf32>
    %6 = tpu.matmul %4, %5, %cst {dimension_numbers = #tpu.dot_dimension_numbers<[1], [0], [0], [1], [0, 0, 1, 1], [], []>} : vector<16x32xbf16>, vector<32x64xbf16>, vector<16x64xf32> -> vector<16x64xf32>
    %7 = arith.addf %3, %6 : vector<16x64xf32>
    %c0_6 = arith.constant 0 : index
    %c0_7 = arith.constant 0 : index
    %8 = vector.load %arg7[%c0_6, %c0_7] : memref<16x64xf32, #tpu.memory_space<vmem>>, vector<16x64xf32>
    tpu.vector_store %arg7[%c0_6, %c0_7], %7 {strides = array<i32>} : memref<16x64xf32, #tpu.memory_space<vmem>>, vector<16x64xf32>,
    %c0_i32_8 = arith.constant 0 : i32
    %9 = arith.cmpi eq, %arg2, %c0_i32_8 : i32
    %10 = arith.extui %9 : i1 to i32
    %c0_i32_9 = arith.constant 0 : i32
    %11 = arith.cmpi ne, %10, %c0_i32_9 : i32
    scf.if %11 {
      %c0_10 = arith.constant 0 : index
      %c0_11 = arith.constant 0 : index
      %12 = vector.load %arg7[%c0_10, %c0_11] : memref<16x64xf32, #tpu.memory_space<vmem>>, vector<16x64xf32>
      %c0_12 = arith.constant 0 : index
      %c0_13 = arith.constant 0 : index
      %13 = vector.load %arg5[%c0_12, %c0_13] : memref<1x64xf32, #tpu.memory_space<vmem>>, vector<1x64xf32>
      %14 = vector.broadcast %13 : vector<1x64xf32> to vector<16x64xf32>
      %15 = arith.addf %12, %14 : vector<16x64xf32>
      %cst_14 = arith.constant 0.000000e+00 : f32
      %16 = vector.broadcast %cst_14 : f32 to vector<16x64xf32>
      %17 = arith.maximumf %15, %16 : vector<16x64xf32>
      %18 = arith.truncf %17 : vector<16x64xf32> to vector<16x64xbf16>
      %c0_15 = arith.constant 0 : index
      %c0_16 = arith.constant 0 : index
      %19 = vector.load %arg6[%c0_15, %c0_16] : memref<16x64xbf16, #tpu.memory_space<vmem>>, vector<16x64xbf16>
      tpu.vector_store %arg6[%c0_15, %c0_16], %18 {strides = array<i32>} : memref<16x64xbf16, #tpu.memory_space<vmem>>, vector<16x64xbf16>,
    } else {
    }
    return
  }
  func.func @transform_0(%arg0: i32, %arg1: i32, %arg2: i32) -> (i32, i32) {
    %c0_i32 = arith.constant 0 : i32
    return %arg0, %arg2 : i32, i32
  }
  func.func @transform_1(%arg0: i32, %arg1: i32, %arg2: i32) -> (i32, i32) {
    %c0_i32 = arith.constant 0 : i32
    return %arg2, %arg1 : i32, i32
  }
  func.func @transform_2(%arg0: i32, %arg1: i32, %arg2: i32) -> (i32, i32) {
    %c0_i32 = arith.constant 0 : i32
    %c0_i32_0 = arith.constant 0 : i32
    return %c0_i32, %arg1 : i32, i32
  }
  func.func @transform_3(%arg0: i32, %arg1: i32, %arg2: i32) -> (i32, i32) {
    %c0_i32 = arith.constant 0 : i32
    return %arg0, %arg1 : i32, i32
  }
}

module attributes {stable_mosaic.version = 11 : i64} {
  func.func @_flash_attn_kernel(%arg0: i32, %arg1: i32, %arg2: i32, %arg3: i32, %arg4: memref<1x8x32xbf16, #tpu.memory_space<vmem>>, %arg5: memref<1x8x32xbf16, #tpu.memory_space<vmem>>, %arg6: memref<1x8x32xbf16, #tpu.memory_space<vmem>>, %arg7: memref<1x8x32xbf16, #tpu.memory_space<vmem>>, %arg8: memref<4x8x1xf32, #tpu.memory_space<vmem>>, %arg9: memref<4x8x1xf32, #tpu.memory_space<vmem>>, %arg10: memref<4x8x8xf32, #tpu.memory_space<vmem>>) attributes {dimension_semantics = [#tpu.dimension_semantics<parallel>, #tpu.dimension_semantics<parallel>, #tpu.dimension_semantics<parallel>, #tpu.dimension_semantics<arbitrary>], iteration_bounds = array<i64: 2, 1, 1, 1>, scalar_prefetch = 0 : i64, scratch_operands = 3 : i64, tpu.core_type = #tpu.core_type<tc>, window_params = [{transform_indices = @transform_0, window_bounds = array<i64: 1, 8, 32>}, {transform_indices = @transform_1, window_bounds = array<i64: 1, 8, 32>}, {transform_indices = @transform_2, window_bounds = array<i64: 1, 8, 32>}, {transform_indices = @transform_3, window_bounds = array<i64: 1, 8, 32>}]} {
    %c0_i32 = arith.constant 0 : i32
    %0 = arith.cmpi eq, %arg3, %c0_i32 : i32
    %1 = arith.extui %0 : i1 to i32
    %c0_i32_0 = arith.constant 0 : i32
    %2 = arith.cmpi ne, %1, %c0_i32_0 : i32
    scf.if %2 {
      %cst = arith.constant 0xFF800000 : f32
      %12 = vector.broadcast %cst : f32 to vector<4x8x1xf32>
      %c0 = arith.constant 0 : index
      %c0_5 = arith.constant 0 : index
      %c0_6 = arith.constant 0 : index
      %13 = vector.load %arg8[%c0, %c0_5, %c0_6] : memref<4x8x1xf32, #tpu.memory_space<vmem>>, vector<4x8x1xf32>
      tpu.vector_store %arg8[%c0, %c0_5, %c0_6], %12 {strides = array<i32>} : memref<4x8x1xf32, #tpu.memory_space<vmem>>, vector<4x8x1xf32>,
      %cst_7 = arith.constant 0.000000e+00 : f32
      %14 = vector.broadcast %cst_7 : f32 to vector<4x8x1xf32>
      %c0_8 = arith.constant 0 : index
      %c0_9 = arith.constant 0 : index
      %c0_10 = arith.constant 0 : index
      %15 = vector.load %arg9[%c0_8, %c0_9, %c0_10] : memref<4x8x1xf32, #tpu.memory_space<vmem>>, vector<4x8x1xf32>
      tpu.vector_store %arg9[%c0_8, %c0_9, %c0_10], %14 {strides = array<i32>} : memref<4x8x1xf32, #tpu.memory_space<vmem>>, vector<4x8x1xf32>,
      %cst_11 = arith.constant 0.000000e+00 : f32
      %16 = vector.broadcast %cst_11 : f32 to vector<4x8x8xf32>
      %c0_12 = arith.constant 0 : index
      %c0_13 = arith.constant 0 : index
      %c0_14 = arith.constant 0 : index
      %17 = vector.load %arg10[%c0_12, %c0_13, %c0_14] : memref<4x8x8xf32, #tpu.memory_space<vmem>>, vector<4x8x8xf32>
      tpu.vector_store %arg10[%c0_12, %c0_13, %c0_14], %16 {strides = array<i32>} : memref<4x8x8xf32, #tpu.memory_space<vmem>>, vector<4x8x8xf32>,
    } else {
    }
    %3 = arith.cmpi slt, %arg3, %arg2 : i32
    %4 = arith.extui %3 : i1 to i32
    %c0_i32_1 = arith.constant 0 : i32
    %5 = arith.cmpi ne, %4, %c0_i32_1 : i32
    scf.if %5 {
      %c0 = arith.constant 0 : index
      %c0_5 = arith.constant 0 : index
      %c0_6 = arith.constant 0 : index
      %12 = vector.load %arg4[%c0, %c0_5, %c0_6] : memref<1x8x32xbf16, #tpu.memory_space<vmem>>, vector<1x8x8xbf16>
      %13 = vector.shape_cast %12 : vector<1x8x8xbf16> to vector<8x8xbf16>
      %c0_7 = arith.constant 0 : index
      %c0_8 = arith.constant 0 : index
      %c0_9 = arith.constant 0 : index
      %14 = vector.load %arg5[%c0_7, %c0_8, %c0_9] : memref<1x8x32xbf16, #tpu.memory_space<vmem>>, vector<1x8x8xbf16>
      %15 = vector.shape_cast %14 : vector<1x8x8xbf16> to vector<8x8xbf16>
      %c0_10 = arith.constant 0 : index
      %c0_11 = arith.constant 0 : index
      %c0_12 = arith.constant 0 : index
      %16 = vector.load %arg6[%c0_10, %c0_11, %c0_12] : memref<1x8x32xbf16, #tpu.memory_space<vmem>>, vector<1x8x8xbf16>
      %17 = vector.shape_cast %16 : vector<1x8x8xbf16> to vector<8x8xbf16>
      %cst = arith.constant dense<0.000000e+00> : vector<8x8xf32>
      %18 = tpu.matmul %13, %15, %cst {dimension_numbers = #tpu.dot_dimension_numbers<[1], [1], [0], [0], [0, 0, 1, 0], [], []>} : vector<8x8xbf16>, vector<8x8xbf16>, vector<8x8xf32> -> vector<8x8xf32>
      %c0_13 = arith.constant 0 : index
      %c0_14 = arith.constant 0 : index
      %c0_15 = arith.constant 0 : index
      %19 = vector.load %arg8[%c0_13, %c0_14, %c0_15] : memref<4x8x1xf32, #tpu.memory_space<vmem>>, vector<1x8x1xf32>
      %20 = vector.shape_cast %19 : vector<1x8x1xf32> to vector<8x1xf32>
      %cst_16 = arith.constant dense<0xFF800000> : vector<8xf32>
      %21 = vector.multi_reduction <maximumf>, %18, %cst_16 [1] : vector<8x8xf32> to vector<8xf32>
      %22 = vector.shape_cast %21 : vector<8xf32> to vector<8x1xf32>
      %23 = arith.maximumf %20, %22 : vector<8x1xf32>
      %24 = arith.subf %20, %23 : vector<8x1xf32>
      %25 = math.exp %24 : vector<8x1xf32>
      %26 = vector.broadcast %23 : vector<8x1xf32> to vector<8x8xf32>
      %27 = arith.subf %18, %26 : vector<8x8xf32>
      %28 = math.exp %27 : vector<8x8xf32>
      %c0_17 = arith.constant 0 : index
      %c0_18 = arith.constant 0 : index
      %c0_19 = arith.constant 0 : index
      %29 = vector.load %arg9[%c0_17, %c0_18, %c0_19] : memref<4x8x1xf32, #tpu.memory_space<vmem>>, vector<1x8x1xf32>
      %30 = vector.shape_cast %29 : vector<1x8x1xf32> to vector<8x1xf32>
      %31 = arith.mulf %25, %30 : vector<8x1xf32>
      %cst_20 = arith.constant dense<0.000000e+00> : vector<8xf32>
      %32 = vector.multi_reduction <add>, %28, %cst_20 [1] : vector<8x8xf32> to vector<8xf32>
      %33 = vector.shape_cast %32 : vector<8xf32> to vector<8x1xf32>
      %34 = arith.addf %31, %33 : vector<8x1xf32>
      %c0_21 = arith.constant 0 : index
      %c0_22 = arith.constant 0 : index
      %c0_23 = arith.constant 0 : index
      %35 = vector.load %arg9[%c0_21, %c0_22, %c0_23] : memref<4x8x1xf32, #tpu.memory_space<vmem>>, vector<1x8x1xf32>
      %36 = vector.shape_cast %35 : vector<1x8x1xf32> to vector<8x1xf32>
      %37 = vector.shape_cast %34 : vector<8x1xf32> to vector<1x8x1xf32>
      tpu.vector_store %arg9[%c0_21, %c0_22, %c0_23], %37 {strides = array<i32>} : memref<4x8x1xf32, #tpu.memory_space<vmem>>, vector<1x8x1xf32>,
      %c0_24 = arith.constant 0 : index
      %c0_25 = arith.constant 0 : index
      %c0_26 = arith.constant 0 : index
      %38 = vector.load %arg10[%c0_24, %c0_25, %c0_26] : memref<4x8x8xf32, #tpu.memory_space<vmem>>, vector<1x8x8xf32>
      %39 = vector.shape_cast %38 : vector<1x8x8xf32> to vector<8x8xf32>
      %40 = vector.broadcast %25 : vector<8x1xf32> to vector<8x8xf32>
      %41 = arith.mulf %40, %39 : vector<8x8xf32>
      %42 = arith.truncf %28 : vector<8x8xf32> to vector<8x8xbf16>
      %cst_27 = arith.constant dense<0.000000e+00> : vector<8x8xf32>
      %43 = tpu.matmul %42, %17, %cst_27 {dimension_numbers = #tpu.dot_dimension_numbers<[1], [0], [0], [1], [0, 0, 1, 1], [], []>} : vector<8x8xbf16>, vector<8x8xbf16>, vector<8x8xf32> -> vector<8x8xf32>
      %44 = arith.addf %41, %43 : vector<8x8xf32>
      %c0_28 = arith.constant 0 : index
      %c0_29 = arith.constant 0 : index
      %c0_30 = arith.constant 0 : index
      %45 = vector.load %arg10[%c0_28, %c0_29, %c0_30] : memref<4x8x8xf32, #tpu.memory_space<vmem>>, vector<1x8x8xf32>
      %46 = vector.shape_cast %45 : vector<1x8x8xf32> to vector<8x8xf32>
      %47 = vector.shape_cast %44 : vector<8x8xf32> to vector<1x8x8xf32>
      tpu.vector_store %arg10[%c0_28, %c0_29, %c0_30], %47 {strides = array<i32>} : memref<4x8x8xf32, #tpu.memory_space<vmem>>, vector<1x8x8xf32>,
      %c0_31 = arith.constant 0 : index
      %c0_32 = arith.constant 0 : index
      %c0_33 = arith.constant 0 : index
      %48 = vector.load %arg8[%c0_31, %c0_32, %c0_33] : memref<4x8x1xf32, #tpu.memory_space<vmem>>, vector<1x8x1xf32>
      %49 = vector.shape_cast %48 : vector<1x8x1xf32> to vector<8x1xf32>
      %50 = vector.shape_cast %23 : vector<8x1xf32> to vector<1x8x1xf32>
      tpu.vector_store %arg8[%c0_31, %c0_32, %c0_33], %50 {strides = array<i32>} : memref<4x8x1xf32, #tpu.memory_space<vmem>>, vector<1x8x1xf32>,
      %c0_34 = arith.constant 0 : index
      %c0_35 = arith.constant 0 : index
      %c8 = arith.constant 8 : index
      %51 = vector.load %arg4[%c0_34, %c0_35, %c8] : memref<1x8x32xbf16, #tpu.memory_space<vmem>>, vector<1x8x8xbf16>
      %52 = vector.shape_cast %51 : vector<1x8x8xbf16> to vector<8x8xbf16>
      %c0_36 = arith.constant 0 : index
      %c0_37 = arith.constant 0 : index
      %c8_38 = arith.constant 8 : index
      %53 = vector.load %arg5[%c0_36, %c0_37, %c8_38] : memref<1x8x32xbf16, #tpu.memory_space<vmem>>, vector<1x8x8xbf16>
      %54 = vector.shape_cast %53 : vector<1x8x8xbf16> to vector<8x8xbf16>
      %c0_39 = arith.constant 0 : index
      %c0_40 = arith.constant 0 : index
      %c8_41 = arith.constant 8 : index
      %55 = vector.load %arg6[%c0_39, %c0_40, %c8_41] : memref<1x8x32xbf16, #tpu.memory_space<vmem>>, vector<1x8x8xbf16>
      %56 = vector.shape_cast %55 : vector<1x8x8xbf16> to vector<8x8xbf16>
      %cst_42 = arith.constant dense<0.000000e+00> : vector<8x8xf32>
      %57 = tpu.matmul %52, %54, %cst_42 {dimension_numbers = #tpu.dot_dimension_numbers<[1], [1], [0], [0], [0, 0, 1, 0], [], []>} : vector<8x8xbf16>, vector<8x8xbf16>, vector<8x8xf32> -> vector<8x8xf32>
      %c1 = arith.constant 1 : index
      %c0_43 = arith.constant 0 : index
      %c0_44 = arith.constant 0 : index
      %58 = vector.load %arg8[%c1, %c0_43, %c0_44] : memref<4x8x1xf32, #tpu.memory_space<vmem>>, vector<1x8x1xf32>
      %59 = vector.shape_cast %58 : vector<1x8x1xf32> to vector<8x1xf32>
      %cst_45 = arith.constant dense<0xFF800000> : vector<8xf32>
      %60 = vector.multi_reduction <maximumf>, %57, %cst_45 [1] : vector<8x8xf32> to vector<8xf32>
      %61 = vector.shape_cast %60 : vector<8xf32> to vector<8x1xf32>
      %62 = arith.maximumf %59, %61 : vector<8x1xf32>
      %63 = arith.subf %59, %62 : vector<8x1xf32>
      %64 = math.exp %63 : vector<8x1xf32>
      %65 = vector.broadcast %62 : vector<8x1xf32> to vector<8x8xf32>
      %66 = arith.subf %57, %65 : vector<8x8xf32>
      %67 = math.exp %66 : vector<8x8xf32>
      %c1_46 = arith.constant 1 : index
      %c0_47 = arith.constant 0 : index
      %c0_48 = arith.constant 0 : index
      %68 = vector.load %arg9[%c1_46, %c0_47, %c0_48] : memref<4x8x1xf32, #tpu.memory_space<vmem>>, vector<1x8x1xf32>
      %69 = vector.shape_cast %68 : vector<1x8x1xf32> to vector<8x1xf32>
      %70 = arith.mulf %64, %69 : vector<8x1xf32>
      %cst_49 = arith.constant dense<0.000000e+00> : vector<8xf32>
      %71 = vector.multi_reduction <add>, %67, %cst_49 [1] : vector<8x8xf32> to vector<8xf32>
      %72 = vector.shape_cast %71 : vector<8xf32> to vector<8x1xf32>
      %73 = arith.addf %70, %72 : vector<8x1xf32>
      %c1_50 = arith.constant 1 : index
      %c0_51 = arith.constant 0 : index
      %c0_52 = arith.constant 0 : index
      %74 = vector.load %arg9[%c1_50, %c0_51, %c0_52] : memref<4x8x1xf32, #tpu.memory_space<vmem>>, vector<1x8x1xf32>
      %75 = vector.shape_cast %74 : vector<1x8x1xf32> to vector<8x1xf32>
      %76 = vector.shape_cast %73 : vector<8x1xf32> to vector<1x8x1xf32>
      tpu.vector_store %arg9[%c1_50, %c0_51, %c0_52], %76 {strides = array<i32>} : memref<4x8x1xf32, #tpu.memory_space<vmem>>, vector<1x8x1xf32>,
      %c1_53 = arith.constant 1 : index
      %c0_54 = arith.constant 0 : index
      %c0_55 = arith.constant 0 : index
      %77 = vector.load %arg10[%c1_53, %c0_54, %c0_55] : memref<4x8x8xf32, #tpu.memory_space<vmem>>, vector<1x8x8xf32>
      %78 = vector.shape_cast %77 : vector<1x8x8xf32> to vector<8x8xf32>
      %79 = vector.broadcast %64 : vector<8x1xf32> to vector<8x8xf32>
      %80 = arith.mulf %79, %78 : vector<8x8xf32>
      %81 = arith.truncf %67 : vector<8x8xf32> to vector<8x8xbf16>
      %cst_56 = arith.constant dense<0.000000e+00> : vector<8x8xf32>
      %82 = tpu.matmul %81, %56, %cst_56 {dimension_numbers = #tpu.dot_dimension_numbers<[1], [0], [0], [1], [0, 0, 1, 1], [], []>} : vector<8x8xbf16>, vector<8x8xbf16>, vector<8x8xf32> -> vector<8x8xf32>
      %83 = arith.addf %80, %82 : vector<8x8xf32>
      %c1_57 = arith.constant 1 : index
      %c0_58 = arith.constant 0 : index
      %c0_59 = arith.constant 0 : index
      %84 = vector.load %arg10[%c1_57, %c0_58, %c0_59] : memref<4x8x8xf32, #tpu.memory_space<vmem>>, vector<1x8x8xf32>
      %85 = vector.shape_cast %84 : vector<1x8x8xf32> to vector<8x8xf32>
      %86 = vector.shape_cast %83 : vector<8x8xf32> to vector<1x8x8xf32>
      tpu.vector_store %arg10[%c1_57, %c0_58, %c0_59], %86 {strides = array<i32>} : memref<4x8x8xf32, #tpu.memory_space<vmem>>, vector<1x8x8xf32>,
      %c1_60 = arith.constant 1 : index
      %c0_61 = arith.constant 0 : index
      %c0_62 = arith.constant 0 : index
      %87 = vector.load %arg8[%c1_60, %c0_61, %c0_62] : memref<4x8x1xf32, #tpu.memory_space<vmem>>, vector<1x8x1xf32>
      %88 = vector.shape_cast %87 : vector<1x8x1xf32> to vector<8x1xf32>
      %89 = vector.shape_cast %62 : vector<8x1xf32> to vector<1x8x1xf32>
      tpu.vector_store %arg8[%c1_60, %c0_61, %c0_62], %89 {strides = array<i32>} : memref<4x8x1xf32, #tpu.memory_space<vmem>>, vector<1x8x1xf32>,
      %c0_63 = arith.constant 0 : index
      %c0_64 = arith.constant 0 : index
      %c16 = arith.constant 16 : index
      %90 = vector.load %arg4[%c0_63, %c0_64, %c16] : memref<1x8x32xbf16, #tpu.memory_space<vmem>>, vector<1x8x8xbf16>
      %91 = vector.shape_cast %90 : vector<1x8x8xbf16> to vector<8x8xbf16>
      %c0_65 = arith.constant 0 : index
      %c0_66 = arith.constant 0 : index
      %c16_67 = arith.constant 16 : index
      %92 = vector.load %arg5[%c0_65, %c0_66, %c16_67] : memref<1x8x32xbf16, #tpu.memory_space<vmem>>, vector<1x8x8xbf16>
      %93 = vector.shape_cast %92 : vector<1x8x8xbf16> to vector<8x8xbf16>
      %c0_68 = arith.constant 0 : index
      %c0_69 = arith.constant 0 : index
      %c16_70 = arith.constant 16 : index
      %94 = vector.load %arg6[%c0_68, %c0_69, %c16_70] : memref<1x8x32xbf16, #tpu.memory_space<vmem>>, vector<1x8x8xbf16>
      %95 = vector.shape_cast %94 : vector<1x8x8xbf16> to vector<8x8xbf16>
      %cst_71 = arith.constant dense<0.000000e+00> : vector<8x8xf32>
      %96 = tpu.matmul %91, %93, %cst_71 {dimension_numbers = #tpu.dot_dimension_numbers<[1], [1], [0], [0], [0, 0, 1, 0], [], []>} : vector<8x8xbf16>, vector<8x8xbf16>, vector<8x8xf32> -> vector<8x8xf32>
      %c2 = arith.constant 2 : index
      %c0_72 = arith.constant 0 : index
      %c0_73 = arith.constant 0 : index
      %97 = vector.load %arg8[%c2, %c0_72, %c0_73] : memref<4x8x1xf32, #tpu.memory_space<vmem>>, vector<1x8x1xf32>
      %98 = vector.shape_cast %97 : vector<1x8x1xf32> to vector<8x1xf32>
      %cst_74 = arith.constant dense<0xFF800000> : vector<8xf32>
      %99 = vector.multi_reduction <maximumf>, %96, %cst_74 [1] : vector<8x8xf32> to vector<8xf32>
      %100 = vector.shape_cast %99 : vector<8xf32> to vector<8x1xf32>
      %101 = arith.maximumf %98, %100 : vector<8x1xf32>
      %102 = arith.subf %98, %101 : vector<8x1xf32>
      %103 = math.exp %102 : vector<8x1xf32>
      %104 = vector.broadcast %101 : vector<8x1xf32> to vector<8x8xf32>
      %105 = arith.subf %96, %104 : vector<8x8xf32>
      %106 = math.exp %105 : vector<8x8xf32>
      %c2_75 = arith.constant 2 : index
      %c0_76 = arith.constant 0 : index
      %c0_77 = arith.constant 0 : index
      %107 = vector.load %arg9[%c2_75, %c0_76, %c0_77] : memref<4x8x1xf32, #tpu.memory_space<vmem>>, vector<1x8x1xf32>
      %108 = vector.shape_cast %107 : vector<1x8x1xf32> to vector<8x1xf32>
      %109 = arith.mulf %103, %108 : vector<8x1xf32>
      %cst_78 = arith.constant dense<0.000000e+00> : vector<8xf32>
      %110 = vector.multi_reduction <add>, %106, %cst_78 [1] : vector<8x8xf32> to vector<8xf32>
      %111 = vector.shape_cast %110 : vector<8xf32> to vector<8x1xf32>
      %112 = arith.addf %109, %111 : vector<8x1xf32>
      %c2_79 = arith.constant 2 : index
      %c0_80 = arith.constant 0 : index
      %c0_81 = arith.constant 0 : index
      %113 = vector.load %arg9[%c2_79, %c0_80, %c0_81] : memref<4x8x1xf32, #tpu.memory_space<vmem>>, vector<1x8x1xf32>
      %114 = vector.shape_cast %113 : vector<1x8x1xf32> to vector<8x1xf32>
      %115 = vector.shape_cast %112 : vector<8x1xf32> to vector<1x8x1xf32>
      tpu.vector_store %arg9[%c2_79, %c0_80, %c0_81], %115 {strides = array<i32>} : memref<4x8x1xf32, #tpu.memory_space<vmem>>, vector<1x8x1xf32>,
      %c2_82 = arith.constant 2 : index
      %c0_83 = arith.constant 0 : index
      %c0_84 = arith.constant 0 : index
      %116 = vector.load %arg10[%c2_82, %c0_83, %c0_84] : memref<4x8x8xf32, #tpu.memory_space<vmem>>, vector<1x8x8xf32>
      %117 = vector.shape_cast %116 : vector<1x8x8xf32> to vector<8x8xf32>
      %118 = vector.broadcast %103 : vector<8x1xf32> to vector<8x8xf32>
      %119 = arith.mulf %118, %117 : vector<8x8xf32>
      %120 = arith.truncf %106 : vector<8x8xf32> to vector<8x8xbf16>
      %cst_85 = arith.constant dense<0.000000e+00> : vector<8x8xf32>
      %121 = tpu.matmul %120, %95, %cst_85 {dimension_numbers = #tpu.dot_dimension_numbers<[1], [0], [0], [1], [0, 0, 1, 1], [], []>} : vector<8x8xbf16>, vector<8x8xbf16>, vector<8x8xf32> -> vector<8x8xf32>
      %122 = arith.addf %119, %121 : vector<8x8xf32>
      %c2_86 = arith.constant 2 : index
      %c0_87 = arith.constant 0 : index
      %c0_88 = arith.constant 0 : index
      %123 = vector.load %arg10[%c2_86, %c0_87, %c0_88] : memref<4x8x8xf32, #tpu.memory_space<vmem>>, vector<1x8x8xf32>
      %124 = vector.shape_cast %123 : vector<1x8x8xf32> to vector<8x8xf32>
      %125 = vector.shape_cast %122 : vector<8x8xf32> to vector<1x8x8xf32>
      tpu.vector_store %arg10[%c2_86, %c0_87, %c0_88], %125 {strides = array<i32>} : memref<4x8x8xf32, #tpu.memory_space<vmem>>, vector<1x8x8xf32>,
      %c2_89 = arith.constant 2 : index
      %c0_90 = arith.constant 0 : index
      %c0_91 = arith.constant 0 : index
      %126 = vector.load %arg8[%c2_89, %c0_90, %c0_91] : memref<4x8x1xf32, #tpu.memory_space<vmem>>, vector<1x8x1xf32>
      %127 = vector.shape_cast %126 : vector<1x8x1xf32> to vector<8x1xf32>
      %128 = vector.shape_cast %101 : vector<8x1xf32> to vector<1x8x1xf32>
      tpu.vector_store %arg8[%c2_89, %c0_90, %c0_91], %128 {strides = array<i32>} : memref<4x8x1xf32, #tpu.memory_space<vmem>>, vector<1x8x1xf32>,
      %c0_92 = arith.constant 0 : index
      %c0_93 = arith.constant 0 : index
      %c24 = arith.constant 24 : index
      %129 = vector.load %arg4[%c0_92, %c0_93, %c24] : memref<1x8x32xbf16, #tpu.memory_space<vmem>>, vector<1x8x8xbf16>
      %130 = vector.shape_cast %129 : vector<1x8x8xbf16> to vector<8x8xbf16>
      %c0_94 = arith.constant 0 : index
      %c0_95 = arith.constant 0 : index
      %c24_96 = arith.constant 24 : index
      %131 = vector.load %arg5[%c0_94, %c0_95, %c24_96] : memref<1x8x32xbf16, #tpu.memory_space<vmem>>, vector<1x8x8xbf16>
      %132 = vector.shape_cast %131 : vector<1x8x8xbf16> to vector<8x8xbf16>
      %c0_97 = arith.constant 0 : index
      %c0_98 = arith.constant 0 : index
      %c24_99 = arith.constant 24 : index
      %133 = vector.load %arg6[%c0_97, %c0_98, %c24_99] : memref<1x8x32xbf16, #tpu.memory_space<vmem>>, vector<1x8x8xbf16>
      %134 = vector.shape_cast %133 : vector<1x8x8xbf16> to vector<8x8xbf16>
      %cst_100 = arith.constant dense<0.000000e+00> : vector<8x8xf32>
      %135 = tpu.matmul %130, %132, %cst_100 {dimension_numbers = #tpu.dot_dimension_numbers<[1], [1], [0], [0], [0, 0, 1, 0], [], []>} : vector<8x8xbf16>, vector<8x8xbf16>, vector<8x8xf32> -> vector<8x8xf32>
      %c3 = arith.constant 3 : index
      %c0_101 = arith.constant 0 : index
      %c0_102 = arith.constant 0 : index
      %136 = vector.load %arg8[%c3, %c0_101, %c0_102] : memref<4x8x1xf32, #tpu.memory_space<vmem>>, vector<1x8x1xf32>
      %137 = vector.shape_cast %136 : vector<1x8x1xf32> to vector<8x1xf32>
      %cst_103 = arith.constant dense<0xFF800000> : vector<8xf32>
      %138 = vector.multi_reduction <maximumf>, %135, %cst_103 [1] : vector<8x8xf32> to vector<8xf32>
      %139 = vector.shape_cast %138 : vector<8xf32> to vector<8x1xf32>
      %140 = arith.maximumf %137, %139 : vector<8x1xf32>
      %141 = arith.subf %137, %140 : vector<8x1xf32>
      %142 = math.exp %141 : vector<8x1xf32>
      %143 = vector.broadcast %140 : vector<8x1xf32> to vector<8x8xf32>
      %144 = arith.subf %135, %143 : vector<8x8xf32>
      %145 = math.exp %144 : vector<8x8xf32>
      %c3_104 = arith.constant 3 : index
      %c0_105 = arith.constant 0 : index
      %c0_106 = arith.constant 0 : index
      %146 = vector.load %arg9[%c3_104, %c0_105, %c0_106] : memref<4x8x1xf32, #tpu.memory_space<vmem>>, vector<1x8x1xf32>
      %147 = vector.shape_cast %146 : vector<1x8x1xf32> to vector<8x1xf32>
      %148 = arith.mulf %142, %147 : vector<8x1xf32>
      %cst_107 = arith.constant dense<0.000000e+00> : vector<8xf32>
      %149 = vector.multi_reduction <add>, %145, %cst_107 [1] : vector<8x8xf32> to vector<8xf32>
      %150 = vector.shape_cast %149 : vector<8xf32> to vector<8x1xf32>
      %151 = arith.addf %148, %150 : vector<8x1xf32>
      %c3_108 = arith.constant 3 : index
      %c0_109 = arith.constant 0 : index
      %c0_110 = arith.constant 0 : index
      %152 = vector.load %arg9[%c3_108, %c0_109, %c0_110] : memref<4x8x1xf32, #tpu.memory_space<vmem>>, vector<1x8x1xf32>
      %153 = vector.shape_cast %152 : vector<1x8x1xf32> to vector<8x1xf32>
      %154 = vector.shape_cast %151 : vector<8x1xf32> to vector<1x8x1xf32>
      tpu.vector_store %arg9[%c3_108, %c0_109, %c0_110], %154 {strides = array<i32>} : memref<4x8x1xf32, #tpu.memory_space<vmem>>, vector<1x8x1xf32>,
      %c3_111 = arith.constant 3 : index
      %c0_112 = arith.constant 0 : index
      %c0_113 = arith.constant 0 : index
      %155 = vector.load %arg10[%c3_111, %c0_112, %c0_113] : memref<4x8x8xf32, #tpu.memory_space<vmem>>, vector<1x8x8xf32>
      %156 = vector.shape_cast %155 : vector<1x8x8xf32> to vector<8x8xf32>
      %157 = vector.broadcast %142 : vector<8x1xf32> to vector<8x8xf32>
      %158 = arith.mulf %157, %156 : vector<8x8xf32>
      %159 = arith.truncf %145 : vector<8x8xf32> to vector<8x8xbf16>
      %cst_114 = arith.constant dense<0.000000e+00> : vector<8x8xf32>
      %160 = tpu.matmul %159, %134, %cst_114 {dimension_numbers = #tpu.dot_dimension_numbers<[1], [0], [0], [1], [0, 0, 1, 1], [], []>} : vector<8x8xbf16>, vector<8x8xbf16>, vector<8x8xf32> -> vector<8x8xf32>
      %161 = arith.addf %158, %160 : vector<8x8xf32>
      %c3_115 = arith.constant 3 : index
      %c0_116 = arith.constant 0 : index
      %c0_117 = arith.constant 0 : index
      %162 = vector.load %arg10[%c3_115, %c0_116, %c0_117] : memref<4x8x8xf32, #tpu.memory_space<vmem>>, vector<1x8x8xf32>
      %163 = vector.shape_cast %162 : vector<1x8x8xf32> to vector<8x8xf32>
      %164 = vector.shape_cast %161 : vector<8x8xf32> to vector<1x8x8xf32>
      tpu.vector_store %arg10[%c3_115, %c0_116, %c0_117], %164 {strides = array<i32>} : memref<4x8x8xf32, #tpu.memory_space<vmem>>, vector<1x8x8xf32>,
      %c3_118 = arith.constant 3 : index
      %c0_119 = arith.constant 0 : index
      %c0_120 = arith.constant 0 : index
      %165 = vector.load %arg8[%c3_118, %c0_119, %c0_120] : memref<4x8x1xf32, #tpu.memory_space<vmem>>, vector<1x8x1xf32>
      %166 = vector.shape_cast %165 : vector<1x8x1xf32> to vector<8x1xf32>
      %167 = vector.shape_cast %140 : vector<8x1xf32> to vector<1x8x1xf32>
      tpu.vector_store %arg8[%c3_118, %c0_119, %c0_120], %167 {strides = array<i32>} : memref<4x8x1xf32, #tpu.memory_space<vmem>>, vector<1x8x1xf32>,
    } else {
    }
    %6 = arith.cmpi eq, %arg3, %arg2 : i32
    %7 = arith.extui %6 : i1 to i32
    %c0_i32_2 = arith.constant 0 : i32
    %8 = arith.cmpi ne, %7, %c0_i32_2 : i32
    scf.if %8 {
      %12 = tpu.iota {dimensions = array<i32: 1>} : vector<8x8xi32>
      %13 = tpu.iota {dimensions = array<i32: 0>} : vector<8x8xi32>
      %14 = arith.cmpi sle, %12, %13 : vector<8x8xi32>
      %c0 = arith.constant 0 : index
      %c0_5 = arith.constant 0 : index
      %c0_6 = arith.constant 0 : index
      %15 = vector.load %arg4[%c0, %c0_5, %c0_6] : memref<1x8x32xbf16, #tpu.memory_space<vmem>>, vector<1x8x8xbf16>
      %16 = vector.shape_cast %15 : vector<1x8x8xbf16> to vector<8x8xbf16>
      %c0_7 = arith.constant 0 : index
      %c0_8 = arith.constant 0 : index
      %c0_9 = arith.constant 0 : index
      %17 = vector.load %arg5[%c0_7, %c0_8, %c0_9] : memref<1x8x32xbf16, #tpu.memory_space<vmem>>, vector<1x8x8xbf16>
      %18 = vector.shape_cast %17 : vector<1x8x8xbf16> to vector<8x8xbf16>
      %c0_10 = arith.constant 0 : index
      %c0_11 = arith.constant 0 : index
      %c0_12 = arith.constant 0 : index
      %19 = vector.load %arg6[%c0_10, %c0_11, %c0_12] : memref<1x8x32xbf16, #tpu.memory_space<vmem>>, vector<1x8x8xbf16>
      %20 = vector.shape_cast %19 : vector<1x8x8xbf16> to vector<8x8xbf16>
      %cst = arith.constant dense<0.000000e+00> : vector<8x8xf32>
      %21 = tpu.matmul %16, %18, %cst {dimension_numbers = #tpu.dot_dimension_numbers<[1], [1], [0], [0], [0, 0, 1, 0], [], []>} : vector<8x8xbf16>, vector<8x8xbf16>, vector<8x8xf32> -> vector<8x8xf32>
      %cst_13 = arith.constant -1.000000e+30 : f32
      %22 = vector.broadcast %cst_13 : f32 to vector<8x8xf32>
      %23 = arith.select %14, %21, %22 : vector<8x8xi1>, vector<8x8xf32>
      %c0_14 = arith.constant 0 : index
      %c0_15 = arith.constant 0 : index
      %c0_16 = arith.constant 0 : index
      %24 = vector.load %arg8[%c0_14, %c0_15, %c0_16] : memref<4x8x1xf32, #tpu.memory_space<vmem>>, vector<1x8x1xf32>
      %25 = vector.shape_cast %24 : vector<1x8x1xf32> to vector<8x1xf32>
      %cst_17 = arith.constant dense<0xFF800000> : vector<8xf32>
      %26 = vector.multi_reduction <maximumf>, %23, %cst_17 [1] : vector<8x8xf32> to vector<8xf32>
      %27 = vector.shape_cast %26 : vector<8xf32> to vector<8x1xf32>
      %28 = arith.maximumf %25, %27 : vector<8x1xf32>
      %29 = arith.subf %25, %28 : vector<8x1xf32>
      %30 = math.exp %29 : vector<8x1xf32>
      %31 = vector.broadcast %28 : vector<8x1xf32> to vector<8x8xf32>
      %32 = arith.subf %23, %31 : vector<8x8xf32>
      %33 = math.exp %32 : vector<8x8xf32>
      %c0_18 = arith.constant 0 : index
      %c0_19 = arith.constant 0 : index
      %c0_20 = arith.constant 0 : index
      %34 = vector.load %arg9[%c0_18, %c0_19, %c0_20] : memref<4x8x1xf32, #tpu.memory_space<vmem>>, vector<1x8x1xf32>
      %35 = vector.shape_cast %34 : vector<1x8x1xf32> to vector<8x1xf32>
      %36 = arith.mulf %30, %35 : vector<8x1xf32>
      %cst_21 = arith.constant dense<0.000000e+00> : vector<8xf32>
      %37 = vector.multi_reduction <add>, %33, %cst_21 [1] : vector<8x8xf32> to vector<8xf32>
      %38 = vector.shape_cast %37 : vector<8xf32> to vector<8x1xf32>
      %39 = arith.addf %36, %38 : vector<8x1xf32>
      %c0_22 = arith.constant 0 : index
      %c0_23 = arith.constant 0 : index
      %c0_24 = arith.constant 0 : index
      %40 = vector.load %arg9[%c0_22, %c0_23, %c0_24] : memref<4x8x1xf32, #tpu.memory_space<vmem>>, vector<1x8x1xf32>
      %41 = vector.shape_cast %40 : vector<1x8x1xf32> to vector<8x1xf32>
      %42 = vector.shape_cast %39 : vector<8x1xf32> to vector<1x8x1xf32>
      tpu.vector_store %arg9[%c0_22, %c0_23, %c0_24], %42 {strides = array<i32>} : memref<4x8x1xf32, #tpu.memory_space<vmem>>, vector<1x8x1xf32>,
      %c0_25 = arith.constant 0 : index
      %c0_26 = arith.constant 0 : index
      %c0_27 = arith.constant 0 : index
      %43 = vector.load %arg10[%c0_25, %c0_26, %c0_27] : memref<4x8x8xf32, #tpu.memory_space<vmem>>, vector<1x8x8xf32>
      %44 = vector.shape_cast %43 : vector<1x8x8xf32> to vector<8x8xf32>
      %45 = vector.broadcast %30 : vector<8x1xf32> to vector<8x8xf32>
      %46 = arith.mulf %45, %44 : vector<8x8xf32>
      %47 = arith.truncf %33 : vector<8x8xf32> to vector<8x8xbf16>
      %cst_28 = arith.constant dense<0.000000e+00> : vector<8x8xf32>
      %48 = tpu.matmul %47, %20, %cst_28 {dimension_numbers = #tpu.dot_dimension_numbers<[1], [0], [0], [1], [0, 0, 1, 1], [], []>} : vector<8x8xbf16>, vector<8x8xbf16>, vector<8x8xf32> -> vector<8x8xf32>
      %49 = arith.addf %46, %48 : vector<8x8xf32>
      %c0_29 = arith.constant 0 : index
      %c0_30 = arith.constant 0 : index
      %c0_31 = arith.constant 0 : index
      %50 = vector.load %arg10[%c0_29, %c0_30, %c0_31] : memref<4x8x8xf32, #tpu.memory_space<vmem>>, vector<1x8x8xf32>
      %51 = vector.shape_cast %50 : vector<1x8x8xf32> to vector<8x8xf32>
      %52 = vector.shape_cast %49 : vector<8x8xf32> to vector<1x8x8xf32>
      tpu.vector_store %arg10[%c0_29, %c0_30, %c0_31], %52 {strides = array<i32>} : memref<4x8x8xf32, #tpu.memory_space<vmem>>, vector<1x8x8xf32>,
      %c0_32 = arith.constant 0 : index
      %c0_33 = arith.constant 0 : index
      %c0_34 = arith.constant 0 : index
      %53 = vector.load %arg8[%c0_32, %c0_33, %c0_34] : memref<4x8x1xf32, #tpu.memory_space<vmem>>, vector<1x8x1xf32>
      %54 = vector.shape_cast %53 : vector<1x8x1xf32> to vector<8x1xf32>
      %55 = vector.shape_cast %28 : vector<8x1xf32> to vector<1x8x1xf32>
      tpu.vector_store %arg8[%c0_32, %c0_33, %c0_34], %55 {strides = array<i32>} : memref<4x8x1xf32, #tpu.memory_space<vmem>>, vector<1x8x1xf32>,
      %c0_35 = arith.constant 0 : index
      %c0_36 = arith.constant 0 : index
      %c8 = arith.constant 8 : index
      %56 = vector.load %arg4[%c0_35, %c0_36, %c8] : memref<1x8x32xbf16, #tpu.memory_space<vmem>>, vector<1x8x8xbf16>
      %57 = vector.shape_cast %56 : vector<1x8x8xbf16> to vector<8x8xbf16>
      %c0_37 = arith.constant 0 : index
      %c0_38 = arith.constant 0 : index
      %c8_39 = arith.constant 8 : index
      %58 = vector.load %arg5[%c0_37, %c0_38, %c8_39] : memref<1x8x32xbf16, #tpu.memory_space<vmem>>, vector<1x8x8xbf16>
      %59 = vector.shape_cast %58 : vector<1x8x8xbf16> to vector<8x8xbf16>
      %c0_40 = arith.constant 0 : index
      %c0_41 = arith.constant 0 : index
      %c8_42 = arith.constant 8 : index
      %60 = vector.load %arg6[%c0_40, %c0_41, %c8_42] : memref<1x8x32xbf16, #tpu.memory_space<vmem>>, vector<1x8x8xbf16>
      %61 = vector.shape_cast %60 : vector<1x8x8xbf16> to vector<8x8xbf16>
      %cst_43 = arith.constant dense<0.000000e+00> : vector<8x8xf32>
      %62 = tpu.matmul %57, %59, %cst_43 {dimension_numbers = #tpu.dot_dimension_numbers<[1], [1], [0], [0], [0, 0, 1, 0], [], []>} : vector<8x8xbf16>, vector<8x8xbf16>, vector<8x8xf32> -> vector<8x8xf32>
      %cst_44 = arith.constant -1.000000e+30 : f32
      %63 = vector.broadcast %cst_44 : f32 to vector<8x8xf32>
      %64 = arith.select %14, %62, %63 : vector<8x8xi1>, vector<8x8xf32>
      %c1 = arith.constant 1 : index
      %c0_45 = arith.constant 0 : index
      %c0_46 = arith.constant 0 : index
      %65 = vector.load %arg8[%c1, %c0_45, %c0_46] : memref<4x8x1xf32, #tpu.memory_space<vmem>>, vector<1x8x1xf32>
      %66 = vector.shape_cast %65 : vector<1x8x1xf32> to vector<8x1xf32>
      %cst_47 = arith.constant dense<0xFF800000> : vector<8xf32>
      %67 = vector.multi_reduction <maximumf>, %64, %cst_47 [1] : vector<8x8xf32> to vector<8xf32>
      %68 = vector.shape_cast %67 : vector<8xf32> to vector<8x1xf32>
      %69 = arith.maximumf %66, %68 : vector<8x1xf32>
      %70 = arith.subf %66, %69 : vector<8x1xf32>
      %71 = math.exp %70 : vector<8x1xf32>
      %72 = vector.broadcast %69 : vector<8x1xf32> to vector<8x8xf32>
      %73 = arith.subf %64, %72 : vector<8x8xf32>
      %74 = math.exp %73 : vector<8x8xf32>
      %c1_48 = arith.constant 1 : index
      %c0_49 = arith.constant 0 : index
      %c0_50 = arith.constant 0 : index
      %75 = vector.load %arg9[%c1_48, %c0_49, %c0_50] : memref<4x8x1xf32, #tpu.memory_space<vmem>>, vector<1x8x1xf32>
      %76 = vector.shape_cast %75 : vector<1x8x1xf32> to vector<8x1xf32>
      %77 = arith.mulf %71, %76 : vector<8x1xf32>
      %cst_51 = arith.constant dense<0.000000e+00> : vector<8xf32>
      %78 = vector.multi_reduction <add>, %74, %cst_51 [1] : vector<8x8xf32> to vector<8xf32>
      %79 = vector.shape_cast %78 : vector<8xf32> to vector<8x1xf32>
      %80 = arith.addf %77, %79 : vector<8x1xf32>
      %c1_52 = arith.constant 1 : index
      %c0_53 = arith.constant 0 : index
      %c0_54 = arith.constant 0 : index
      %81 = vector.load %arg9[%c1_52, %c0_53, %c0_54] : memref<4x8x1xf32, #tpu.memory_space<vmem>>, vector<1x8x1xf32>
      %82 = vector.shape_cast %81 : vector<1x8x1xf32> to vector<8x1xf32>
      %83 = vector.shape_cast %80 : vector<8x1xf32> to vector<1x8x1xf32>
      tpu.vector_store %arg9[%c1_52, %c0_53, %c0_54], %83 {strides = array<i32>} : memref<4x8x1xf32, #tpu.memory_space<vmem>>, vector<1x8x1xf32>,
      %c1_55 = arith.constant 1 : index
      %c0_56 = arith.constant 0 : index
      %c0_57 = arith.constant 0 : index
      %84 = vector.load %arg10[%c1_55, %c0_56, %c0_57] : memref<4x8x8xf32, #tpu.memory_space<vmem>>, vector<1x8x8xf32>
      %85 = vector.shape_cast %84 : vector<1x8x8xf32> to vector<8x8xf32>
      %86 = vector.broadcast %71 : vector<8x1xf32> to vector<8x8xf32>
      %87 = arith.mulf %86, %85 : vector<8x8xf32>
      %88 = arith.truncf %74 : vector<8x8xf32> to vector<8x8xbf16>
      %cst_58 = arith.constant dense<0.000000e+00> : vector<8x8xf32>
      %89 = tpu.matmul %88, %61, %cst_58 {dimension_numbers = #tpu.dot_dimension_numbers<[1], [0], [0], [1], [0, 0, 1, 1], [], []>} : vector<8x8xbf16>, vector<8x8xbf16>, vector<8x8xf32> -> vector<8x8xf32>
      %90 = arith.addf %87, %89 : vector<8x8xf32>
      %c1_59 = arith.constant 1 : index
      %c0_60 = arith.constant 0 : index
      %c0_61 = arith.constant 0 : index
      %91 = vector.load %arg10[%c1_59, %c0_60, %c0_61] : memref<4x8x8xf32, #tpu.memory_space<vmem>>, vector<1x8x8xf32>
      %92 = vector.shape_cast %91 : vector<1x8x8xf32> to vector<8x8xf32>
      %93 = vector.shape_cast %90 : vector<8x8xf32> to vector<1x8x8xf32>
      tpu.vector_store %arg10[%c1_59, %c0_60, %c0_61], %93 {strides = array<i32>} : memref<4x8x8xf32, #tpu.memory_space<vmem>>, vector<1x8x8xf32>,
      %c1_62 = arith.constant 1 : index
      %c0_63 = arith.constant 0 : index
      %c0_64 = arith.constant 0 : index
      %94 = vector.load %arg8[%c1_62, %c0_63, %c0_64] : memref<4x8x1xf32, #tpu.memory_space<vmem>>, vector<1x8x1xf32>
      %95 = vector.shape_cast %94 : vector<1x8x1xf32> to vector<8x1xf32>
      %96 = vector.shape_cast %69 : vector<8x1xf32> to vector<1x8x1xf32>
      tpu.vector_store %arg8[%c1_62, %c0_63, %c0_64], %96 {strides = array<i32>} : memref<4x8x1xf32, #tpu.memory_space<vmem>>, vector<1x8x1xf32>,
      %c0_65 = arith.constant 0 : index
      %c0_66 = arith.constant 0 : index
      %c16 = arith.constant 16 : index
      %97 = vector.load %arg4[%c0_65, %c0_66, %c16] : memref<1x8x32xbf16, #tpu.memory_space<vmem>>, vector<1x8x8xbf16>
      %98 = vector.shape_cast %97 : vector<1x8x8xbf16> to vector<8x8xbf16>
      %c0_67 = arith.constant 0 : index
      %c0_68 = arith.constant 0 : index
      %c16_69 = arith.constant 16 : index
      %99 = vector.load %arg5[%c0_67, %c0_68, %c16_69] : memref<1x8x32xbf16, #tpu.memory_space<vmem>>, vector<1x8x8xbf16>
      %100 = vector.shape_cast %99 : vector<1x8x8xbf16> to vector<8x8xbf16>
      %c0_70 = arith.constant 0 : index
      %c0_71 = arith.constant 0 : index
      %c16_72 = arith.constant 16 : index
      %101 = vector.load %arg6[%c0_70, %c0_71, %c16_72] : memref<1x8x32xbf16, #tpu.memory_space<vmem>>, vector<1x8x8xbf16>
      %102 = vector.shape_cast %101 : vector<1x8x8xbf16> to vector<8x8xbf16>
      %cst_73 = arith.constant dense<0.000000e+00> : vector<8x8xf32>
      %103 = tpu.matmul %98, %100, %cst_73 {dimension_numbers = #tpu.dot_dimension_numbers<[1], [1], [0], [0], [0, 0, 1, 0], [], []>} : vector<8x8xbf16>, vector<8x8xbf16>, vector<8x8xf32> -> vector<8x8xf32>
      %cst_74 = arith.constant -1.000000e+30 : f32
      %104 = vector.broadcast %cst_74 : f32 to vector<8x8xf32>
      %105 = arith.select %14, %103, %104 : vector<8x8xi1>, vector<8x8xf32>
      %c2 = arith.constant 2 : index
      %c0_75 = arith.constant 0 : index
      %c0_76 = arith.constant 0 : index
      %106 = vector.load %arg8[%c2, %c0_75, %c0_76] : memref<4x8x1xf32, #tpu.memory_space<vmem>>, vector<1x8x1xf32>
      %107 = vector.shape_cast %106 : vector<1x8x1xf32> to vector<8x1xf32>
      %cst_77 = arith.constant dense<0xFF800000> : vector<8xf32>
      %108 = vector.multi_reduction <maximumf>, %105, %cst_77 [1] : vector<8x8xf32> to vector<8xf32>
      %109 = vector.shape_cast %108 : vector<8xf32> to vector<8x1xf32>
      %110 = arith.maximumf %107, %109 : vector<8x1xf32>
      %111 = arith.subf %107, %110 : vector<8x1xf32>
      %112 = math.exp %111 : vector<8x1xf32>
      %113 = vector.broadcast %110 : vector<8x1xf32> to vector<8x8xf32>
      %114 = arith.subf %105, %113 : vector<8x8xf32>
      %115 = math.exp %114 : vector<8x8xf32>
      %c2_78 = arith.constant 2 : index
      %c0_79 = arith.constant 0 : index
      %c0_80 = arith.constant 0 : index
      %116 = vector.load %arg9[%c2_78, %c0_79, %c0_80] : memref<4x8x1xf32, #tpu.memory_space<vmem>>, vector<1x8x1xf32>
      %117 = vector.shape_cast %116 : vector<1x8x1xf32> to vector<8x1xf32>
      %118 = arith.mulf %112, %117 : vector<8x1xf32>
      %cst_81 = arith.constant dense<0.000000e+00> : vector<8xf32>
      %119 = vector.multi_reduction <add>, %115, %cst_81 [1] : vector<8x8xf32> to vector<8xf32>
      %120 = vector.shape_cast %119 : vector<8xf32> to vector<8x1xf32>
      %121 = arith.addf %118, %120 : vector<8x1xf32>
      %c2_82 = arith.constant 2 : index
      %c0_83 = arith.constant 0 : index
      %c0_84 = arith.constant 0 : index
      %122 = vector.load %arg9[%c2_82, %c0_83, %c0_84] : memref<4x8x1xf32, #tpu.memory_space<vmem>>, vector<1x8x1xf32>
      %123 = vector.shape_cast %122 : vector<1x8x1xf32> to vector<8x1xf32>
      %124 = vector.shape_cast %121 : vector<8x1xf32> to vector<1x8x1xf32>
      tpu.vector_store %arg9[%c2_82, %c0_83, %c0_84], %124 {strides = array<i32>} : memref<4x8x1xf32, #tpu.memory_space<vmem>>, vector<1x8x1xf32>,
      %c2_85 = arith.constant 2 : index
      %c0_86 = arith.constant 0 : index
      %c0_87 = arith.constant 0 : index
      %125 = vector.load %arg10[%c2_85, %c0_86, %c0_87] : memref<4x8x8xf32, #tpu.memory_space<vmem>>, vector<1x8x8xf32>
      %126 = vector.shape_cast %125 : vector<1x8x8xf32> to vector<8x8xf32>
      %127 = vector.broadcast %112 : vector<8x1xf32> to vector<8x8xf32>
      %128 = arith.mulf %127, %126 : vector<8x8xf32>
      %129 = arith.truncf %115 : vector<8x8xf32> to vector<8x8xbf16>
      %cst_88 = arith.constant dense<0.000000e+00> : vector<8x8xf32>
      %130 = tpu.matmul %129, %102, %cst_88 {dimension_numbers = #tpu.dot_dimension_numbers<[1], [0], [0], [1], [0, 0, 1, 1], [], []>} : vector<8x8xbf16>, vector<8x8xbf16>, vector<8x8xf32> -> vector<8x8xf32>
      %131 = arith.addf %128, %130 : vector<8x8xf32>
      %c2_89 = arith.constant 2 : index
      %c0_90 = arith.constant 0 : index
      %c0_91 = arith.constant 0 : index
      %132 = vector.load %arg10[%c2_89, %c0_90, %c0_91] : memref<4x8x8xf32, #tpu.memory_space<vmem>>, vector<1x8x8xf32>
      %133 = vector.shape_cast %132 : vector<1x8x8xf32> to vector<8x8xf32>
      %134 = vector.shape_cast %131 : vector<8x8xf32> to vector<1x8x8xf32>
      tpu.vector_store %arg10[%c2_89, %c0_90, %c0_91], %134 {strides = array<i32>} : memref<4x8x8xf32, #tpu.memory_space<vmem>>, vector<1x8x8xf32>,
      %c2_92 = arith.constant 2 : index
      %c0_93 = arith.constant 0 : index
      %c0_94 = arith.constant 0 : index
      %135 = vector.load %arg8[%c2_92, %c0_93, %c0_94] : memref<4x8x1xf32, #tpu.memory_space<vmem>>, vector<1x8x1xf32>
      %136 = vector.shape_cast %135 : vector<1x8x1xf32> to vector<8x1xf32>
      %137 = vector.shape_cast %110 : vector<8x1xf32> to vector<1x8x1xf32>
      tpu.vector_store %arg8[%c2_92, %c0_93, %c0_94], %137 {strides = array<i32>} : memref<4x8x1xf32, #tpu.memory_space<vmem>>, vector<1x8x1xf32>,
      %c0_95 = arith.constant 0 : index
      %c0_96 = arith.constant 0 : index
      %c24 = arith.constant 24 : index
      %138 = vector.load %arg4[%c0_95, %c0_96, %c24] : memref<1x8x32xbf16, #tpu.memory_space<vmem>>, vector<1x8x8xbf16>
      %139 = vector.shape_cast %138 : vector<1x8x8xbf16> to vector<8x8xbf16>
      %c0_97 = arith.constant 0 : index
      %c0_98 = arith.constant 0 : index
      %c24_99 = arith.constant 24 : index
      %140 = vector.load %arg5[%c0_97, %c0_98, %c24_99] : memref<1x8x32xbf16, #tpu.memory_space<vmem>>, vector<1x8x8xbf16>
      %141 = vector.shape_cast %140 : vector<1x8x8xbf16> to vector<8x8xbf16>
      %c0_100 = arith.constant 0 : index
      %c0_101 = arith.constant 0 : index
      %c24_102 = arith.constant 24 : index
      %142 = vector.load %arg6[%c0_100, %c0_101, %c24_102] : memref<1x8x32xbf16, #tpu.memory_space<vmem>>, vector<1x8x8xbf16>
      %143 = vector.shape_cast %142 : vector<1x8x8xbf16> to vector<8x8xbf16>
      %cst_103 = arith.constant dense<0.000000e+00> : vector<8x8xf32>
      %144 = tpu.matmul %139, %141, %cst_103 {dimension_numbers = #tpu.dot_dimension_numbers<[1], [1], [0], [0], [0, 0, 1, 0], [], []>} : vector<8x8xbf16>, vector<8x8xbf16>, vector<8x8xf32> -> vector<8x8xf32>
      %cst_104 = arith.constant -1.000000e+30 : f32
      %145 = vector.broadcast %cst_104 : f32 to vector<8x8xf32>
      %146 = arith.select %14, %144, %145 : vector<8x8xi1>, vector<8x8xf32>
      %c3 = arith.constant 3 : index
      %c0_105 = arith.constant 0 : index
      %c0_106 = arith.constant 0 : index
      %147 = vector.load %arg8[%c3, %c0_105, %c0_106] : memref<4x8x1xf32, #tpu.memory_space<vmem>>, vector<1x8x1xf32>
      %148 = vector.shape_cast %147 : vector<1x8x1xf32> to vector<8x1xf32>
      %cst_107 = arith.constant dense<0xFF800000> : vector<8xf32>
      %149 = vector.multi_reduction <maximumf>, %146, %cst_107 [1] : vector<8x8xf32> to vector<8xf32>
      %150 = vector.shape_cast %149 : vector<8xf32> to vector<8x1xf32>
      %151 = arith.maximumf %148, %150 : vector<8x1xf32>
      %152 = arith.subf %148, %151 : vector<8x1xf32>
      %153 = math.exp %152 : vector<8x1xf32>
      %154 = vector.broadcast %151 : vector<8x1xf32> to vector<8x8xf32>
      %155 = arith.subf %146, %154 : vector<8x8xf32>
      %156 = math.exp %155 : vector<8x8xf32>
      %c3_108 = arith.constant 3 : index
      %c0_109 = arith.constant 0 : index
      %c0_110 = arith.constant 0 : index
      %157 = vector.load %arg9[%c3_108, %c0_109, %c0_110] : memref<4x8x1xf32, #tpu.memory_space<vmem>>, vector<1x8x1xf32>
      %158 = vector.shape_cast %157 : vector<1x8x1xf32> to vector<8x1xf32>
      %159 = arith.mulf %153, %158 : vector<8x1xf32>
      %cst_111 = arith.constant dense<0.000000e+00> : vector<8xf32>
      %160 = vector.multi_reduction <add>, %156, %cst_111 [1] : vector<8x8xf32> to vector<8xf32>
      %161 = vector.shape_cast %160 : vector<8xf32> to vector<8x1xf32>
      %162 = arith.addf %159, %161 : vector<8x1xf32>
      %c3_112 = arith.constant 3 : index
      %c0_113 = arith.constant 0 : index
      %c0_114 = arith.constant 0 : index
      %163 = vector.load %arg9[%c3_112, %c0_113, %c0_114] : memref<4x8x1xf32, #tpu.memory_space<vmem>>, vector<1x8x1xf32>
      %164 = vector.shape_cast %163 : vector<1x8x1xf32> to vector<8x1xf32>
      %165 = vector.shape_cast %162 : vector<8x1xf32> to vector<1x8x1xf32>
      tpu.vector_store %arg9[%c3_112, %c0_113, %c0_114], %165 {strides = array<i32>} : memref<4x8x1xf32, #tpu.memory_space<vmem>>, vector<1x8x1xf32>,
      %c3_115 = arith.constant 3 : index
      %c0_116 = arith.constant 0 : index
      %c0_117 = arith.constant 0 : index
      %166 = vector.load %arg10[%c3_115, %c0_116, %c0_117] : memref<4x8x8xf32, #tpu.memory_space<vmem>>, vector<1x8x8xf32>
      %167 = vector.shape_cast %166 : vector<1x8x8xf32> to vector<8x8xf32>
      %168 = vector.broadcast %153 : vector<8x1xf32> to vector<8x8xf32>
      %169 = arith.mulf %168, %167 : vector<8x8xf32>
      %170 = arith.truncf %156 : vector<8x8xf32> to vector<8x8xbf16>
      %cst_118 = arith.constant dense<0.000000e+00> : vector<8x8xf32>
      %171 = tpu.matmul %170, %143, %cst_118 {dimension_numbers = #tpu.dot_dimension_numbers<[1], [0], [0], [1], [0, 0, 1, 1], [], []>} : vector<8x8xbf16>, vector<8x8xbf16>, vector<8x8xf32> -> vector<8x8xf32>
      %172 = arith.addf %169, %171 : vector<8x8xf32>
      %c3_119 = arith.constant 3 : index
      %c0_120 = arith.constant 0 : index
      %c0_121 = arith.constant 0 : index
      %173 = vector.load %arg10[%c3_119, %c0_120, %c0_121] : memref<4x8x8xf32, #tpu.memory_space<vmem>>, vector<1x8x8xf32>
      %174 = vector.shape_cast %173 : vector<1x8x8xf32> to vector<8x8xf32>
      %175 = vector.shape_cast %172 : vector<8x8xf32> to vector<1x8x8xf32>
      tpu.vector_store %arg10[%c3_119, %c0_120, %c0_121], %175 {strides = array<i32>} : memref<4x8x8xf32, #tpu.memory_space<vmem>>, vector<1x8x8xf32>,
      %c3_122 = arith.constant 3 : index
      %c0_123 = arith.constant 0 : index
      %c0_124 = arith.constant 0 : index
      %176 = vector.load %arg8[%c3_122, %c0_123, %c0_124] : memref<4x8x1xf32, #tpu.memory_space<vmem>>, vector<1x8x1xf32>
      %177 = vector.shape_cast %176 : vector<1x8x1xf32> to vector<8x1xf32>
      %178 = vector.shape_cast %151 : vector<8x1xf32> to vector<1x8x1xf32>
      tpu.vector_store %arg8[%c3_122, %c0_123, %c0_124], %178 {strides = array<i32>} : memref<4x8x1xf32, #tpu.memory_space<vmem>>, vector<1x8x1xf32>,
    } else {
    }
    %c0_i32_3 = arith.constant 0 : i32
    %9 = arith.cmpi eq, %arg3, %c0_i32_3 : i32
    %10 = arith.extui %9 : i1 to i32
    %c0_i32_4 = arith.constant 0 : i32
    %11 = arith.cmpi ne, %10, %c0_i32_4 : i32
    scf.if %11 {
      %c0 = arith.constant 0 : index
      %c0_5 = arith.constant 0 : index
      %c0_6 = arith.constant 0 : index
      %12 = vector.load %arg9[%c0, %c0_5, %c0_6] : memref<4x8x1xf32, #tpu.memory_space<vmem>>, vector<1x8x1xf32>
      %13 = vector.shape_cast %12 : vector<1x8x1xf32> to vector<8x1xf32>
      %14 = tpu.reciprocal %13 {approx = true} : vector<8x1xf32> -> vector<8x1xf32>
      %c0_7 = arith.constant 0 : index
      %c0_8 = arith.constant 0 : index
      %c0_9 = arith.constant 0 : index
      %15 = vector.load %arg10[%c0_7, %c0_8, %c0_9] : memref<4x8x8xf32, #tpu.memory_space<vmem>>, vector<1x8x8xf32>
      %16 = vector.shape_cast %15 : vector<1x8x8xf32> to vector<8x8xf32>
      %17 = vector.broadcast %14 : vector<8x1xf32> to vector<8x8xf32>
      %18 = arith.mulf %16, %17 : vector<8x8xf32>
      %19 = arith.truncf %18 : vector<8x8xf32> to vector<8x8xbf16>
      %c0_10 = arith.constant 0 : index
      %c0_11 = arith.constant 0 : index
      %c0_12 = arith.constant 0 : index
      %20 = vector.load %arg7[%c0_10, %c0_11, %c0_12] : memref<1x8x32xbf16, #tpu.memory_space<vmem>>, vector<1x8x8xbf16>
      %21 = vector.shape_cast %20 : vector<1x8x8xbf16> to vector<8x8xbf16>
      %22 = vector.shape_cast %19 : vector<8x8xbf16> to vector<1x8x8xbf16>
      tpu.vector_store %arg7[%c0_10, %c0_11, %c0_12], %22 {strides = array<i32>} : memref<1x8x32xbf16, #tpu.memory_space<vmem>>, vector<1x8x8xbf16>,
      %c1 = arith.constant 1 : index
      %c0_13 = arith.constant 0 : index
      %c0_14 = arith.constant 0 : index
      %23 = vector.load %arg9[%c1, %c0_13, %c0_14] : memref<4x8x1xf32, #tpu.memory_space<vmem>>, vector<1x8x1xf32>
      %24 = vector.shape_cast %23 : vector<1x8x1xf32> to vector<8x1xf32>
      %25 = tpu.reciprocal %24 {approx = true} : vector<8x1xf32> -> vector<8x1xf32>
      %c1_15 = arith.constant 1 : index
      %c0_16 = arith.constant 0 : index
      %c0_17 = arith.constant 0 : index
      %26 = vector.load %arg10[%c1_15, %c0_16, %c0_17] : memref<4x8x8xf32, #tpu.memory_space<vmem>>, vector<1x8x8xf32>
      %27 = vector.shape_cast %26 : vector<1x8x8xf32> to vector<8x8xf32>
      %28 = vector.broadcast %25 : vector<8x1xf32> to vector<8x8xf32>
      %29 = arith.mulf %27, %28 : vector<8x8xf32>
      %30 = arith.truncf %29 : vector<8x8xf32> to vector<8x8xbf16>
      %c0_18 = arith.constant 0 : index
      %c0_19 = arith.constant 0 : index
      %c8 = arith.constant 8 : index
      %31 = vector.load %arg7[%c0_18, %c0_19, %c8] : memref<1x8x32xbf16, #tpu.memory_space<vmem>>, vector<1x8x8xbf16>
      %32 = vector.shape_cast %31 : vector<1x8x8xbf16> to vector<8x8xbf16>
      %33 = vector.shape_cast %30 : vector<8x8xbf16> to vector<1x8x8xbf16>
      tpu.vector_store %arg7[%c0_18, %c0_19, %c8], %33 {strides = array<i32>} : memref<1x8x32xbf16, #tpu.memory_space<vmem>>, vector<1x8x8xbf16>,
      %c2 = arith.constant 2 : index
      %c0_20 = arith.constant 0 : index
      %c0_21 = arith.constant 0 : index
      %34 = vector.load %arg9[%c2, %c0_20, %c0_21] : memref<4x8x1xf32, #tpu.memory_space<vmem>>, vector<1x8x1xf32>
      %35 = vector.shape_cast %34 : vector<1x8x1xf32> to vector<8x1xf32>
      %36 = tpu.reciprocal %35 {approx = true} : vector<8x1xf32> -> vector<8x1xf32>
      %c2_22 = arith.constant 2 : index
      %c0_23 = arith.constant 0 : index
      %c0_24 = arith.constant 0 : index
      %37 = vector.load %arg10[%c2_22, %c0_23, %c0_24] : memref<4x8x8xf32, #tpu.memory_space<vmem>>, vector<1x8x8xf32>
      %38 = vector.shape_cast %37 : vector<1x8x8xf32> to vector<8x8xf32>
      %39 = vector.broadcast %36 : vector<8x1xf32> to vector<8x8xf32>
      %40 = arith.mulf %38, %39 : vector<8x8xf32>
      %41 = arith.truncf %40 : vector<8x8xf32> to vector<8x8xbf16>
      %c0_25 = arith.constant 0 : index
      %c0_26 = arith.constant 0 : index
      %c16 = arith.constant 16 : index
      %42 = vector.load %arg7[%c0_25, %c0_26, %c16] : memref<1x8x32xbf16, #tpu.memory_space<vmem>>, vector<1x8x8xbf16>
      %43 = vector.shape_cast %42 : vector<1x8x8xbf16> to vector<8x8xbf16>
      %44 = vector.shape_cast %41 : vector<8x8xbf16> to vector<1x8x8xbf16>
      tpu.vector_store %arg7[%c0_25, %c0_26, %c16], %44 {strides = array<i32>} : memref<1x8x32xbf16, #tpu.memory_space<vmem>>, vector<1x8x8xbf16>,
      %c3 = arith.constant 3 : index
      %c0_27 = arith.constant 0 : index
      %c0_28 = arith.constant 0 : index
      %45 = vector.load %arg9[%c3, %c0_27, %c0_28] : memref<4x8x1xf32, #tpu.memory_space<vmem>>, vector<1x8x1xf32>
      %46 = vector.shape_cast %45 : vector<1x8x1xf32> to vector<8x1xf32>
      %47 = tpu.reciprocal %46 {approx = true} : vector<8x1xf32> -> vector<8x1xf32>
      %c3_29 = arith.constant 3 : index
      %c0_30 = arith.constant 0 : index
      %c0_31 = arith.constant 0 : index
      %48 = vector.load %arg10[%c3_29, %c0_30, %c0_31] : memref<4x8x8xf32, #tpu.memory_space<vmem>>, vector<1x8x8xf32>
      %49 = vector.shape_cast %48 : vector<1x8x8xf32> to vector<8x8xf32>
      %50 = vector.broadcast %47 : vector<8x1xf32> to vector<8x8xf32>
      %51 = arith.mulf %49, %50 : vector<8x8xf32>
      %52 = arith.truncf %51 : vector<8x8xf32> to vector<8x8xbf16>
      %c0_32 = arith.constant 0 : index
      %c0_33 = arith.constant 0 : index
      %c24 = arith.constant 24 : index
      %53 = vector.load %arg7[%c0_32, %c0_33, %c24] : memref<1x8x32xbf16, #tpu.memory_space<vmem>>, vector<1x8x8xbf16>
      %54 = vector.shape_cast %53 : vector<1x8x8xbf16> to vector<8x8xbf16>
      %55 = vector.shape_cast %52 : vector<8x8xbf16> to vector<1x8x8xbf16>
      tpu.vector_store %arg7[%c0_32, %c0_33, %c24], %55 {strides = array<i32>} : memref<1x8x32xbf16, #tpu.memory_space<vmem>>, vector<1x8x8xbf16>,
    } else {
    }
    return
  }
  func.func @transform_0(%arg0: i32, %arg1: i32, %arg2: i32, %arg3: i32) -> (i32, i32, i32) {
    %c0_i32 = arith.constant 0 : i32
    return %arg0, %arg2, %arg1 : i32, i32, i32
  }
  func.func @transform_1(%arg0: i32, %arg1: i32, %arg2: i32, %arg3: i32) -> (i32, i32, i32) {
    %0 = arith.minsi %arg2, %arg3 : i32
    %c0_i32 = arith.constant 0 : i32
    return %arg0, %0, %arg1 : i32, i32, i32
  }
  func.func @transform_2(%arg0: i32, %arg1: i32, %arg2: i32, %arg3: i32) -> (i32, i32, i32) {
    %0 = arith.minsi %arg2, %arg3 : i32
    %c0_i32 = arith.constant 0 : i32
    return %arg0, %0, %arg1 : i32, i32, i32
  }
  func.func @transform_3(%arg0: i32, %arg1: i32, %arg2: i32, %arg3: i32) -> (i32, i32, i32) {
    %c0_i32 = arith.constant 0 : i32
    return %arg0, %arg2, %arg1 : i32, i32, i32
  }
}

module attributes {stable_mosaic.version = 11 : i64} {
  func.func @kernel(%arg0: i32, %arg1: i32, %arg2: i32, %arg3: memref<16x64xbf16, #tpu.memory_space<vmem>>, %arg4: memref<64x32xbf16, #tpu.memory_space<vmem>>, %arg5: memref<1x32xf32, #tpu.memory_space<vmem>>, %arg6: memref<16x32xbf16, #tpu.memory_space<vmem>>, %arg7: memref<1x32xf32, #tpu.memory_space<vmem>>, %arg8: memref<1x32xf32, #tpu.memory_space<vmem>>, %arg9: memref<16x32xbf16, #tpu.memory_space<vmem>>, %arg10: memref<16x32xf32, #tpu.memory_space<vmem>>) attributes {dimension_semantics = [#tpu.dimension_semantics<parallel>, #tpu.dimension_semantics<parallel>, #tpu.dimension_semantics<arbitrary>], iteration_bounds = array<i64: 1, 1, 1>, scalar_prefetch = 0 : i64, scratch_operands = 1 : i64, tpu.core_type = #tpu.core_type<tc>, window_params = [{transform_indices = @transform_0, window_bounds = array<i64: 16, 64>}, {transform_indices = @transform_1, window_bounds = array<i64: 64, 32>}, {transform_indices = @transform_2, window_bounds = array<i64: 1, 32>}, {transform_indices = @transform_3, window_bounds = array<i64: 16, 32>}, {transform_indices = @transform_4, window_bounds = array<i64: 1, 32>}, {transform_indices = @transform_5, window_bounds = array<i64: 1, 32>}, {transform_indices = @transform_6, window_bounds = array<i64: 16, 32>}]} {
    %c0_i32 = arith.constant 0 : i32
    %0 = arith.cmpi eq, %arg2, %c0_i32 : i32
    %1 = arith.extui %0 : i1 to i32
    %c0_i32_0 = arith.constant 0 : i32
    %2 = arith.cmpi ne, %1, %c0_i32_0 : i32
    scf.if %2 {
      %cst_10 = arith.constant 0.000000e+00 : f32
      %12 = vector.broadcast %cst_10 : f32 to vector<16x32xf32>
      %c0_11 = arith.constant 0 : index
      %c0_12 = arith.constant 0 : index
      %13 = vector.load %arg10[%c0_11, %c0_12] : memref<16x32xf32, #tpu.memory_space<vmem>>, vector<16x32xf32>
      tpu.vector_store %arg10[%c0_11, %c0_12], %12 {strides = array<i32>} : memref<16x32xf32, #tpu.memory_space<vmem>>, vector<16x32xf32>,
    } else {
    }
    %c0 = arith.constant 0 : index
    %c0_1 = arith.constant 0 : index
    %3 = vector.load %arg10[%c0, %c0_1] : memref<16x32xf32, #tpu.memory_space<vmem>>, vector<16x32xf32>
    %c0_2 = arith.constant 0 : index
    %c0_3 = arith.constant 0 : index
    %4 = vector.load %arg3[%c0_2, %c0_3] : memref<16x64xbf16, #tpu.memory_space<vmem>>, vector<16x64xbf16>
    %c0_4 = arith.constant 0 : index
    %c0_5 = arith.constant 0 : index
    %5 = vector.load %arg4[%c0_4, %c0_5] : memref<64x32xbf16, #tpu.memory_space<vmem>>, vector<64x32xbf16>
    %cst = arith.constant dense<0.000000e+00> : vector<16x32xf32>
    %6 = tpu.matmul %4, %5, %cst {dimension_numbers = #tpu.dot_dimension_numbers<[1], [0], [0], [1], [0, 0, 1, 1], [], []>} : vector<16x64xbf16>, vector<64x32xbf16>, vector<16x32xf32> -> vector<16x32xf32>
    %7 = arith.addf %3, %6 : vector<16x32xf32>
    %c0_6 = arith.constant 0 : index
    %c0_7 = arith.constant 0 : index
    %8 = vector.load %arg10[%c0_6, %c0_7] : memref<16x32xf32, #tpu.memory_space<vmem>>, vector<16x32xf32>
    tpu.vector_store %arg10[%c0_6, %c0_7], %7 {strides = array<i32>} : memref<16x32xf32, #tpu.memory_space<vmem>>, vector<16x32xf32>,
    %c0_i32_8 = arith.constant 0 : i32
    %9 = arith.cmpi eq, %arg2, %c0_i32_8 : i32
    %10 = arith.extui %9 : i1 to i32
    %c0_i32_9 = arith.constant 0 : i32
    %11 = arith.cmpi ne, %10, %c0_i32_9 : i32
    scf.if %11 {
      %c0_10 = arith.constant 0 : index
      %c0_11 = arith.constant 0 : index
      %12 = vector.load %arg10[%c0_10, %c0_11] : memref<16x32xf32, #tpu.memory_space<vmem>>, vector<16x32xf32>
      %c0_12 = arith.constant 0 : index
      %c0_13 = arith.constant 0 : index
      %13 = vector.load %arg5[%c0_12, %c0_13] : memref<1x32xf32, #tpu.memory_space<vmem>>, vector<1x32xf32>
      %14 = vector.broadcast %13 : vector<1x32xf32> to vector<16x32xf32>
      %15 = arith.addf %12, %14 : vector<16x32xf32>
      %c0_14 = arith.constant 0 : index
      %c0_15 = arith.constant 0 : index
      %16 = vector.load %arg6[%c0_14, %c0_15] : memref<16x32xbf16, #tpu.memory_space<vmem>>, vector<16x32xbf16>
      %17 = arith.extf %16 : vector<16x32xbf16> to vector<16x32xf32>
      %18 = arith.addf %15, %17 : vector<16x32xf32>
      %cst_16 = arith.constant dense<0.000000e+00> : vector<16xf32>
      %19 = vector.multi_reduction <add>, %18, %cst_16 [1] : vector<16x32xf32> to vector<16xf32>
      %20 = vector.shape_cast %19 : vector<16xf32> to vector<16x1xf32>
      %cst_17 = arith.constant 3.200000e+01 : f32
      %21 = vector.broadcast %cst_17 : f32 to vector<16x1xf32>
      %22 = arith.divf %20, %21 : vector<16x1xf32>
      %23 = vector.broadcast %22 : vector<16x1xf32> to vector<16x32xf32>
      %24 = arith.subf %18, %23 : vector<16x32xf32>
      %25 = arith.mulf %24, %24 : vector<16x32xf32>
      %cst_18 = arith.constant dense<0.000000e+00> : vector<16xf32>
      %26 = vector.multi_reduction <add>, %25, %cst_18 [1] : vector<16x32xf32> to vector<16xf32>
      %27 = vector.shape_cast %26 : vector<16xf32> to vector<16x1xf32>
      %cst_19 = arith.constant 3.200000e+01 : f32
      %28 = vector.broadcast %cst_19 : f32 to vector<16x1xf32>
      %29 = arith.divf %27, %28 : vector<16x1xf32>
      %cst_20 = arith.constant 9.99999974E-6 : f32
      %30 = vector.broadcast %cst_20 : f32 to vector<16x1xf32>
      %31 = arith.addf %29, %30 : vector<16x1xf32>
      %32 = math.rsqrt %31 : vector<16x1xf32>
      %33 = vector.broadcast %32 : vector<16x1xf32> to vector<16x32xf32>
      %34 = arith.mulf %24, %33 : vector<16x32xf32>
      %c0_21 = arith.constant 0 : index
      %c0_22 = arith.constant 0 : index
      %35 = vector.load %arg7[%c0_21, %c0_22] : memref<1x32xf32, #tpu.memory_space<vmem>>, vector<1x32xf32>
      %36 = vector.broadcast %35 : vector<1x32xf32> to vector<16x32xf32>
      %37 = arith.mulf %34, %36 : vector<16x32xf32>
      %c0_23 = arith.constant 0 : index
      %c0_24 = arith.constant 0 : index
      %38 = vector.load %arg8[%c0_23, %c0_24] : memref<1x32xf32, #tpu.memory_space<vmem>>, vector<1x32xf32>
      %39 = vector.broadcast %38 : vector<1x32xf32> to vector<16x32xf32>
      %40 = arith.addf %37, %39 : vector<16x32xf32>
      %41 = arith.truncf %40 : vector<16x32xf32> to vector<16x32xbf16>
      %c0_25 = arith.constant 0 : index
      %c0_26 = arith.constant 0 : index
      %42 = vector.load %arg9[%c0_25, %c0_26] : memref<16x32xbf16, #tpu.memory_space<vmem>>, vector<16x32xbf16>
      tpu.vector_store %arg9[%c0_25, %c0_26], %41 {strides = array<i32>} : memref<16x32xbf16, #tpu.memory_space<vmem>>, vector<16x32xbf16>,
    } else {
    }
    return
  }
  func.func @transform_0(%arg0: i32, %arg1: i32, %arg2: i32) -> (i32, i32) {
    %c0_i32 = arith.constant 0 : i32
    return %arg0, %arg2 : i32, i32
  }
  func.func @transform_1(%arg0: i32, %arg1: i32, %arg2: i32) -> (i32, i32) {
    %c0_i32 = arith.constant 0 : i32
    return %arg2, %arg1 : i32, i32
  }
  func.func @transform_2(%arg0: i32, %arg1: i32, %arg2: i32) -> (i32, i32) {
    %c0_i32 = arith.constant 0 : i32
    %c0_i32_0 = arith.constant 0 : i32
    return %c0_i32, %arg1 : i32, i32
  }
  func.func @transform_3(%arg0: i32, %arg1: i32, %arg2: i32) -> (i32, i32) {
    %c0_i32 = arith.constant 0 : i32
    return %arg0, %arg1 : i32, i32
  }
  func.func @transform_4(%arg0: i32, %arg1: i32, %arg2: i32) -> (i32, i32) {
    %c0_i32 = arith.constant 0 : i32
    %c0_i32_0 = arith.constant 0 : i32
    return %c0_i32, %arg1 : i32, i32
  }
  func.func @transform_5(%arg0: i32, %arg1: i32, %arg2: i32) -> (i32, i32) {
    %c0_i32 = arith.constant 0 : i32
    %c0_i32_0 = arith.constant 0 : i32
    return %c0_i32, %arg1 : i32, i32
  }
  func.func @transform_6(%arg0: i32, %arg1: i32, %arg2: i32) -> (i32, i32) {
    %c0_i32 = arith.constant 0 : i32
    return %arg0, %arg1 : i32, i32
  }
}

module attributes {stable_mosaic.version = 11 : i64} {
  func.func @kernel(%arg0: i32, %arg1: i32, %arg2: i32, %arg3: memref<16x32xbf16, #tpu.memory_space<vmem>>, %arg4: memref<32x241xbf16, #tpu.memory_space<vmem>>, %arg5: memref<1x241xf32, #tpu.memory_space<vmem>>, %arg6: memref<16x241xf32, #tpu.memory_space<vmem>>, %arg7: memref<16x241xf32, #tpu.memory_space<vmem>>) attributes {dimension_semantics = [#tpu.dimension_semantics<parallel>, #tpu.dimension_semantics<parallel>, #tpu.dimension_semantics<arbitrary>], iteration_bounds = array<i64: 1, 1, 1>, scalar_prefetch = 0 : i64, scratch_operands = 1 : i64, tpu.core_type = #tpu.core_type<tc>, window_params = [{transform_indices = @transform_0, window_bounds = array<i64: 16, 32>}, {transform_indices = @transform_1, window_bounds = array<i64: 32, 241>}, {transform_indices = @transform_2, window_bounds = array<i64: 1, 241>}, {transform_indices = @transform_3, window_bounds = array<i64: 16, 241>}]} {
    %c0_i32 = arith.constant 0 : i32
    %0 = arith.cmpi eq, %arg2, %c0_i32 : i32
    %1 = arith.extui %0 : i1 to i32
    %c0_i32_0 = arith.constant 0 : i32
    %2 = arith.cmpi ne, %1, %c0_i32_0 : i32
    scf.if %2 {
      %cst_10 = arith.constant 0.000000e+00 : f32
      %12 = vector.broadcast %cst_10 : f32 to vector<16x241xf32>
      %c0_11 = arith.constant 0 : index
      %c0_12 = arith.constant 0 : index
      %13 = vector.load %arg7[%c0_11, %c0_12] : memref<16x241xf32, #tpu.memory_space<vmem>>, vector<16x241xf32>
      tpu.vector_store %arg7[%c0_11, %c0_12], %12 {strides = array<i32>} : memref<16x241xf32, #tpu.memory_space<vmem>>, vector<16x241xf32>,
    } else {
    }
    %c0 = arith.constant 0 : index
    %c0_1 = arith.constant 0 : index
    %3 = vector.load %arg7[%c0, %c0_1] : memref<16x241xf32, #tpu.memory_space<vmem>>, vector<16x241xf32>
    %c0_2 = arith.constant 0 : index
    %c0_3 = arith.constant 0 : index
    %4 = vector.load %arg3[%c0_2, %c0_3] : memref<16x32xbf16, #tpu.memory_space<vmem>>, vector<16x32xbf16>
    %c0_4 = arith.constant 0 : index
    %c0_5 = arith.constant 0 : index
    %5 = vector.load %arg4[%c0_4, %c0_5] : memref<32x241xbf16, #tpu.memory_space<vmem>>, vector<32x241xbf16>
    %cst = arith.constant dense<0.000000e+00> : vector<16x241xf32>
    %6 = tpu.matmul %4, %5, %cst {dimension_numbers = #tpu.dot_dimension_numbers<[1], [0], [0], [1], [0, 0, 1, 1], [], []>} : vector<16x32xbf16>, vector<32x241xbf16>, vector<16x241xf32> -> vector<16x241xf32>
    %7 = arith.addf %3, %6 : vector<16x241xf32>
    %c0_6 = arith.constant 0 : index
    %c0_7 = arith.constant 0 : index
    %8 = vector.load %arg7[%c0_6, %c0_7] : memref<16x241xf32, #tpu.memory_space<vmem>>, vector<16x241xf32>
    tpu.vector_store %arg7[%c0_6, %c0_7], %7 {strides = array<i32>} : memref<16x241xf32, #tpu.memory_space<vmem>>, vector<16x241xf32>,
    %c0_i32_8 = arith.constant 0 : i32
    %9 = arith.cmpi eq, %arg2, %c0_i32_8 : i32
    %10 = arith.extui %9 : i1 to i32
    %c0_i32_9 = arith.constant 0 : i32
    %11 = arith.cmpi ne, %10, %c0_i32_9 : i32
    scf.if %11 {
      %c0_10 = arith.constant 0 : index
      %c0_11 = arith.constant 0 : index
      %12 = vector.load %arg7[%c0_10, %c0_11] : memref<16x241xf32, #tpu.memory_space<vmem>>, vector<16x241xf32>
      %c0_12 = arith.constant 0 : index
      %c0_13 = arith.constant 0 : index
      %13 = vector.load %arg5[%c0_12, %c0_13] : memref<1x241xf32, #tpu.memory_space<vmem>>, vector<1x241xf32>
      %14 = vector.broadcast %13 : vector<1x241xf32> to vector<16x241xf32>
      %15 = arith.addf %12, %14 : vector<16x241xf32>
      %cst_14 = arith.constant dense<0xFF800000> : vector<16xf32>
      %16 = vector.multi_reduction <maximumf>, %15, %cst_14 [1] : vector<16x241xf32> to vector<16xf32>
      %17 = vector.shape_cast %16 : vector<16xf32> to vector<16x1xf32>
      %18 = vector.broadcast %17 : vector<16x1xf32> to vector<16x241xf32>
      %19 = arith.subf %15, %18 : vector<16x241xf32>
      %20 = math.exp %19 : vector<16x241xf32>
      %cst_15 = arith.constant dense<0.000000e+00> : vector<16xf32>
      %21 = vector.multi_reduction <add>, %20, %cst_15 [1] : vector<16x241xf32> to vector<16xf32>
      %22 = vector.shape_cast %21 : vector<16xf32> to vector<16x1xf32>
      %23 = math.log %22 : vector<16x1xf32>
      %24 = arith.addf %23, %17 : vector<16x1xf32>
      %25 = vector.broadcast %24 : vector<16x1xf32> to vector<16x241xf32>
      %26 = arith.subf %15, %25 : vector<16x241xf32>
      %c0_16 = arith.constant 0 : index
      %c0_17 = arith.constant 0 : index
      %27 = vector.load %arg6[%c0_16, %c0_17] : memref<16x241xf32, #tpu.memory_space<vmem>>, vector<16x241xf32>
      tpu.vector_store %arg6[%c0_16, %c0_17], %26 {strides = array<i32>} : memref<16x241xf32, #tpu.memory_space<vmem>>, vector<16x241xf32>,
    } else {
    }
    return
  }
  func.func @transform_0(%arg0: i32, %arg1: i32, %arg2: i32) -> (i32, i32) {
    %c0_i32 = arith.constant 0 : i32
    return %arg0, %arg2 : i32, i32
  }
  func.func @transform_1(%arg0: i32, %arg1: i32, %arg2: i32) -> (i32, i32) {
    %c0_i32 = arith.constant 0 : i32
    return %arg2, %arg1 : i32, i32
  }
  func.func @transform_2(%arg0: i32, %arg1: i32, %arg2: i32) -> (i32, i32) {
    %c0_i32 = arith.constant 0 : i32
    %c0_i32_0 = arith.constant 0 : i32
    return %c0_i32, %arg1 : i32, i32
  }
  func.func @transform_3(%arg0: i32, %arg1: i32, %arg2: i32) -> (i32, i32) {
    %c0_i32 = arith.constant 0 : i32
    return %arg0, %arg1 : i32, i32
  }
}

</mosaic_0001>

<llo_original>
// kernel: transformer_forward.11
$region0: #{transformer_forward.11}
  #allocation0 [shape = 'u32[]', space=smem, size = 0x4, offset = 0x4, fixed_abs, tag = 'smem constant byte address 0x4 - core index']
  #allocation1 [shape = 'u32[144,128]{1,0:T(1,128)}', space=vmem, size = 0x12000, scoped, tag = 'internal scratch']
  #allocation2 [shape = 'f32[16,32]{1,0:T(8,128)}', space=vmem, size = 0x2000, scoped, tag = 'scratch operand']
  #allocation3 [shape = 'f32[16,32]{1,0:T(8,128)}', space=vmem, size = 0x2000, scoped, tag = 'scratch operand']
  #allocation4 [shape = 'f32[16,32]{1,0:T(8,128)}', space=vmem, size = 0x2000, scoped, tag = 'scratch operand']
  %s0 = inlined_call_operand.vmem [shape: bf16[16,32], index: 0, kind: input, shape index: {}]
  %s1 = inlined_call_operand.vmem [shape: bf16[32,32], index: 1, kind: input, shape index: {}]
  %s2 = inlined_call_operand.vmem [shape: bf16[32,32], index: 2, kind: input, shape index: {}]
  %s3 = inlined_call_operand.vmem [shape: bf16[32,32], index: 3, kind: input, shape index: {}]
  %s4 = inlined_call_operand.vmem [shape: bf16[16,32], index: 4, kind: output, shape index: {0}]
  %s5 = inlined_call_operand.vmem [shape: bf16[16,32], index: 5, kind: output, shape index: {1}]
  %s6 = inlined_call_operand.vmem [shape: bf16[16,32], index: 6, kind: output, shape index: {2}]
  %7 = xla_tuple %s4, %s5, %s6
  %s8 = sld [smem:[#allocation0]]
  $region50: #{transformer_forward.11} parent=0
    _
  %s10 = ssub.s32 1, %s8
  %s11 = scalar_select 0, %s10, %s8
  // Predicated region
  $region2: #{transformer_forward.11} parent=0 // pred_check
    _
  $region3: #{transformer_forward.11} parent=0 // pred_check_branch
    %13 = sbr.rel (0) target = $region5
  $region4: #{transformer_forward.11} parent=0 // pred_region
    _
  $region5: #{transformer_forward.11} parent=0 // pred_fallthru
    _
  // Predicated region
  $region6: #{transformer_forward.11} parent=0 // pred_check
    _
  $region7: #{transformer_forward.11} parent=0 // pred_check_branch
    %15 = sbr.rel (0) target = $region9
  $region8: #{transformer_forward.11} parent=0 // pred_region
    _
  $region9: #{transformer_forward.11} parent=0 // pred_fallthru
    _
  // Predicated region
  $region10: #{transformer_forward.11} parent=0 // pred_check
    _
  $region11: #{transformer_forward.11} parent=0 // pred_check_branch
    %17 = sbr.rel (0) target = $region13
  $region12: #{transformer_forward.11} parent=0 // pred_region
    _
  $region13: #{transformer_forward.11} parent=0 // pred_fallthru
    _
  // Predicated region
  $region14: #{transformer_forward.11} parent=0 // pred_check
    _
  $region15: #{transformer_forward.11} parent=0 // pred_check_branch
    %19 = sbr.rel (0) target = $region17
  $region16: #{transformer_forward.11} parent=0 // pred_region
    _
  $region17: #{transformer_forward.11} parent=0 // pred_fallthru
    _
  %p21 = scmp.eq.s32.totalorder 0, 0
  // Predicated region
  $region18: #{transformer_forward.11} parent=0 // pred_check
    %p22 = pneg %p21
  $region19: #{transformer_forward.11} parent=0 // pred_check_branch
    %24 = sbr.rel (%p22) target = $region21
  $region20: #{transformer_forward.11} parent=0 // pred_region
    %vm25 = vcmask 261120
    %26 = vst.msk [vmem:[#allocation2] sm:$0xff] %vm25, 0.0
    %27 = vst.msk [vmem:[#allocation2 + $0x8] sm:$0xff] %vm25, 0.0
    %28 = vst.msk [vmem:[#allocation3] sm:$0xff] %vm25, 0.0
    %29 = vst.msk [vmem:[#allocation3 + $0x8] sm:$0xff] %vm25, 0.0
    %30 = vst.msk [vmem:[#allocation4] sm:$0xff] %vm25, 0.0
    %31 = vst.msk [vmem:[#allocation4 + $0x8] sm:$0xff] %vm25, 0.0
  $region21: #{transformer_forward.11} parent=0 // pred_fallthru
    _
  %v32 = vld [vmem:[%s0] sm:$0xf]
  %v33 = vld [vmem:[%s0 + $0x4] sm:$0xf]
  %v34 = vld [vmem:[#allocation2] sm:$0xff]
  %v35 = vld [vmem:[#allocation2 + $0x8] sm:$0xff]
  %v36 = vld [vmem:[%s1] sm:$0xf]
  %v37 = vld [vmem:[%s1 + $0x4] sm:$0xf]
  %v38 = vld [vmem:[%s1 + $0x8] sm:$0xf]
  %v39 = vld [vmem:[%s1 + $0xc] sm:$0xf]
  %v42 = vunpack.c.l.b16 %v32
  %v43 = vunpack.c.l.b16 %v33
  %v44 = vpack.c.b16 %v43, %v42
  %v49 = vunpack.c.l.b16 %v36
  %v50 = vunpack.c.l.b16 %v37
  %v51 = vunpack.c.l.b16 %v38
  %v52 = vunpack.c.l.b16 %v39
  %v53 = vpack.c.b16 %v50, %v49
  %v54 = vpack.c.b16 %v52, %v51
  %vm57 = vcmask 261120
  %v59 = vsel %vm57, %v44, 0
  %61 = vmatprep.subr.bf16.mxu0 0
  %62 = vmatpush1.bf16.msra.mxu0 %v53
  %63 = vmatprep.subr.bf16.mxu0 0
  %64 = vmatpush1.bf16.msra.mxu0 %v54
  %65 = vmatprep.subr.bf16.mxu0 0
  %66 = vmatpush1.bf16.msra.mxu0 0
  %67 = vmatprep.subr.bf16.mxu0 0
  %68 = vmatpush1.bf16.msra.mxu0 0
  %69 = vmatprep.subr.bf16.mxu0 0
  %70 = vmatpush1.bf16.msra.mxu0 0
  %71 = vmatprep.subr.bf16.mxu0 0
  %72 = vmatpush1.bf16.msra.mxu0 0
  %73 = vmatprep.subr.bf16.mxu0 0
  %74 = vmatpush1.bf16.msra.mxu0 0
  %75 = vmatprep.subr.bf16.mxu0 0
  %76 = vmatpush1.bf16.msra.mxu0 0
  %77 = vmatprep.subr.bf16.mxu0 0
  %78 = vmatpush1.bf16.msra.mxu0 0
  %79 = vmatprep.subr.bf16.mxu0 0
  %80 = vmatpush1.bf16.msra.mxu0 0
  %81 = vmatprep.subr.bf16.mxu0 0
  %82 = vmatpush1.bf16.msra.mxu0 0
  %83 = vmatprep.subr.bf16.mxu0 0
  %84 = vmatpush1.bf16.msra.mxu0 0
  %85 = vmatprep.subr.bf16.mxu0 0
  %86 = vmatpush1.bf16.msra.mxu0 0
  %87 = vmatprep.subr.bf16.mxu0 0
  %88 = vmatpush1.bf16.msra.mxu0 0
  %89 = vmatprep.subr.bf16.mxu0 0
  %90 = vmatpush1.bf16.msra.mxu0 0
  %91 = vmatprep.subr.bf16.mxu0 0
  %92 = vmatpush1.bf16.msra.mxu0 0
  %93 = vmatprep.mubr.bf16.mxu0 0
  %94 = vmatmul.mubr.bf16.gmra.mrb[0].mxu0 %v59
  %v95 = vpop.f32.mrb[0].mxu0
  %v96 = vadd.f32 0.0, %v95
  %v97 = vpop.f32.mrb[0].mxu0
  %v98 = vpop.f32.mrb[0].mxu0
  %v99 = vadd.f32 0.0, %v98
  %v100 = vpop.f32.mrb[0].mxu0
  %101 = vdwg.mxu0
  %v102 = vadd.f32 %v34, %v96
  %v103 = vadd.f32 %v35, %v99
  %104 = vst.msk [vmem:[#allocation2] sm:$0xff] %vm57, %v102
  %105 = vst.msk [vmem:[#allocation2 + $0x8] sm:$0xff] %vm57, %v103
  %v106 = vld [vmem:[#allocation3] sm:$0xff]
  %v107 = vld [vmem:[#allocation3 + $0x8] sm:$0xff]
  %v108 = vld [vmem:[%s2] sm:$0xf]
  %v109 = vld [vmem:[%s2 + $0x4] sm:$0xf]
  %v110 = vld [vmem:[%s2 + $0x8] sm:$0xf]
  %v111 = vld [vmem:[%s2 + $0xc] sm:$0xf]
  %v116 = vunpack.c.l.b16 %v108
  %v117 = vunpack.c.l.b16 %v109
  %v118 = vunpack.c.l.b16 %v110
  %v119 = vunpack.c.l.b16 %v111
  %v120 = vpack.c.b16 %v117, %v116
  %v121 = vpack.c.b16 %v119, %v118
  %124 = vmatprep.subr.bf16.mxu0 0
  %125 = vmatpush1.bf16.msra.mxu0 %v120
  %126 = vmatprep.subr.bf16.mxu0 0
  %127 = vmatpush1.bf16.msra.mxu0 %v121
  %128 = vmatprep.subr.bf16.mxu0 0
  %129 = vmatpush1.bf16.msra.mxu0 0
  %130 = vmatprep.subr.bf16.mxu0 0
  %131 = vmatpush1.bf16.msra.mxu0 0
  %132 = vmatprep.subr.bf16.mxu0 0
  %133 = vmatpush1.bf16.msra.mxu0 0
  %134 = vmatprep.subr.bf16.mxu0 0
  %135 = vmatpush1.bf16.msra.mxu0 0
  %136 = vmatprep.subr.bf16.mxu0 0
  %137 = vmatpush1.bf16.msra.mxu0 0
  %138 = vmatprep.subr.bf16.mxu0 0
  %139 = vmatpush1.bf16.msra.mxu0 0
  %140 = vmatprep.subr.bf16.mxu0 0
  %141 = vmatpush1.bf16.msra.mxu0 0
  %142 = vmatprep.subr.bf16.mxu0 0
  %143 = vmatpush1.bf16.msra.mxu0 0
  %144 = vmatprep.subr.bf16.mxu0 0
  %145 = vmatpush1.bf16.msra.mxu0 0
  %146 = vmatprep.subr.bf16.mxu0 0
  %147 = vmatpush1.bf16.msra.mxu0 0
  %148 = vmatprep.subr.bf16.mxu0 0
  %149 = vmatpush1.bf16.msra.mxu0 0
  %150 = vmatprep.subr.bf16.mxu0 0
  %151 = vmatpush1.bf16.msra.mxu0 0
  %152 = vmatprep.subr.bf16.mxu0 0
  %153 = vmatpush1.bf16.msra.mxu0 0
  %154 = vmatprep.subr.bf16.mxu0 0
  %155 = vmatpush1.bf16.msra.mxu0 0
  %156 = vmatprep.mubr.bf16.mxu0 0
  %157 = vmatmul.mubr.bf16.gmra.mrb[0].mxu0 %v59
  %v158 = vpop.f32.mrb[0].mxu0
  %v159 = vadd.f32 0.0, %v158
  %v160 = vpop.f32.mrb[0].mxu0
  %v161 = vpop.f32.mrb[0].mxu0
  %v162 = vadd.f32 0.0, %v161
  %v163 = vpop.f32.mrb[0].mxu0
  %164 = vdwg.mxu0
  %v165 = vadd.f32 %v106, %v159
  %v166 = vadd.f32 %v107, %v162
  %167 = vst.msk [vmem:[#allocation3] sm:$0xff] %vm57, %v165
  %168 = vst.msk [vmem:[#allocation3 + $0x8] sm:$0xff] %vm57, %v166
  %v169 = vld [vmem:[#allocation4] sm:$0xff]
  %v170 = vld [vmem:[#allocation4 + $0x8] sm:$0xff]
  %v171 = vld [vmem:[%s3] sm:$0xf]
  %v172 = vld [vmem:[%s3 + $0x4] sm:$0xf]
  %v173 = vld [vmem:[%s3 + $0x8] sm:$0xf]
  %v174 = vld [vmem:[%s3 + $0xc] sm:$0xf]
  %v179 = vunpack.c.l.b16 %v171
  %v180 = vunpack.c.l.b16 %v172
  %v181 = vunpack.c.l.b16 %v173
  %v182 = vunpack.c.l.b16 %v174
  %v183 = vpack.c.b16 %v180, %v179
  %v184 = vpack.c.b16 %v182, %v181
  %187 = vmatprep.subr.bf16.mxu0 0
  %188 = vmatpush1.bf16.msra.mxu0 %v183
  %189 = vmatprep.subr.bf16.mxu0 0
  %190 = vmatpush1.bf16.msra.mxu0 %v184
  %191 = vmatprep.subr.bf16.mxu0 0
  %192 = vmatpush1.bf16.msra.mxu0 0
  %193 = vmatprep.subr.bf16.mxu0 0
  %194 = vmatpush1.bf16.msra.mxu0 0
  %195 = vmatprep.subr.bf16.mxu0 0
  %196 = vmatpush1.bf16.msra.mxu0 0
  %197 = vmatprep.subr.bf16.mxu0 0
  %198 = vmatpush1.bf16.msra.mxu0 0
  %199 = vmatprep.subr.bf16.mxu0 0
  %200 = vmatpush1.bf16.msra.mxu0 0
  %201 = vmatprep.subr.bf16.mxu0 0
  %202 = vmatpush1.bf16.msra.mxu0 0
  %203 = vmatprep.subr.bf16.mxu0 0
  %204 = vmatpush1.bf16.msra.mxu0 0
  %205 = vmatprep.subr.bf16.mxu0 0
  %206 = vmatpush1.bf16.msra.mxu0 0
  %207 = vmatprep.subr.bf16.mxu0 0
  %208 = vmatpush1.bf16.msra.mxu0 0
  %209 = vmatprep.subr.bf16.mxu0 0
  %210 = vmatpush1.bf16.msra.mxu0 0
  %211 = vmatprep.subr.bf16.mxu0 0
  %212 = vmatpush1.bf16.msra.mxu0 0
  %213 = vmatprep.subr.bf16.mxu0 0
  %214 = vmatpush1.bf16.msra.mxu0 0
  %215 = vmatprep.subr.bf16.mxu0 0
  %216 = vmatpush1.bf16.msra.mxu0 0
  %217 = vmatprep.subr.bf16.mxu0 0
  %218 = vmatpush1.bf16.msra.mxu0 0
  %219 = vmatprep.mubr.bf16.mxu0 0
  %220 = vmatmul.mubr.bf16.gmra.mrb[0].mxu0 %v59
  %v221 = vpop.f32.mrb[0].mxu0
  %v222 = vadd.f32 0.0, %v221
  %v223 = vpop.f32.mrb[0].mxu0
  %v224 = vpop.f32.mrb[0].mxu0
  %v225 = vadd.f32 0.0, %v224
  %v226 = vpop.f32.mrb[0].mxu0
  %227 = vdwg.mxu0
  %v228 = vadd.f32 %v169, %v222
  %v229 = vadd.f32 %v170, %v225
  %230 = vst.msk [vmem:[#allocation4] sm:$0xff] %vm57, %v228
  %231 = vst.msk [vmem:[#allocation4 + $0x8] sm:$0xff] %vm57, %v229
  // Predicated region
  $region22: #{transformer_forward.11} parent=0 // pred_check
    %p232 = pneg %p21
  $region23: #{transformer_forward.11} parent=0 // pred_check_branch
    %234 = sbr.rel (%p232) target = $region25
  $region24: #{transformer_forward.11} parent=0 // pred_region
    %v235 = vld [vmem:[#allocation2] sm:$0xff]
    %v236 = vld [vmem:[#allocation2 + $0x8] sm:$0xff]
    %v237 = vpack.c.bf16 %v236, %v235
    %v239 = vunpack.c.l.b16 %v237
    %v240 = vunpack.c.h.b16 %v237
    %v241 = vpack.c.b16 %v239, %v239
    %v242 = vpack.c.b16 %v240, %v240
    %vm245 = vcmask 257024
    %246 = vst.msk [vmem:[%s4] sm:$0xf] %vm245, %v241
    %247 = vst.msk [vmem:[%s4 + $0x4] sm:$0xf] %vm245, %v242
    %v248 = vld [vmem:[#allocation3] sm:$0xff]
    %v249 = vld [vmem:[#allocation3 + $0x8] sm:$0xff]
    %v250 = vpack.c.bf16 %v249, %v248
    %v252 = vunpack.c.l.b16 %v250
    %v253 = vunpack.c.h.b16 %v250
    %v254 = vpack.c.b16 %v252, %v252
    %v255 = vpack.c.b16 %v253, %v253
    %258 = vst.msk [vmem:[%s5] sm:$0xf] %vm245, %v254
    %259 = vst.msk [vmem:[%s5 + $0x4] sm:$0xf] %vm245, %v255
    %v260 = vld [vmem:[#allocation4] sm:$0xff]
    %v261 = vld [vmem:[#allocation4 + $0x8] sm:$0xff]
    %v262 = vpack.c.bf16 %v261, %v260
    %v264 = vunpack.c.l.b16 %v262
    %v265 = vunpack.c.h.b16 %v262
    %v266 = vpack.c.b16 %v264, %v264
    %v267 = vpack.c.b16 %v265, %v265
    %270 = vst.msk [vmem:[%s6] sm:$0xf] %vm245, %v266
    %271 = vst.msk [vmem:[%s6 + $0x4] sm:$0xf] %vm245, %v267
  $region25: #{transformer_forward.11} parent=0 // pred_fallthru
    _
  // Predicated region
  $region26: #{transformer_forward.11} parent=0 // pred_check
    _
  $region27: #{transformer_forward.11} parent=0 // pred_check_branch
    %273 = sbr.rel (0) target = $region29
  $region28: #{transformer_forward.11} parent=0 // pred_region
    _
  $region29: #{transformer_forward.11} parent=0 // pred_fallthru
    _
  // Predicated region
  $region30: #{transformer_forward.11} parent=0 // pred_check
    _
  $region31: #{transformer_forward.11} parent=0 // pred_check_branch
    %275 = sbr.rel (0) target = $region33
  $region32: #{transformer_forward.11} parent=0 // pred_region
    _
  $region33: #{transformer_forward.11} parent=0 // pred_fallthru
    _
  // Predicated region
  $region34: #{transformer_forward.11} parent=0 // pred_check
    _
  $region35: #{transformer_forward.11} parent=0 // pred_check_branch
    %277 = sbr.rel (0) target = $region37
  $region36: #{transformer_forward.11} parent=0 // pred_region
    _
  $region37: #{transformer_forward.11} parent=0 // pred_fallthru
    _
  // Predicated region
  $region38: #{transformer_forward.11} parent=0 // pred_check
    _
  $region39: #{transformer_forward.11} parent=0 // pred_check_branch
    %279 = sbr.rel (0) target = $region41
  $region40: #{transformer_forward.11} parent=0 // pred_region
    _
  $region41: #{transformer_forward.11} parent=0 // pred_fallthru
    _
  // Predicated region
  $region42: #{transformer_forward.11} parent=0 // pred_check
    _
  $region43: #{transformer_forward.11} parent=0 // pred_check_branch
    %281 = sbr.rel (0) target = $region45
  $region44: #{transformer_forward.11} parent=0 // pred_region
    _
  $region45: #{transformer_forward.11} parent=0 // pred_fallthru
    _
  // Predicated region
  $region46: #{transformer_forward.11} parent=0 // pred_check
    _
  $region47: #{transformer_forward.11} parent=0 // pred_check_branch
    %283 = sbr.rel (0) target = $region49
  $region48: #{transformer_forward.11} parent=0 // pred_region
    _
  $region49: #{transformer_forward.11} parent=0 // pred_fallthru
    _

// kernel: transformer_forward.13
$region0: #{transformer_forward.13}
  #allocation0 [shape = 'u32[]', space=smem, size = 0x4, offset = 0x4, fixed_abs, tag = 'smem constant byte address 0x4 - core index']
  #allocation1 [shape = 'u32[144,128]{1,0:T(1,128)}', space=vmem, size = 0x12000, scoped, tag = 'internal scratch']
  #allocation2 [shape = 'f32[16,32]{1,0:T(8,128)}', space=vmem, size = 0x2000, scoped, tag = 'scratch operand']
  %s0 = inlined_call_operand.vmem [shape: bf16[16,32], index: 0, kind: input, shape index: {}]
  %s1 = inlined_call_operand.vmem [shape: bf16[32,32], index: 1, kind: input, shape index: {}]
  %s2 = inlined_call_operand.vmem [shape: f32[1,32], index: 2, kind: input, shape index: {}]
  %s3 = inlined_call_operand.vmem [shape: bf16[16,32], index: 3, kind: input, shape index: {}]
  %s4 = inlined_call_operand.vmem [shape: f32[1,32], index: 4, kind: input, shape index: {}]
  %s5 = inlined_call_operand.vmem [shape: f32[1,32], index: 5, kind: input, shape index: {}]
  %s6 = inlined_call_operand.vmem [shape: bf16[16,32], index: 6, kind: output, shape index: {}]
  %s7 = sld [smem:[#allocation0]]
  $region42: #{transformer_forward.13} parent=0
    _
  %s9 = ssub.s32 1, %s7
  %s10 = scalar_select 0, %s9, %s7
  // Predicated region
  $region2: #{transformer_forward.13} parent=0 // pred_check
    _
  $region3: #{transformer_forward.13} parent=0 // pred_check_branch
    %12 = sbr.rel (0) target = $region5
  $region4: #{transformer_forward.13} parent=0 // pred_region
    _
  $region5: #{transformer_forward.13} parent=0 // pred_fallthru
    _
  // Predicated region
  $region6: #{transformer_forward.13} parent=0 // pred_check
    _
  $region7: #{transformer_forward.13} parent=0 // pred_check_branch
    %14 = sbr.rel (0) target = $region9
  $region8: #{transformer_forward.13} parent=0 // pred_region
    _
  $region9: #{transformer_forward.13} parent=0 // pred_fallthru
    _
  // Predicated region
  $region10: #{transformer_forward.13} parent=0 // pred_check
    _
  $region11: #{transformer_forward.13} parent=0 // pred_check_branch
    %16 = sbr.rel (0) target = $region13
  $region12: #{transformer_forward.13} parent=0 // pred_region
    _
  $region13: #{transformer_forward.13} parent=0 // pred_fallthru
    _
  // Predicated region
  $region14: #{transformer_forward.13} parent=0 // pred_check
    _
  $region15: #{transformer_forward.13} parent=0 // pred_check_branch
    %18 = sbr.rel (0) target = $region17
  $region16: #{transformer_forward.13} parent=0 // pred_region
    _
  $region17: #{transformer_forward.13} parent=0 // pred_fallthru
    _
  // Predicated region
  $region18: #{transformer_forward.13} parent=0 // pred_check
    _
  $region19: #{transformer_forward.13} parent=0 // pred_check_branch
    %20 = sbr.rel (0) target = $region21
  $region20: #{transformer_forward.13} parent=0 // pred_region
    _
  $region21: #{transformer_forward.13} parent=0 // pred_fallthru
    _
  // Predicated region
  $region22: #{transformer_forward.13} parent=0 // pred_check
    _
  $region23: #{transformer_forward.13} parent=0 // pred_check_branch
    %22 = sbr.rel (0) target = $region25
  $region24: #{transformer_forward.13} parent=0 // pred_region
    _
  $region25: #{transformer_forward.13} parent=0 // pred_fallthru
    _
  %p24 = scmp.eq.s32.totalorder 0, 0
  // Predicated region
  $region26: #{transformer_forward.13} parent=0 // pred_check
    %p25 = pneg %p24
  $region27: #{transformer_forward.13} parent=0 // pred_check_branch
    %27 = sbr.rel (%p25) target = $region29
  $region28: #{transformer_forward.13} parent=0 // pred_region
    %vm28 = vcmask 261120
    %29 = vst.msk [vmem:[#allocation2] sm:$0xff] %vm28, 0.0
    %30 = vst.msk [vmem:[#allocation2 + $0x8] sm:$0xff] %vm28, 0.0
  $region29: #{transformer_forward.13} parent=0 // pred_fallthru
    _
  %v31 = vld [vmem:[#allocation2] sm:$0xff]
  %v32 = vld [vmem:[#allocation2 + $0x8] sm:$0xff]
  %v33 = vld [vmem:[%s0] sm:$0xf]
  %v34 = vld [vmem:[%s0 + $0x4] sm:$0xf]
  %v35 = vld [vmem:[%s1] sm:$0xf]
  %v36 = vld [vmem:[%s1 + $0x4] sm:$0xf]
  %v37 = vld [vmem:[%s1 + $0x8] sm:$0xf]
  %v38 = vld [vmem:[%s1 + $0xc] sm:$0xf]
  %v41 = vunpack.c.l.b16 %v33
  %v42 = vunpack.c.l.b16 %v34
  %v43 = vpack.c.b16 %v42, %v41
  %v48 = vunpack.c.l.b16 %v35
  %v49 = vunpack.c.l.b16 %v36
  %v50 = vunpack.c.l.b16 %v37
  %v51 = vunpack.c.l.b16 %v38
  %v52 = vpack.c.b16 %v49, %v48
  %v53 = vpack.c.b16 %v51, %v50
  %vm56 = vcmask 261120
  %v58 = vsel %vm56, %v43, 0
  %60 = vmatprep.subr.bf16.mxu0 0
  %61 = vmatpush1.bf16.msra.mxu0 %v52
  %62 = vmatprep.subr.bf16.mxu0 0
  %63 = vmatpush1.bf16.msra.mxu0 %v53
  %64 = vmatprep.subr.bf16.mxu0 0
  %65 = vmatpush1.bf16.msra.mxu0 0
  %66 = vmatprep.subr.bf16.mxu0 0
  %67 = vmatpush1.bf16.msra.mxu0 0
  %68 = vmatprep.subr.bf16.mxu0 0
  %69 = vmatpush1.bf16.msra.mxu0 0
  %70 = vmatprep.subr.bf16.mxu0 0
  %71 = vmatpush1.bf16.msra.mxu0 0
  %72 = vmatprep.subr.bf16.mxu0 0
  %73 = vmatpush1.bf16.msra.mxu0 0
  %74 = vmatprep.subr.bf16.mxu0 0
  %75 = vmatpush1.bf16.msra.mxu0 0
  %76 = vmatprep.subr.bf16.mxu0 0
  %77 = vmatpush1.bf16.msra.mxu0 0
  %78 = vmatprep.subr.bf16.mxu0 0
  %79 = vmatpush1.bf16.msra.mxu0 0
  %80 = vmatprep.subr.bf16.mxu0 0
  %81 = vmatpush1.bf16.msra.mxu0 0
  %82 = vmatprep.subr.bf16.mxu0 0
  %83 = vmatpush1.bf16.msra.mxu0 0
  %84 = vmatprep.subr.bf16.mxu0 0
  %85 = vmatpush1.bf16.msra.mxu0 0
  %86 = vmatprep.subr.bf16.mxu0 0
  %87 = vmatpush1.bf16.msra.mxu0 0
  %88 = vmatprep.subr.bf16.mxu0 0
  %89 = vmatpush1.bf16.msra.mxu0 0
  %90 = vmatprep.subr.bf16.mxu0 0
  %91 = vmatpush1.bf16.msra.mxu0 0
  %92 = vmatprep.mubr.bf16.mxu0 0
  %93 = vmatmul.mubr.bf16.gmra.mrb[0].mxu0 %v58
  %v94 = vpop.f32.mrb[0].mxu0
  %v95 = vadd.f32 0.0, %v94
  %v96 = vpop.f32.mrb[0].mxu0
  %v97 = vpop.f32.mrb[0].mxu0
  %v98 = vadd.f32 0.0, %v97
  %v99 = vpop.f32.mrb[0].mxu0
  %100 = vdwg.mxu0
  %v101 = vadd.f32 %v31, %v95
  %v102 = vadd.f32 %v32, %v98
  %103 = vst.msk [vmem:[#allocation2] sm:$0xff] %vm56, %v101
  %104 = vst.msk [vmem:[#allocation2 + $0x8] sm:$0xff] %vm56, %v102
  // Predicated region
  $region30: #{transformer_forward.13} parent=0 // pred_check
    %p105 = pneg %p24
  $region31: #{transformer_forward.13} parent=0 // pred_check_branch
    %107 = sbr.rel (%p105) target = $region33
  $region32: #{transformer_forward.13} parent=0 // pred_region
    %v108 = vld [vmem:[#allocation2] sm:$0xff]
    %v109 = vld [vmem:[#allocation2 + $0x8] sm:$0xff]
    %v110 = vld [vmem:[%s2] sm:$0x1]
    %v112 = vlaneseq
    %v113 = vshrl.u32 %v112, 7
    %v114 = vsub.s32 0, %v113
    %v115 = vrot.slane %v110, %v114
    %v117 = vadd.f32 %v108, %v115
    %v118 = vadd.f32 %v109, %v115
    %v119 = vld [vmem:[%s3] sm:$0xf]
    %v120 = vld [vmem:[%s3 + $0x4] sm:$0xf]
    %v121 = vunpack.c.l.bf16 %v119
    %v122 = vunpack.c.l.bf16 %v120
    %v123 = vadd.f32 %v117, %v121
    %v124 = vadd.f32 %v118, %v122
    %v125 = vsel %vm56, %v123, 0.0
    %126 = vadd.xlane.f32.xlu0 %v125
    %v127 = vpop.xlane.xlu0 %126
    %v128 = vsel %vm56, %v124, 0.0
    %129 = vadd.xlane.f32.xlu0 %v128
    %v130 = vpop.xlane.xlu0 %129
    %v131 = vrcp.pop 32.0
    %v132 = vmul.f32 %v127, %v131
    %v133 = vmul.f32 %v130, %v131
    %v134 = vsub.f32 %v123, %v132
    %v135 = vsub.f32 %v124, %v133
    %v136 = vmul.f32 %v134, %v134
    %v137 = vmul.f32 %v135, %v135
    %v138 = vsel %vm56, %v136, 0.0
    %139 = vadd.xlane.f32.xlu0 %v138
    %v140 = vpop.xlane.xlu0 %139
    %v141 = vsel %vm56, %v137, 0.0
    %142 = vadd.xlane.f32.xlu0 %v141
    %v143 = vpop.xlane.xlu0 %142
    %v144 = vmul.f32 %v140, %v131
    %v145 = vmul.f32 %v143, %v131
    %v146 = vadd.f32 %v144, 1e-05
    %v147 = vadd.f32 %v145, 1e-05
    %v148 = vrsqrt.pop %v146
    %v149 = vrsqrt.pop %v147
    %v150 = vmul.f32 %v134, %v148
    %v151 = vmul.f32 %v135, %v149
    %v152 = vld [vmem:[%s4] sm:$0x1]
    %v154 = vlaneseq
    %v155 = vshrl.u32 %v154, 7
    %v156 = vsub.s32 0, %v155
    %v157 = vrot.slane %v152, %v156
    %v159 = vmul.f32 %v150, %v157
    %v160 = vmul.f32 %v151, %v157
    %v161 = vld [vmem:[%s5] sm:$0x1]
    %v163 = vlaneseq
    %v164 = vshrl.u32 %v163, 7
    %v165 = vsub.s32 0, %v164
    %v166 = vrot.slane %v161, %v165
    %v168 = vadd.f32 %v159, %v166
    %v169 = vadd.f32 %v160, %v166
    %v170 = vpack.c.bf16 %v169, %v168
    %v172 = vunpack.c.l.b16 %v170
    %v173 = vunpack.c.h.b16 %v170
    %v174 = vpack.c.b16 %v172, %v172
    %v175 = vpack.c.b16 %v173, %v173
    %vm178 = vcmask 257024
    %179 = vst.msk [vmem:[%s6] sm:$0xf] %vm178, %v174
    %180 = vst.msk [vmem:[%s6 + $0x4] sm:$0xf] %vm178, %v175
  $region33: #{transformer_forward.13} parent=0 // pred_fallthru
    _
  // Predicated region
  $region34: #{transformer_forward.13} parent=0 // pred_check
    _
  $region35: #{transformer_forward.13} parent=0 // pred_check_branch
    %182 = sbr.rel (0) target = $region37
  $region36: #{transformer_forward.13} parent=0 // pred_region
    _
  $region37: #{transformer_forward.13} parent=0 // pred_fallthru
    _
  // Predicated region
  $region38: #{transformer_forward.13} parent=0 // pred_check
    _
  $region39: #{transformer_forward.13} parent=0 // pred_check_branch
    %184 = sbr.rel (0) target = $region41
  $region40: #{transformer_forward.13} parent=0 // pred_region
    _
  $region41: #{transformer_forward.13} parent=0 // pred_fallthru
    _

// kernel: transformer_forward.14
$region0: #{transformer_forward.14}
  #allocation0 [shape = 'u32[]', space=smem, size = 0x4, offset = 0x4, fixed_abs, tag = 'smem constant byte address 0x4 - core index']
  #allocation1 [shape = 'u32[144,128]{1,0:T(1,128)}', space=vmem, size = 0x12000, scoped, tag = 'internal scratch']
  #allocation2 [shape = 'f32[16,64]{1,0:T(8,128)}', space=vmem, size = 0x2000, scoped, tag = 'scratch operand']
  %s0 = inlined_call_operand.vmem [shape: bf16[16,32], index: 0, kind: input, shape index: {}]
  %s1 = inlined_call_operand.vmem [shape: bf16[32,64], index: 1, kind: input, shape index: {}]
  %s2 = inlined_call_operand.vmem [shape: f32[1,64], index: 2, kind: input, shape index: {}]
  %s3 = inlined_call_operand.vmem [shape: bf16[16,64], index: 3, kind: output, shape index: {}]
  %s4 = sld [smem:[#allocation0]]
  $region30: #{transformer_forward.14} parent=0
    _
  %s6 = ssub.s32 1, %s4
  %s7 = scalar_select 0, %s6, %s4
  // Predicated region
  $region2: #{transformer_forward.14} parent=0 // pred_check
    _
  $region3: #{transformer_forward.14} parent=0 // pred_check_branch
    %9 = sbr.rel (0) target = $region5
  $region4: #{transformer_forward.14} parent=0 // pred_region
    _
  $region5: #{transformer_forward.14} parent=0 // pred_fallthru
    _
  // Predicated region
  $region6: #{transformer_forward.14} parent=0 // pred_check
    _
  $region7: #{transformer_forward.14} parent=0 // pred_check_branch
    %11 = sbr.rel (0) target = $region9
  $region8: #{transformer_forward.14} parent=0 // pred_region
    _
  $region9: #{transformer_forward.14} parent=0 // pred_fallthru
    _
  // Predicated region
  $region10: #{transformer_forward.14} parent=0 // pred_check
    _
  $region11: #{transformer_forward.14} parent=0 // pred_check_branch
    %13 = sbr.rel (0) target = $region13
  $region12: #{transformer_forward.14} parent=0 // pred_region
    _
  $region13: #{transformer_forward.14} parent=0 // pred_fallthru
    _
  %p15 = scmp.eq.s32.totalorder 0, 0
  // Predicated region
  $region14: #{transformer_forward.14} parent=0 // pred_check
    %p16 = pneg %p15
  $region15: #{transformer_forward.14} parent=0 // pred_check_branch
    %18 = sbr.rel (%p16) target = $region17
  $region16: #{transformer_forward.14} parent=0 // pred_region
    %vm19 = vcmask 523264
    %20 = vst.msk [vmem:[#allocation2] sm:$0xff] %vm19, 0.0
    %21 = vst.msk [vmem:[#allocation2 + $0x8] sm:$0xff] %vm19, 0.0
  $region17: #{transformer_forward.14} parent=0 // pred_fallthru
    _
  %v22 = vld [vmem:[#allocation2] sm:$0xff]
  %v23 = vld [vmem:[#allocation2 + $0x8] sm:$0xff]
  %v24 = vld [vmem:[%s0] sm:$0xf]
  %v25 = vld [vmem:[%s0 + $0x4] sm:$0xf]
  %v26 = vld [vmem:[%s1] sm:$0xf]
  %v27 = vld [vmem:[%s1 + $0x4] sm:$0xf]
  %v28 = vld [vmem:[%s1 + $0x8] sm:$0xf]
  %v29 = vld [vmem:[%s1 + $0xc] sm:$0xf]
  %v32 = vunpack.c.l.b16 %v24
  %v33 = vunpack.c.l.b16 %v25
  %v34 = vpack.c.b16 %v33, %v32
  %v39 = vunpack.c.l.b16 %v26
  %v40 = vunpack.c.l.b16 %v27
  %v41 = vunpack.c.l.b16 %v28
  %v42 = vunpack.c.l.b16 %v29
  %v43 = vpack.c.b16 %v40, %v39
  %v44 = vpack.c.b16 %v42, %v41
  %vm47 = vcmask 261120
  %v49 = vsel %vm47, %v34, 0
  %51 = vmatprep.subr.bf16.mxu0 0
  %52 = vmatpush1.bf16.msra.mxu0 %v43
  %53 = vmatprep.subr.bf16.mxu0 0
  %54 = vmatpush1.bf16.msra.mxu0 %v44
  %55 = vmatprep.subr.bf16.mxu0 0
  %56 = vmatpush1.bf16.msra.mxu0 0
  %57 = vmatprep.subr.bf16.mxu0 0
  %58 = vmatpush1.bf16.msra.mxu0 0
  %59 = vmatprep.subr.bf16.mxu0 0
  %60 = vmatpush1.bf16.msra.mxu0 0
  %61 = vmatprep.subr.bf16.mxu0 0
  %62 = vmatpush1.bf16.msra.mxu0 0
  %63 = vmatprep.subr.bf16.mxu0 0
  %64 = vmatpush1.bf16.msra.mxu0 0
  %65 = vmatprep.subr.bf16.mxu0 0
  %66 = vmatpush1.bf16.msra.mxu0 0
  %67 = vmatprep.subr.bf16.mxu0 0
  %68 = vmatpush1.bf16.msra.mxu0 0
  %69 = vmatprep.subr.bf16.mxu0 0
  %70 = vmatpush1.bf16.msra.mxu0 0
  %71 = vmatprep.subr.bf16.mxu0 0
  %72 = vmatpush1.bf16.msra.mxu0 0
  %73 = vmatprep.subr.bf16.mxu0 0
  %74 = vmatpush1.bf16.msra.mxu0 0
  %75 = vmatprep.subr.bf16.mxu0 0
  %76 = vmatpush1.bf16.msra.mxu0 0
  %77 = vmatprep.subr.bf16.mxu0 0
  %78 = vmatpush1.bf16.msra.mxu0 0
  %79 = vmatprep.subr.bf16.mxu0 0
  %80 = vmatpush1.bf16.msra.mxu0 0
  %81 = vmatprep.subr.bf16.mxu0 0
  %82 = vmatpush1.bf16.msra.mxu0 0
  %83 = vmatprep.mubr.bf16.mxu0 0
  %84 = vmatmul.mubr.bf16.gmra.mrb[0].mxu0 %v49
  %v85 = vpop.f32.mrb[0].mxu0
  %v86 = vadd.f32 0.0, %v85
  %v87 = vpop.f32.mrb[0].mxu0
  %v88 = vpop.f32.mrb[0].mxu0
  %v89 = vadd.f32 0.0, %v88
  %v90 = vpop.f32.mrb[0].mxu0
  %91 = vdwg.mxu0
  %v92 = vadd.f32 %v22, %v86
  %v93 = vadd.f32 %v23, %v89
  %vm94 = vcmask 523264
  %95 = vst.msk [vmem:[#allocation2] sm:$0xff] %vm94, %v92
  %96 = vst.msk [vmem:[#allocation2 + $0x8] sm:$0xff] %vm94, %v93
  // Predicated region
  $region18: #{transformer_forward.14} parent=0 // pred_check
    %p97 = pneg %p15
  $region19: #{transformer_forward.14} parent=0 // pred_check_branch
    %99 = sbr.rel (%p97) target = $region21
  $region20: #{transformer_forward.14} parent=0 // pred_region
    %v100 = vld [vmem:[#allocation2] sm:$0xff]
    %v101 = vld [vmem:[#allocation2 + $0x8] sm:$0xff]
    %v102 = vld [vmem:[%s2] sm:$0x1]
    %v104 = vlaneseq
    %v105 = vshrl.u32 %v104, 7
    %v106 = vsub.s32 0, %v105
    %v107 = vrot.slane %v102, %v106
    %v109 = vadd.f32 %v100, %v107
    %v110 = vadd.f32 %v101, %v107
    %v111 = vmax.f32 %v109, 0.0
    %v112 = vmax.f32 %v110, 0.0
    %v113 = vpack.c.bf16 %v112, %v111
    %v115 = vunpack.c.l.b16 %v113
    %v116 = vunpack.c.h.b16 %v113
    %v117 = vpack.c.b16 %v115, %v115
    %v118 = vpack.c.b16 %v116, %v116
    %vm121 = vcmask 519168
    %122 = vst.msk [vmem:[%s3] sm:$0xf] %vm121, %v117
    %123 = vst.msk [vmem:[%s3 + $0x4] sm:$0xf] %vm121, %v118
  $region21: #{transformer_forward.14} parent=0 // pred_fallthru
    _
  // Predicated region
  $region22: #{transformer_forward.14} parent=0 // pred_check
    _
  $region23: #{transformer_forward.14} parent=0 // pred_check_branch
    %125 = sbr.rel (0) target = $region25
  $region24: #{transformer_forward.14} parent=0 // pred_region
    _
  $region25: #{transformer_forward.14} parent=0 // pred_fallthru
    _
  // Predicated region
  $region26: #{transformer_forward.14} parent=0 // pred_check
    _
  $region27: #{transformer_forward.14} parent=0 // pred_check_branch
    %127 = sbr.rel (0) target = $region29
  $region28: #{transformer_forward.14} parent=0 // pred_region
    _
  $region29: #{transformer_forward.14} parent=0 // pred_fallthru
    _

// kernel: transformer_forward.21
$region0: #{transformer_forward.21}
  #allocation0 [shape = 'u32[]', space=smem, size = 0x4, offset = 0x4, fixed_abs, tag = 'smem constant byte address 0x4 - core index']
  #allocation1 [shape = 'u32[144,128]{1,0:T(1,128)}', space=vmem, size = 0x12000, scoped, tag = 'internal scratch']
  #allocation2 [shape = 'f32[16,241]{1,0:T(8,128)}', space=vmem, size = 0x4000, scoped, tag = 'scratch operand']
  %s0 = inlined_call_operand.vmem [shape: bf16[16,32], index: 0, kind: input, shape index: {}]
  %s1 = inlined_call_operand.vmem [shape: bf16[32,241], index: 1, kind: input, shape index: {}]
  %s2 = inlined_call_operand.vmem [shape: f32[1,241], index: 2, kind: input, shape index: {}]
  %s3 = inlined_call_operand.hbm [shape: f32[16,241], index: 3, kind: output, shape index: {}]
  %s4 = sld [smem:[#allocation0]]
  $region30: #{transformer_forward.21} parent=0
    _
  %s6 = ssub.s32 1, %s4
  %s7 = scalar_select 0, %s6, %s4
  $region1: #{transformer_forward.21} parent=0
    #allocation3 [shape = 'u8[16384]{0}', space=vmem, size = 0x4000, scoped, tag = 'output window, operand 0, single buffered']
    #allocation4 [shape = 's32[1]{0}', space=sflag, size = 0x4, scoped, tag = 'scoped memory for transformer_forward.21']
    %8 = vsyncpa [#allocation4], 0
    // Predicated region
    $region2: #{transformer_forward.21} parent=1 // pred_check
      _
    $region3: #{transformer_forward.21} parent=1 // pred_check_branch
      %10 = sbr.rel (0) target = $region5
    $region4: #{transformer_forward.21} parent=1 // pred_region
      _
    $region5: #{transformer_forward.21} parent=1 // pred_fallthru
      _
    // Predicated region
    $region6: #{transformer_forward.21} parent=1 // pred_check
      _
    $region7: #{transformer_forward.21} parent=1 // pred_check_branch
      %12 = sbr.rel (0) target = $region9
    $region8: #{transformer_forward.21} parent=1 // pred_region
      _
    $region9: #{transformer_forward.21} parent=1 // pred_fallthru
      _
    // Predicated region
    $region10: #{transformer_forward.21} parent=1 // pred_check
      _
    $region11: #{transformer_forward.21} parent=1 // pred_check_branch
      %14 = sbr.rel (0) target = $region13
    $region12: #{transformer_forward.21} parent=1 // pred_region
      _
    $region13: #{transformer_forward.21} parent=1 // pred_fallthru
      _
    %p16 = scmp.eq.s32.totalorder 0, 0
    // Predicated region
    $region14: #{transformer_forward.21} parent=1 // pred_check
      %p17 = pneg %p16
    $region15: #{transformer_forward.21} parent=1 // pred_check_branch
      %19 = sbr.rel (%p17) target = $region17
    $region16: #{transformer_forward.21} parent=1 // pred_region
      %20 = vst [vmem:[#allocation2] sm:$0xff] 0.0
      %vm21 = vcmask 924672
      %22 = vst.msk [vmem:[#allocation2 + $0x8] sm:$0xff] %vm21, 0.0
      %23 = vst [vmem:[#allocation2 + $0x10] sm:$0xff] 0.0
      %24 = vst.msk [vmem:[#allocation2 + $0x18] sm:$0xff] %vm21, 0.0
    $region17: #{transformer_forward.21} parent=1 // pred_fallthru
      _
    %v25 = vld [vmem:[#allocation2] sm:$0xff]
    %v26 = vld [vmem:[#allocation2 + $0x8] sm:$0xff]
    %v27 = vld [vmem:[#allocation2 + $0x10] sm:$0xff]
    %v28 = vld [vmem:[#allocation2 + $0x18] sm:$0xff]
    %v29 = vld [vmem:[%s0] sm:$0xf]
    %v30 = vld [vmem:[%s0 + $0x4] sm:$0xf]
    %v31 = vld [vmem:[%s1] sm:$0xff]
    %v32 = vld [vmem:[%s1 + $0x8] sm:$0xff]
    %v33 = vld [vmem:[%s1 + $0x10] sm:$0xff]
    %v34 = vld [vmem:[%s1 + $0x18] sm:$0xff]
    %v37 = vunpack.c.l.b16 %v29
    %v38 = vunpack.c.l.b16 %v30
    %v39 = vpack.c.b16 %v38, %v37
    %v44 = vunpack.c.l.b16 %v31
    %v45 = vunpack.c.h.b16 %v31
    %v46 = vunpack.c.l.b16 %v32
    %v47 = vunpack.c.h.b16 %v32
    %v48 = vunpack.c.l.b16 %v33
    %v49 = vunpack.c.h.b16 %v33
    %v50 = vunpack.c.l.b16 %v34
    %v51 = vunpack.c.h.b16 %v34
    %v52 = vpack.c.b16 %v46, %v44
    %v53 = vpack.c.b16 %v47, %v45
    %v54 = vpack.c.b16 %v50, %v48
    %v55 = vpack.c.b16 %v51, %v49
    %vm60 = vcmask 261120
    %v62 = vsel %vm60, %v39, 0
    %64 = vmatprep.subr.bf16.mxu0 %v53
    %65 = vmatpush1.bf16.msra.mxu0 %v52
    %66 = vmatprep.subr.bf16.mxu0 %v55
    %67 = vmatpush1.bf16.msra.mxu0 %v54
    %68 = vmatprep.subr.bf16.mxu0 0
    %69 = vmatpush1.bf16.msra.mxu0 0
    %70 = vmatprep.subr.bf16.mxu0 0
    %71 = vmatpush1.bf16.msra.mxu0 0
    %72 = vmatprep.subr.bf16.mxu0 0
    %73 = vmatpush1.bf16.msra.mxu0 0
    %74 = vmatprep.subr.bf16.mxu0 0
    %75 = vmatpush1.bf16.msra.mxu0 0
    %76 = vmatprep.subr.bf16.mxu0 0
    %77 = vmatpush1.bf16.msra.mxu0 0
    %78 = vmatprep.subr.bf16.mxu0 0
    %79 = vmatpush1.bf16.msra.mxu0 0
    %80 = vmatprep.subr.bf16.mxu0 0
    %81 = vmatpush1.bf16.msra.mxu0 0
    %82 = vmatprep.subr.bf16.mxu0 0
    %83 = vmatpush1.bf16.msra.mxu0 0
    %84 = vmatprep.subr.bf16.mxu0 0
    %85 = vmatpush1.bf16.msra.mxu0 0
    %86 = vmatprep.subr.bf16.mxu0 0
    %87 = vmatpush1.bf16.msra.mxu0 0
    %88 = vmatprep.subr.bf16.mxu0 0
    %89 = vmatpush1.bf16.msra.mxu0 0
    %90 = vmatprep.subr.bf16.mxu0 0
    %91 = vmatpush1.bf16.msra.mxu0 0
    %92 = vmatprep.subr.bf16.mxu0 0
    %93 = vmatpush1.bf16.msra.mxu0 0
    %94 = vmatprep.subr.bf16.mxu0 0
    %95 = vmatpush1.bf16.msra.mxu0 0
    %96 = vmatprep.mubr.bf16.mxu0 0
    %97 = vmatmul.mubr.bf16.gmra.mrb[0].mxu0 %v62
    %v98 = vpop.f32.mrb[0].mxu0
    %v99 = vadd.f32 0.0, %v98
    %v100 = vpop.f32.mrb[0].mxu0
    %v101 = vadd.f32 0.0, %v100
    %v102 = vpop.f32.mrb[0].mxu0
    %v103 = vadd.f32 0.0, %v102
    %v104 = vpop.f32.mrb[0].mxu0
    %v105 = vadd.f32 0.0, %v104
    %106 = vdwg.mxu0
    %v107 = vadd.f32 %v25, %v99
    %v108 = vadd.f32 %v26, %v101
    %v109 = vadd.f32 %v27, %v103
    %v110 = vadd.f32 %v28, %v105
    %111 = vst [vmem:[#allocation2] sm:$0xff] %v107
    %vm112 = vcmask 924672
    %113 = vst.msk [vmem:[#allocation2 + $0x8] sm:$0xff] %vm112, %v108
    %114 = vst [vmem:[#allocation2 + $0x10] sm:$0xff] %v109
    %115 = vst.msk [vmem:[#allocation2 + $0x18] sm:$0xff] %vm112, %v110
    // Predicated region
    $region18: #{transformer_forward.21} parent=1 // pred_check
      %p116 = pneg %p16
    $region19: #{transformer_forward.21} parent=1 // pred_check_branch
      %118 = sbr.rel (%p116) target = $region21
    $region20: #{transformer_forward.21} parent=1 // pred_region
      %v119 = vld [vmem:[#allocation2] sm:$0xff]
      %v120 = vld [vmem:[#allocation2 + $0x8] sm:$0xff]
      %v121 = vld [vmem:[#allocation2 + $0x10] sm:$0xff]
      %v122 = vld [vmem:[#allocation2 + $0x18] sm:$0xff]
      %v123 = vld [vmem:[%s2] sm:$0x3]
      %v125 = vlaneseq
      %v126 = vshrl.u32 %v125, 7
      %v127 = vsub.s32 0, %v126
      %v128 = vrot.slane %v123, %v127
      %v129 = vlaneseq
      %v130 = vshrl.u32 %v129, 7
      %v131 = vsub.s32 1, %v130
      %v132 = vrot.slane %v123, %v131
      %v135 = vadd.f32 %v119, %v128
      %v136 = vadd.f32 %v120, %v132
      %v137 = vadd.f32 %v121, %v128
      %v138 = vadd.f32 %v122, %v132
      %v139 = vsel %vm112, %v136, -inf
      %v140 = vmax.f32 %v135, %v139
      %141 = vmax.xlane.f32.xlu0 %v140
      %v142 = vpop.xlane.xlu0 %141
      %v143 = vsel %vm112, %v138, -inf
      %v144 = vmax.f32 %v137, %v143
      %145 = vmax.xlane.f32.xlu0 %v144
      %v146 = vpop.xlane.xlu0 %145
      %v147 = vsub.f32 %v135, %v142
      %v148 = vsub.f32 %v136, %v142
      %v149 = vsub.f32 %v137, %v146
      %v150 = vsub.f32 %v138, %v146
      %v151 = vmul.f32 %v147, 1.442695
      %v152 = vpow.pop %v151
      %v153 = vmul.f32 %v148, 1.442695
      %v154 = vpow.pop %v153
      %v155 = vmul.f32 %v149, 1.442695
      %v156 = vpow.pop %v155
      %v157 = vmul.f32 %v150, 1.442695
      %v158 = vpow.pop %v157
      %v159 = vsel %vm112, %v154, 0.0
      %v160 = vadd.f32 %v152, %v159
      %161 = vadd.xlane.f32.xlu0 %v160
      %v162 = vpop.xlane.xlu0 %161
      %v163 = vsel %vm112, %v158, 0.0
      %v164 = vadd.f32 %v156, %v163
      %165 = vadd.xlane.f32.xlu0 %v164
      %v166 = vpop.xlane.xlu0 %165
      %v167 = vlog2.pop %v162
      %v168 = vmul.f32 %v167, 0.6931472
      %v169 = vlog2.pop %v166
      %v170 = vmul.f32 %v169, 0.6931472
      %v171 = vadd.f32 %v168, %v142
      %v172 = vadd.f32 %v170, %v146
      %v173 = vsub.f32 %v135, %v171
      %v174 = vsub.f32 %v136, %v171
      %v175 = vsub.f32 %v137, %v172
      %v176 = vsub.f32 %v138, %v172
      %177 = vst [vmem:[#allocation3] sm:$0xff] %v173
      %178 = vst.msk [vmem:[#allocation3 + $0x8] sm:$0xff] %vm112, %v174
      %179 = vst [vmem:[#allocation3 + $0x10] sm:$0xff] %v175
      %180 = vst.msk [vmem:[#allocation3 + $0x18] sm:$0xff] %vm112, %v176
    $region21: #{transformer_forward.21} parent=1 // pred_fallthru
      _
    // Predicated region
    $region22: #{transformer_forward.21} parent=1 // pred_check
      _
    $region23: #{transformer_forward.21} parent=1 // pred_check_branch
      %182 = sbr.rel (0) target = $region25
    $region24: #{transformer_forward.21} parent=1 // pred_region
      %s184 = ssub.s32 512, 512
      %185 = vsyncadd [#allocation4], %s184
      %s186 = sshll.u32 [#allocation3], 4
      %s187 = int_to_ptr.vmem [resolvable:$true] %s186
      %192 = dma.vmem_to_hbm [thread:$0]  %s187, 512, %s3, [#allocation4], 256, 256, 16
    $region25: #{transformer_forward.21} parent=1 // pred_fallthru
      _
    // Predicated region
    $region26: #{transformer_forward.21} parent=1 // pred_check
      _
    $region27: #{transformer_forward.21} parent=1 // pred_check_branch
      %194 = sbr.rel (0) target = $region29
    $region28: #{transformer_forward.21} parent=1 // pred_region
      %195 = dma.done [#allocation4], 512
    $region29: #{transformer_forward.21} parent=1 // pred_fallthru
      _
    %196 = vsyncpa [#allocation4], 1

// kernel: transformer_forward.15
$region0: #{transformer_forward.15}
  #allocation0 [shape = 'u32[]', space=smem, size = 0x4, offset = 0x4, fixed_abs, tag = 'smem constant byte address 0x4 - core index']
  #allocation1 [shape = 'u32[144,128]{1,0:T(1,128)}', space=vmem, size = 0x12000, scoped, tag = 'internal scratch']
  #allocation2 [shape = 'f32[16,32]{1,0:T(8,128)}', space=vmem, size = 0x2000, scoped, tag = 'scratch operand']
  %s0 = inlined_call_operand.vmem [shape: bf16[16,64], index: 0, kind: input, shape index: {}]
  %s1 = inlined_call_operand.vmem [shape: bf16[64,32], index: 1, kind: input, shape index: {}]
  %s2 = inlined_call_operand.vmem [shape: f32[1,32], index: 2, kind: input, shape index: {}]
  %s3 = inlined_call_operand.vmem [shape: bf16[16,32], index: 3, kind: input, shape index: {}]
  %s4 = inlined_call_operand.vmem [shape: f32[1,32], index: 4, kind: input, shape index: {}]
  %s5 = inlined_call_operand.vmem [shape: f32[1,32], index: 5, kind: input, shape index: {}]
  %s6 = inlined_call_operand.vmem [shape: bf16[16,32], index: 6, kind: output, shape index: {}]
  %s7 = sld [smem:[#allocation0]]
  $region42: #{transformer_forward.15} parent=0
    _
  %s9 = ssub.s32 1, %s7
  %s10 = scalar_select 0, %s9, %s7
  // Predicated region
  $region2: #{transformer_forward.15} parent=0 // pred_check
    _
  $region3: #{transformer_forward.15} parent=0 // pred_check_branch
    %12 = sbr.rel (0) target = $region5
  $region4: #{transformer_forward.15} parent=0 // pred_region
    _
  $region5: #{transformer_forward.15} parent=0 // pred_fallthru
    _
  // Predicated region
  $region6: #{transformer_forward.15} parent=0 // pred_check
    _
  $region7: #{transformer_forward.15} parent=0 // pred_check_branch
    %14 = sbr.rel (0) target = $region9
  $region8: #{transformer_forward.15} parent=0 // pred_region
    _
  $region9: #{transformer_forward.15} parent=0 // pred_fallthru
    _
  // Predicated region
  $region10: #{transformer_forward.15} parent=0 // pred_check
    _
  $region11: #{transformer_forward.15} parent=0 // pred_check_branch
    %16 = sbr.rel (0) target = $region13
  $region12: #{transformer_forward.15} parent=0 // pred_region
    _
  $region13: #{transformer_forward.15} parent=0 // pred_fallthru
    _
  // Predicated region
  $region14: #{transformer_forward.15} parent=0 // pred_check
    _
  $region15: #{transformer_forward.15} parent=0 // pred_check_branch
    %18 = sbr.rel (0) target = $region17
  $region16: #{transformer_forward.15} parent=0 // pred_region
    _
  $region17: #{transformer_forward.15} parent=0 // pred_fallthru
    _
  // Predicated region
  $region18: #{transformer_forward.15} parent=0 // pred_check
    _
  $region19: #{transformer_forward.15} parent=0 // pred_check_branch
    %20 = sbr.rel (0) target = $region21
  $region20: #{transformer_forward.15} parent=0 // pred_region
    _
  $region21: #{transformer_forward.15} parent=0 // pred_fallthru
    _
  // Predicated region
  $region22: #{transformer_forward.15} parent=0 // pred_check
    _
  $region23: #{transformer_forward.15} parent=0 // pred_check_branch
    %22 = sbr.rel (0) target = $region25
  $region24: #{transformer_forward.15} parent=0 // pred_region
    _
  $region25: #{transformer_forward.15} parent=0 // pred_fallthru
    _
  %p24 = scmp.eq.s32.totalorder 0, 0
  // Predicated region
  $region26: #{transformer_forward.15} parent=0 // pred_check
    %p25 = pneg %p24
  $region27: #{transformer_forward.15} parent=0 // pred_check_branch
    %27 = sbr.rel (%p25) target = $region29
  $region28: #{transformer_forward.15} parent=0 // pred_region
    %vm28 = vcmask 261120
    %29 = vst.msk [vmem:[#allocation2] sm:$0xff] %vm28, 0.0
    %30 = vst.msk [vmem:[#allocation2 + $0x8] sm:$0xff] %vm28, 0.0
  $region29: #{transformer_forward.15} parent=0 // pred_fallthru
    _
  %v31 = vld [vmem:[#allocation2] sm:$0xff]
  %v32 = vld [vmem:[#allocation2 + $0x8] sm:$0xff]
  %v33 = vld [vmem:[%s0] sm:$0xf]
  %v34 = vld [vmem:[%s0 + $0x4] sm:$0xf]
  %v35 = vld [vmem:[%s1] sm:$0xf]
  %v36 = vld [vmem:[%s1 + $0x4] sm:$0xf]
  %v37 = vld [vmem:[%s1 + $0x8] sm:$0xf]
  %v38 = vld [vmem:[%s1 + $0xc] sm:$0xf]
  %v39 = vld [vmem:[%s1 + $0x10] sm:$0xf]
  %v40 = vld [vmem:[%s1 + $0x14] sm:$0xf]
  %v41 = vld [vmem:[%s1 + $0x18] sm:$0xf]
  %v42 = vld [vmem:[%s1 + $0x1c] sm:$0xf]
  %v45 = vunpack.c.l.b16 %v33
  %v46 = vunpack.c.l.b16 %v34
  %v47 = vpack.c.b16 %v46, %v45
  %v56 = vunpack.c.l.b16 %v35
  %v57 = vunpack.c.l.b16 %v36
  %v58 = vunpack.c.l.b16 %v37
  %v59 = vunpack.c.l.b16 %v38
  %v60 = vunpack.c.l.b16 %v39
  %v61 = vunpack.c.l.b16 %v40
  %v62 = vunpack.c.l.b16 %v41
  %v63 = vunpack.c.l.b16 %v42
  %v64 = vpack.c.b16 %v57, %v56
  %v65 = vpack.c.b16 %v59, %v58
  %v66 = vpack.c.b16 %v61, %v60
  %v67 = vpack.c.b16 %v63, %v62
  %vm72 = vcmask 523264
  %v74 = vsel %vm72, %v47, 0
  %76 = vmatprep.subr.bf16.mxu0 0
  %77 = vmatpush1.bf16.msra.mxu0 %v64
  %78 = vmatprep.subr.bf16.mxu0 0
  %79 = vmatpush1.bf16.msra.mxu0 %v65
  %80 = vmatprep.subr.bf16.mxu0 0
  %81 = vmatpush1.bf16.msra.mxu0 %v66
  %82 = vmatprep.subr.bf16.mxu0 0
  %83 = vmatpush1.bf16.msra.mxu0 %v67
  %84 = vmatprep.subr.bf16.mxu0 0
  %85 = vmatpush1.bf16.msra.mxu0 0
  %86 = vmatprep.subr.bf16.mxu0 0
  %87 = vmatpush1.bf16.msra.mxu0 0
  %88 = vmatprep.subr.bf16.mxu0 0
  %89 = vmatpush1.bf16.msra.mxu0 0
  %90 = vmatprep.subr.bf16.mxu0 0
  %91 = vmatpush1.bf16.msra.mxu0 0
  %92 = vmatprep.subr.bf16.mxu0 0
  %93 = vmatpush1.bf16.msra.mxu0 0
  %94 = vmatprep.subr.bf16.mxu0 0
  %95 = vmatpush1.bf16.msra.mxu0 0
  %96 = vmatprep.subr.bf16.mxu0 0
  %97 = vmatpush1.bf16.msra.mxu0 0
  %98 = vmatprep.subr.bf16.mxu0 0
  %99 = vmatpush1.bf16.msra.mxu0 0
  %100 = vmatprep.subr.bf16.mxu0 0
  %101 = vmatpush1.bf16.msra.mxu0 0
  %102 = vmatprep.subr.bf16.mxu0 0
  %103 = vmatpush1.bf16.msra.mxu0 0
  %104 = vmatprep.subr.bf16.mxu0 0
  %105 = vmatpush1.bf16.msra.mxu0 0
  %106 = vmatprep.subr.bf16.mxu0 0
  %107 = vmatpush1.bf16.msra.mxu0 0
  %108 = vmatprep.mubr.bf16.mxu0 0
  %109 = vmatmul.mubr.bf16.gmra.mrb[0].mxu0 %v74
  %v110 = vpop.f32.mrb[0].mxu0
  %v111 = vadd.f32 0.0, %v110
  %v112 = vpop.f32.mrb[0].mxu0
  %v113 = vpop.f32.mrb[0].mxu0
  %v114 = vadd.f32 0.0, %v113
  %v115 = vpop.f32.mrb[0].mxu0
  %116 = vdwg.mxu0
  %v117 = vadd.f32 %v31, %v111
  %v118 = vadd.f32 %v32, %v114
  %vm119 = vcmask 261120
  %120 = vst.msk [vmem:[#allocation2] sm:$0xff] %vm119, %v117
  %121 = vst.msk [vmem:[#allocation2 + $0x8] sm:$0xff] %vm119, %v118
  // Predicated region
  $region30: #{transformer_forward.15} parent=0 // pred_check
    %p122 = pneg %p24
  $region31: #{transformer_forward.15} parent=0 // pred_check_branch
    %124 = sbr.rel (%p122) target = $region33
  $region32: #{transformer_forward.15} parent=0 // pred_region
    %v125 = vld [vmem:[#allocation2] sm:$0xff]
    %v126 = vld [vmem:[#allocation2 + $0x8] sm:$0xff]
    %v127 = vld [vmem:[%s2] sm:$0x1]
    %v129 = vlaneseq
    %v130 = vshrl.u32 %v129, 7
    %v131 = vsub.s32 0, %v130
    %v132 = vrot.slane %v127, %v131
    %v134 = vadd.f32 %v125, %v132
    %v135 = vadd.f32 %v126, %v132
    %v136 = vld [vmem:[%s3] sm:$0xf]
    %v137 = vld [vmem:[%s3 + $0x4] sm:$0xf]
    %v138 = vunpack.c.l.bf16 %v136
    %v139 = vunpack.c.l.bf16 %v137
    %v140 = vadd.f32 %v134, %v138
    %v141 = vadd.f32 %v135, %v139
    %v142 = vsel %vm119, %v140, 0.0
    %143 = vadd.xlane.f32.xlu0 %v142
    %v144 = vpop.xlane.xlu0 %143
    %v145 = vsel %vm119, %v141, 0.0
    %146 = vadd.xlane.f32.xlu0 %v145
    %v147 = vpop.xlane.xlu0 %146
    %v148 = vrcp.pop 32.0
    %v149 = vmul.f32 %v144, %v148
    %v150 = vmul.f32 %v147, %v148
    %v151 = vsub.f32 %v140, %v149
    %v152 = vsub.f32 %v141, %v150
    %v153 = vmul.f32 %v151, %v151
    %v154 = vmul.f32 %v152, %v152
    %v155 = vsel %vm119, %v153, 0.0
    %156 = vadd.xlane.f32.xlu0 %v155
    %v157 = vpop.xlane.xlu0 %156
    %v158 = vsel %vm119, %v154, 0.0
    %159 = vadd.xlane.f32.xlu0 %v158
    %v160 = vpop.xlane.xlu0 %159
    %v161 = vmul.f32 %v157, %v148
    %v162 = vmul.f32 %v160, %v148
    %v163 = vadd.f32 %v161, 1e-05
    %v164 = vadd.f32 %v162, 1e-05
    %v165 = vrsqrt.pop %v163
    %v166 = vrsqrt.pop %v164
    %v167 = vmul.f32 %v151, %v165
    %v168 = vmul.f32 %v152, %v166
    %v169 = vld [vmem:[%s4] sm:$0x1]
    %v171 = vlaneseq
    %v172 = vshrl.u32 %v171, 7
    %v173 = vsub.s32 0, %v172
    %v174 = vrot.slane %v169, %v173
    %v176 = vmul.f32 %v167, %v174
    %v177 = vmul.f32 %v168, %v174
    %v178 = vld [vmem:[%s5] sm:$0x1]
    %v180 = vlaneseq
    %v181 = vshrl.u32 %v180, 7
    %v182 = vsub.s32 0, %v181
    %v183 = vrot.slane %v178, %v182
    %v185 = vadd.f32 %v176, %v183
    %v186 = vadd.f32 %v177, %v183
    %v187 = vpack.c.bf16 %v186, %v185
    %v189 = vunpack.c.l.b16 %v187
    %v190 = vunpack.c.h.b16 %v187
    %v191 = vpack.c.b16 %v189, %v189
    %v192 = vpack.c.b16 %v190, %v190
    %vm195 = vcmask 257024
    %196 = vst.msk [vmem:[%s6] sm:$0xf] %vm195, %v191
    %197 = vst.msk [vmem:[%s6 + $0x4] sm:$0xf] %vm195, %v192
  $region33: #{transformer_forward.15} parent=0 // pred_fallthru
    _
  // Predicated region
  $region34: #{transformer_forward.15} parent=0 // pred_check
    _
  $region35: #{transformer_forward.15} parent=0 // pred_check_branch
    %199 = sbr.rel (0) target = $region37
  $region36: #{transformer_forward.15} parent=0 // pred_region
    _
  $region37: #{transformer_forward.15} parent=0 // pred_fallthru
    _
  // Predicated region
  $region38: #{transformer_forward.15} parent=0 // pred_check
    _
  $region39: #{transformer_forward.15} parent=0 // pred_check_branch
    %201 = sbr.rel (0) target = $region41
  $region40: #{transformer_forward.15} parent=0 // pred_region
    _
  $region41: #{transformer_forward.15} parent=0 // pred_fallthru
    _

// kernel: transformer_forward.12
$region0: #{transformer_forward.12}
  #allocation0 [shape = 'u32[]', space=smem, size = 0x4, offset = 0x4, fixed_abs, tag = 'smem constant byte address 0x4 - core index']
  #allocation1 [shape = 'u32[144,128]{1,0:T(1,128)}', space=vmem, size = 0x12000, scoped, tag = 'internal scratch']
  #allocation2 [shape = 'f32[4,8,1]{2,1,0:T(8,128)}', space=vmem, size = 0x4000, scoped, tag = 'scratch operand']
  #allocation3 [shape = 'f32[4,8,1]{2,1,0:T(8,128)}', space=vmem, size = 0x4000, scoped, tag = 'scratch operand']
  #allocation4 [shape = 'f32[4,8,8]{2,1,0:T(8,128)}', space=vmem, size = 0x4000, scoped, tag = 'scratch operand']
  %s0 = inlined_call_operand.vmem [shape: bf16[2,8,32], index: 0, kind: input, shape index: {}]
  %s1 = inlined_call_operand.vmem [shape: bf16[2,8,32], index: 1, kind: input, shape index: {}]
  %s2 = inlined_call_operand.vmem [shape: bf16[2,8,32], index: 2, kind: input, shape index: {}]
  %s3 = inlined_call_operand.vmem [shape: bf16[2,8,32], index: 3, kind: output, shape index: {}]
  %s4 = sld [smem:[#allocation0]]
  $region61: #{transformer_forward.12} parent=0
    _
  %s6 = ssub.s32 1, %s4
  %s7 = scalar_select 0, %s6, %s4
  loop: start=0, step=1, limit=4
  $region2: #{transformer_forward.12} parent=0 // loop_pre_header
    _
  $region3: #{transformer_forward.12} parent=0 // loop_header
    %s9 = sphi 0, %s13
    %p10 = scmp.ge.s32.totalorder %s9, 4
    %s16 = sphi 0, %s42
    %s17 = sphi 0, %s38
    %s18 = sphi 0, %s34
    %s19 = sphi 0, %s30
    %s20 = sphi 0, %s16
    %s21 = sphi 0, %s17
    %s22 = sphi 0, %s18
    %s23 = sphi 0, %s19
    %s24 = sphi 0, %s20
    %s25 = sphi 0, %s21
    %s26 = sphi 0, %s22
    %s27 = sphi 0, %s23
    %s49 = sphi 0, %s51
    %s52 = sphi 0, %s49
    %s53 = sphi 0, %s52
    %s69 = sphi 0, %s53
    %s83 = sphi 0, %s85
    %s86 = sphi 0, %s83
    %s87 = sphi 0, %s86
    %s103 = sphi 0, %s87
    %s117 = sphi 0, %s119
    %s120 = sphi 0, %s117
    %s121 = sphi 0, %s120
    %s137 = sphi 0, %s121
    %s147 = sphi 0, %s149
    %s150 = sphi 0, %s147
    %s151 = sphi 0, %s150
    %s167 = sphi 0, %s151
  $region4: #{transformer_forward.12} parent=0 // loop_header_branch
    %12 = sbr.rel (%p10) target = $region8
  $region5: #{transformer_forward.12} parent=0 // loop_body
    %s14 = ssub.s32 %s9, 1
    %s15 = ssub.s32 %s9, 2
    %s28 = sadd.s32 1, %s19
    %p29 = scmp.ge.s32.totalorder %s28, 1
    %s30 = scalar_select %p29, 0, %s28
    %s31 = sadd.s32 1, %s18
    %s32 = scalar_select %p29, %s31, %s18
    %p33 = scmp.ge.s32.totalorder %s32, 1
    %s34 = scalar_select %p33, 0, %s32
    %s35 = sadd.s32 1, %s17
    %s36 = scalar_select %p33, %s35, %s17
    %p37 = scmp.ge.s32.totalorder %s36, 1
    %s38 = scalar_select %p37, 0, %s36
    %s39 = sadd.s32 1, %s16
    %s40 = scalar_select %p37, %s39, %s16
    %p41 = scmp.ge.s32.totalorder %s40, 2
    %s42 = scalar_select %p41, 0, %s40
    %s43 = ssub.s32 %s16, %s42
    %s44 = ssub.s32 %s18, %s34
    %s45 = sor.u32 %s43, %s44
    %s46 = ssub.s32 %s17, %s38
    %s47 = sor.u32 %s45, %s46
    %p48 = scmp.eq.s32.totalorder %s47, 0
    %s50 = sadd.s32 %s49, 1
    %s51 = scalar_select %p48, %s49, %s50
    %p54 = pneg %p48
    %p55 = scmp.eq.s32.totalorder %s9, 1
    %p56 = por %p54, %p55
    %p57 = scmp.ne.s32.totalorder %s49, %s52
    %p58 = scmp.eq.s32.totalorder %s9, 0
    %p59 = por %p57, %p58
    %p60 = scmp.ne.s32.totalorder %s49, %s52
    %p61 = scmp.eq.s32.totalorder %s14, 1
    %p62 = por %p60, %p61
    %p63 = scmp.ne.s32.totalorder %s52, %s53
    %p64 = scmp.eq.s32.totalorder %s14, 0
    %p65 = por %p63, %p64
    %p66 = scmp.ne.s32.totalorder %s52, %s53
    %p67 = scmp.eq.s32.totalorder %s15, 1
    %p68 = por %p66, %p67
    %p70 = scmp.ne.s32.totalorder %s53, %s69
    %p71 = scmp.eq.s32.totalorder %s15, 0
    %p72 = por %p70, %p71
    %p73 = scmp.lt.s32.totalorder %s18, %s19
    %s74 = scalar_select %p73, %s18, %s19
    %p75 = scmp.lt.s32.totalorder %s34, %s30
    %s76 = scalar_select %p75, %s34, %s30
    %s77 = ssub.s32 %s16, %s42
    %s78 = ssub.s32 %s74, %s76
    %s79 = sor.u32 %s77, %s78
    %s80 = ssub.s32 %s17, %s38
    %s81 = sor.u32 %s79, %s80
    %p82 = scmp.eq.s32.totalorder %s81, 0
    %s84 = sadd.s32 %s83, 1
    %s85 = scalar_select %p82, %s83, %s84
    %p88 = pneg %p82
    %p89 = scmp.eq.s32.totalorder %s9, 1
    %p90 = por %p88, %p89
    %p91 = scmp.ne.s32.totalorder %s83, %s86
    %p92 = scmp.eq.s32.totalorder %s9, 0
    %p93 = por %p91, %p92
    %p94 = scmp.ne.s32.totalorder %s83, %s86
    %p95 = scmp.eq.s32.totalorder %s14, 1
    %p96 = por %p94, %p95
    %p97 = scmp.ne.s32.totalorder %s86, %s87
    %p98 = scmp.eq.s32.totalorder %s14, 0
    %p99 = por %p97, %p98
    %p100 = scmp.ne.s32.totalorder %s86, %s87
    %p101 = scmp.eq.s32.totalorder %s15, 1
    %p102 = por %p100, %p101
    %p104 = scmp.ne.s32.totalorder %s87, %s103
    %p105 = scmp.eq.s32.totalorder %s15, 0
    %p106 = por %p104, %p105
    %p107 = scmp.lt.s32.totalorder %s18, %s19
    %s108 = scalar_select %p107, %s18, %s19
    %p109 = scmp.lt.s32.totalorder %s34, %s30
    %s110 = scalar_select %p109, %s34, %s30
    %s111 = ssub.s32 %s16, %s42
    %s112 = ssub.s32 %s108, %s110
    %s113 = sor.u32 %s111, %s112
    %s114 = ssub.s32 %s17, %s38
    %s115 = sor.u32 %s113, %s114
    %p116 = scmp.eq.s32.totalorder %s115, 0
    %s118 = sadd.s32 %s117, 1
    %s119 = scalar_select %p116, %s117, %s118
    %p122 = pneg %p116
    %p123 = scmp.eq.s32.totalorder %s9, 1
    %p124 = por %p122, %p123
    %p125 = scmp.ne.s32.totalorder %s117, %s120
    %p126 = scmp.eq.s32.totalorder %s9, 0
    %p127 = por %p125, %p126
    %p128 = scmp.ne.s32.totalorder %s117, %s120
    %p129 = scmp.eq.s32.totalorder %s14, 1
    %p130 = por %p128, %p129
    %p131 = scmp.ne.s32.totalorder %s120, %s121
    %p132 = scmp.eq.s32.totalorder %s14, 0
    %p133 = por %p131, %p132
    %p134 = scmp.ne.s32.totalorder %s120, %s121
    %p135 = scmp.eq.s32.totalorder %s15, 1
    %p136 = por %p134, %p135
    %p138 = scmp.ne.s32.totalorder %s121, %s137
    %p139 = scmp.eq.s32.totalorder %s15, 0
    %p140 = por %p138, %p139
    %s141 = ssub.s32 %s16, %s42
    %s142 = ssub.s32 %s18, %s34
    %s143 = sor.u32 %s141, %s142
    %s144 = ssub.s32 %s17, %s38
    %s145 = sor.u32 %s143, %s144
    %p146 = scmp.eq.s32.totalorder %s145, 0
    %s148 = sadd.s32 %s147, 1
    %s149 = scalar_select %p146, %s147, %s148
    %p152 = pneg %p146
    %p153 = scmp.eq.s32.totalorder %s9, 1
    %p154 = por %p152, %p153
    %p155 = scmp.ne.s32.totalorder %s147, %s150
    %p156 = scmp.eq.s32.totalorder %s9, 0
    %p157 = por %p155, %p156
    %p158 = scmp.ne.s32.totalorder %s147, %s150
    %p159 = scmp.eq.s32.totalorder %s14, 1
    %p160 = por %p158, %p159
    %p161 = scmp.ne.s32.totalorder %s150, %s151
    %p162 = scmp.eq.s32.totalorder %s14, 0
    %p163 = por %p161, %p162
    %p164 = scmp.ne.s32.totalorder %s150, %s151
    %p165 = scmp.eq.s32.totalorder %s15, 1
    %p166 = por %p164, %p165
    %p168 = scmp.ne.s32.totalorder %s151, %s167
    %p169 = scmp.eq.s32.totalorder %s15, 0
    %p170 = por %p168, %p169
    %p171 = scmp.le.s32.totalorder 1, %s9
    %p172 = scmp.lt.s32.totalorder %s9, 3
    %p173 = pnand %p171, %p172
    %p174 = pneg %p173
    // Predicated region
    $region9: #{transformer_forward.12} parent=5 // pred_check
      _
    $region10: #{transformer_forward.12} parent=5 // pred_check_branch
      %176 = sbr.rel (%p173) target = $region12
    $region11: #{transformer_forward.12} parent=5 // pred_region
      %s177 = ssub.s32 %s9, 1
    $region12: #{transformer_forward.12} parent=5 // pred_fallthru
      _
    %p178 = scmp.lt.s32.totalorder %s9, 2
    // Predicated region
    $region13: #{transformer_forward.12} parent=5 // pred_check
      %p179 = pneg %p178
    $region14: #{transformer_forward.12} parent=5 // pred_check_branch
      %181 = sbr.rel (%p179) target = $region16
    $region15: #{transformer_forward.12} parent=5 // pred_region
      // Predicated region
      $region17: #{transformer_forward.12} parent=15 // pred_check
        %p182 = pneg %p59
      $region18: #{transformer_forward.12} parent=15 // pred_check_branch
        %184 = sbr.rel (%p182) target = $region20
      $region19: #{transformer_forward.12} parent=15 // pred_region
        %p185 = scmp.lt.s32.totalorder %s16, 1
        %s186 = scalar_select %p185, %s16, 1
        %p187 = scmp.lt.s32.totalorder %s18, 0
        %s188 = scalar_select %p187, %s18, 0
        %p189 = scmp.lt.s32.totalorder %s17, 0
        %s190 = scalar_select %p189, %s17, 0
        %s191 = sadd.s32 %s190, %s188
        %s192 = sadd.s32 %s191, %s186
        %s193 = smul.addr %s192, 4
        %s194 = scalar_lea.vmem %s0, %s193
      $region20: #{transformer_forward.12} parent=15 // pred_fallthru
        _
      // Predicated region
      $region21: #{transformer_forward.12} parent=15 // pred_check
        %p195 = pneg %p93
      $region22: #{transformer_forward.12} parent=15 // pred_check_branch
        %197 = sbr.rel (%p195) target = $region24
      $region23: #{transformer_forward.12} parent=15 // pred_region
        %p198 = scmp.lt.s32.totalorder %s18, %s19
        %s199 = scalar_select %p198, %s18, %s19
        %p200 = scmp.lt.s32.totalorder %s16, 1
        %s201 = scalar_select %p200, %s16, 1
        %p202 = scmp.lt.s32.totalorder %s199, 0
        %s203 = scalar_select %p202, %s199, 0
        %p204 = scmp.lt.s32.totalorder %s17, 0
        %s205 = scalar_select %p204, %s17, 0
        %s206 = sadd.s32 %s205, %s203
        %s207 = sadd.s32 %s206, %s201
        %s208 = smul.addr %s207, 4
        %s209 = scalar_lea.vmem %s1, %s208
        %p210 = scmp.lt.s32.totalorder %s18, %s19
        %s211 = scalar_select %p210, %s18, %s19
      $region24: #{transformer_forward.12} parent=15 // pred_fallthru
        _
      // Predicated region
      $region25: #{transformer_forward.12} parent=15 // pred_check
        %p212 = pneg %p127
      $region26: #{transformer_forward.12} parent=15 // pred_check_branch
        %214 = sbr.rel (%p212) target = $region28
      $region27: #{transformer_forward.12} parent=15 // pred_region
        %p215 = scmp.lt.s32.totalorder %s18, %s19
        %s216 = scalar_select %p215, %s18, %s19
        %p217 = scmp.lt.s32.totalorder %s16, 1
        %s218 = scalar_select %p217, %s16, 1
        %p219 = scmp.lt.s32.totalorder %s216, 0
        %s220 = scalar_select %p219, %s216, 0
        %p221 = scmp.lt.s32.totalorder %s17, 0
        %s222 = scalar_select %p221, %s17, 0
        %s223 = sadd.s32 %s222, %s220
        %s224 = sadd.s32 %s223, %s218
        %s225 = smul.addr %s224, 4
        %s226 = scalar_lea.vmem %s2, %s225
        %p227 = scmp.lt.s32.totalorder %s18, %s19
        %s228 = scalar_select %p227, %s18, %s19
      $region28: #{transformer_forward.12} parent=15 // pred_fallthru
        _
    $region16: #{transformer_forward.12} parent=5 // pred_fallthru
      _
    %p229 = scmp.le.s32.totalorder 1, %s9
    %p230 = scmp.lt.s32.totalorder %s9, 3
    %p231 = pnand %p229, %p230
    %p232 = pneg %p231
    // Predicated region
    $region29: #{transformer_forward.12} parent=5 // pred_check
      _
    $region30: #{transformer_forward.12} parent=5 // pred_check_branch
      %234 = sbr.rel (%p231) target = $region32
    $region31: #{transformer_forward.12} parent=5 // pred_region
      %s235 = ssub.s32 %s9, 1
      %p236 = scmp.lt.s32.totalorder %s20, 1
      %s237 = scalar_select %p236, %s20, 1
      %p238 = scmp.lt.s32.totalorder %s22, 0
      %s239 = scalar_select %p238, %s22, 0
      %p240 = scmp.lt.s32.totalorder %s21, 0
      %s241 = scalar_select %p240, %s21, 0
      %s242 = sadd.s32 %s241, %s239
      %s243 = sadd.s32 %s242, %s237
      %s244 = smul.addr %s243, 4
      %s245 = scalar_lea.vmem %s0, %s244
      %p246 = pneg %p65
      %p247 = pneg %p62
      %p248 = scmp.lt.s32.totalorder %s22, %s23
      %s249 = scalar_select %p248, %s22, %s23
      %p250 = scmp.lt.s32.totalorder %s20, 1
      %s251 = scalar_select %p250, %s20, 1
      %p252 = scmp.lt.s32.totalorder %s249, 0
      %s253 = scalar_select %p252, %s249, 0
      %p254 = scmp.lt.s32.totalorder %s21, 0
      %s255 = scalar_select %p254, %s21, 0
      %s256 = sadd.s32 %s255, %s253
      %s257 = sadd.s32 %s256, %s251
      %s258 = smul.addr %s257, 4
      %s259 = scalar_lea.vmem %s1, %s258
      %p260 = pneg %p99
      %p261 = pneg %p96
      %p262 = scmp.lt.s32.totalorder %s22, %s23
      %s263 = scalar_select %p262, %s22, %s23
      %p264 = scmp.lt.s32.totalorder %s20, 1
      %s265 = scalar_select %p264, %s20, 1
      %p266 = scmp.lt.s32.totalorder %s263, 0
      %s267 = scalar_select %p266, %s263, 0
      %p268 = scmp.lt.s32.totalorder %s21, 0
      %s269 = scalar_select %p268, %s21, 0
      %s270 = sadd.s32 %s269, %s267
      %s271 = sadd.s32 %s270, %s265
      %s272 = smul.addr %s271, 4
      %s273 = scalar_lea.vmem %s2, %s272
      %p274 = pneg %p133
      %p275 = pneg %p130
      %p276 = pneg %p163
      %p277 = pneg %p160
      %p278 = scmp.lt.s32.totalorder %s20, 1
      %s279 = scalar_select %p278, %s20, 1
      %p280 = scmp.lt.s32.totalorder %s22, 0
      %s281 = scalar_select %p280, %s22, 0
      %p282 = scmp.lt.s32.totalorder %s21, 0
      %s283 = scalar_select %p282, %s21, 0
      %s284 = sadd.s32 %s283, %s281
      %s285 = sadd.s32 %s284, %s279
      %s286 = smul.addr %s285, 4
      %s287 = scalar_lea.vmem %s3, %s286
      %p288 = scmp.lt.s32.totalorder %s20, 1
      %s289 = scalar_select %p288, %s20, 1
      %p290 = scmp.lt.s32.totalorder %s22, 0
      %s291 = scalar_select %p290, %s22, 0
      %p292 = scmp.lt.s32.totalorder %s21, 0
      %s293 = scalar_select %p292, %s21, 0
      %s294 = sadd.s32 %s293, %s291
      %s295 = sadd.s32 %s294, %s289
      %s296 = smul.addr %s295, 4
      %s297 = scalar_lea.vmem %s0, %s296
      %p298 = scmp.lt.s32.totalorder %s22, %s23
      %s299 = scalar_select %p298, %s22, %s23
      %p300 = scmp.lt.s32.totalorder %s20, 1
      %s301 = scalar_select %p300, %s20, 1
      %p302 = scmp.lt.s32.totalorder %s299, 0
      %s303 = scalar_select %p302, %s299, 0
      %p304 = scmp.lt.s32.totalorder %s21, 0
      %s305 = scalar_select %p304, %s21, 0
      %s306 = sadd.s32 %s305, %s303
      %s307 = sadd.s32 %s306, %s301
      %s308 = smul.addr %s307, 4
      %s309 = scalar_lea.vmem %s1, %s308
      %p310 = scmp.lt.s32.totalorder %s22, %s23
      %s311 = scalar_select %p310, %s22, %s23
      %p312 = scmp.lt.s32.totalorder %s22, %s23
      %s313 = scalar_select %p312, %s22, %s23
      %p314 = scmp.lt.s32.totalorder %s20, 1
      %s315 = scalar_select %p314, %s20, 1
      %p316 = scmp.lt.s32.totalorder %s313, 0
      %s317 = scalar_select %p316, %s313, 0
      %p318 = scmp.lt.s32.totalorder %s21, 0
      %s319 = scalar_select %p318, %s21, 0
      %s320 = sadd.s32 %s319, %s317
      %s321 = sadd.s32 %s320, %s315
      %s322 = smul.addr %s321, 4
      %s323 = scalar_lea.vmem %s2, %s322
      %p324 = scmp.lt.s32.totalorder %s22, %s23
      %s325 = scalar_select %p324, %s22, %s23
      %p326 = scmp.lt.s32.totalorder %s20, 1
      %s327 = scalar_select %p326, %s20, 1
      %p328 = scmp.lt.s32.totalorder %s22, 0
      %s329 = scalar_select %p328, %s22, 0
      %p330 = scmp.lt.s32.totalorder %s21, 0
      %s331 = scalar_select %p330, %s21, 0
      %s332 = sadd.s32 %s331, %s329
      %s333 = sadd.s32 %s332, %s327
      %s334 = smul.addr %s333, 4
      %s335 = scalar_lea.vmem %s3, %s334
      %p337 = scmp.eq.s32.totalorder %s23, 0
      // Predicated region
      $region33: #{transformer_forward.12} parent=31 // pred_check
        %p338 = pneg %p337
      $region34: #{transformer_forward.12} parent=31 // pred_check_branch
        %340 = sbr.rel (%p338) target = $region36
      $region35: #{transformer_forward.12} parent=31 // pred_region
        %vm341 = vcmask 7168
        %342 = vst.msk [vmem:[#allocation2] sm:$0xff] %vm341, -inf
        %343 = vst.msk [vmem:[#allocation2 + $0x8] sm:$0xff] %vm341, -inf
        %344 = vst.msk [vmem:[#allocation2 + $0x10] sm:$0xff] %vm341, -inf
        %345 = vst.msk [vmem:[#allocation2 + $0x18] sm:$0xff] %vm341, -inf
        %346 = vst.msk [vmem:[#allocation3] sm:$0xff] %vm341, 0.0
        %347 = vst.msk [vmem:[#allocation3 + $0x8] sm:$0xff] %vm341, 0.0
        %348 = vst.msk [vmem:[#allocation3 + $0x10] sm:$0xff] %vm341, 0.0
        %349 = vst.msk [vmem:[#allocation3 + $0x18] sm:$0xff] %vm341, 0.0
        %vm350 = vcmask 64512
        %351 = vst.msk [vmem:[#allocation4] sm:$0xff] %vm350, 0.0
        %352 = vst.msk [vmem:[#allocation4 + $0x8] sm:$0xff] %vm350, 0.0
        %353 = vst.msk [vmem:[#allocation4 + $0x10] sm:$0xff] %vm350, 0.0
        %354 = vst.msk [vmem:[#allocation4 + $0x18] sm:$0xff] %vm350, 0.0
      $region36: #{transformer_forward.12} parent=31 // pred_fallthru
        _
      %p355 = scmp.lt.s32.totalorder %s23, %s22
      // Predicated region
      $region37: #{transformer_forward.12} parent=31 // pred_check
        %p356 = pneg %p355
      $region38: #{transformer_forward.12} parent=31 // pred_check_branch
        %358 = sbr.rel (%p356) target = $region40
      $region39: #{transformer_forward.12} parent=31 // pred_region
        %v359 = vld [vmem:[%s297] sm:$0xf]
        %v360 = vld [vmem:[%s309] sm:$0xf]
        %v361 = vld [vmem:[%s323] sm:$0xf]
        %vm362 = vcmask 64512
        %v364 = vsel %vm362, %v359, 0
        %v367 = vsel %vm362, %v360, 0
        %369 = vmatprep.subr.bf16.mxu0 0
        %370 = vmatpush1.bf16.xpose.msra.mxu0 %v367
        %371 = vmatprep.subr.bf16.mxu0 0
        %372 = vmatpush1.bf16.xpose.msra.mxu0 0
        %373 = vmatprep.subr.bf16.mxu0 0
        %374 = vmatpush1.bf16.xpose.msra.mxu0 0
        %375 = vmatprep.subr.bf16.mxu0 0
        %376 = vmatpush1.bf16.xpose.msra.mxu0 0
        %377 = vmatprep.subr.bf16.mxu0 0
        %378 = vmatpush1.bf16.xpose.msra.mxu0 0
        %379 = vmatprep.subr.bf16.mxu0 0
        %380 = vmatpush1.bf16.xpose.msra.mxu0 0
        %381 = vmatprep.subr.bf16.mxu0 0
        %382 = vmatpush1.bf16.xpose.msra.mxu0 0
        %383 = vmatprep.subr.bf16.mxu0 0
        %384 = vmatpush1.bf16.xpose.msra.mxu0 0
        %385 = vmatprep.subr.bf16.mxu0 0
        %386 = vmatpush1.bf16.xpose.msra.mxu0 0
        %387 = vmatprep.subr.bf16.mxu0 0
        %388 = vmatpush1.bf16.xpose.msra.mxu0 0
        %389 = vmatprep.subr.bf16.mxu0 0
        %390 = vmatpush1.bf16.xpose.msra.mxu0 0
        %391 = vmatprep.subr.bf16.mxu0 0
        %392 = vmatpush1.bf16.xpose.msra.mxu0 0
        %393 = vmatprep.subr.bf16.mxu0 0
        %394 = vmatpush1.bf16.xpose.msra.mxu0 0
        %395 = vmatprep.subr.bf16.mxu0 0
        %396 = vmatpush1.bf16.xpose.msra.mxu0 0
        %397 = vmatprep.subr.bf16.mxu0 0
        %398 = vmatpush1.bf16.xpose.msra.mxu0 0
        %399 = vmatprep.subr.bf16.mxu0 0
        %400 = vmatpush1.bf16.xpose.msra.mxu0 0
        %401 = vmatprep.mubr.bf16.mxu0 0
        %402 = vmatmul.mubr.bf16.gmra.mrb[0].mxu0 %v364
        %v403 = vpop.f32.mrb[0].mxu0
        %v404 = vadd.f32 0.0, %v403
        %v405 = vpop.f32.mrb[0].mxu0
        %v406 = vpop.f32.mrb[0].mxu0
        %v407 = vpop.f32.mrb[0].mxu0
        %408 = vdwg.mxu0
        %v409 = vld [vmem:[#allocation2] sm:$0xff]
        %v410 = vsel %vm362, %v404, -inf
        %411 = vmax.xlane.f32.xlu0 %v410
        %v412 = vpop.xlane.xlu0 %411
        %v413 = vmax.f32 %v409, %v412
        %v414 = vsub.f32 %v409, %v413
        %v415 = vmul.f32 %v414, 1.442695
        %v416 = vpow.pop %v415
        %418 = vset.pattern.permute.xlu0 0
        %419 = vperm.xlu0 %418, %v413
        %v420 = vpop.permute.xlu0 %419
        %v422 = vsub.f32 %v404, %v420
        %v423 = vmul.f32 %v422, 1.442695
        %v424 = vpow.pop %v423
        %v425 = vld [vmem:[#allocation3] sm:$0xff]
        %v426 = vmul.f32 %v416, %v425
        %v427 = vsel %vm362, %v424, 0.0
        %428 = vadd.xlane.f32.xlu0 %v427
        %v429 = vpop.xlane.xlu0 %428
        %v430 = vadd.f32 %v426, %v429
        %vm431 = vcmask 7168
        %432 = vst.msk [vmem:[#allocation3] sm:$0xff] %vm431, %v430
        %v433 = vld [vmem:[#allocation4] sm:$0xff]
        %435 = vset.pattern.permute.xlu0 0
        %436 = vperm.xlu0 %435, %v416
        %v437 = vpop.permute.xlu0 %436
        %v439 = vmul.f32 %v437, %v433
        %v440 = vpack.c.bf16 %v424, %v424
        %v442 = vsel %vm362, %v440, 0
        %vm444 = vcmask 1043456
        %v446 = vsel %vm444, %v361, 0
        %448 = vmatprep.subr.bf16.mxu0 0
        %449 = vmatpush1.bf16.msra.mxu0 %v446
        %450 = vmatprep.subr.bf16.mxu0 0
        %451 = vmatpush1.bf16.msra.mxu0 0
        %452 = vmatprep.subr.bf16.mxu0 0
        %453 = vmatpush1.bf16.msra.mxu0 0
        %454 = vmatprep.subr.bf16.mxu0 0
        %455 = vmatpush1.bf16.msra.mxu0 0
        %456 = vmatprep.subr.bf16.mxu0 0
        %457 = vmatpush1.bf16.msra.mxu0 0
        %458 = vmatprep.subr.bf16.mxu0 0
        %459 = vmatpush1.bf16.msra.mxu0 0
        %460 = vmatprep.subr.bf16.mxu0 0
        %461 = vmatpush1.bf16.msra.mxu0 0
        %462 = vmatprep.subr.bf16.mxu0 0
        %463 = vmatpush1.bf16.msra.mxu0 0
        %464 = vmatprep.subr.bf16.mxu0 0
        %465 = vmatpush1.bf16.msra.mxu0 0
        %466 = vmatprep.subr.bf16.mxu0 0
        %467 = vmatpush1.bf16.msra.mxu0 0
        %468 = vmatprep.subr.bf16.mxu0 0
        %469 = vmatpush1.bf16.msra.mxu0 0
        %470 = vmatprep.subr.bf16.mxu0 0
        %471 = vmatpush1.bf16.msra.mxu0 0
        %472 = vmatprep.subr.bf16.mxu0 0
        %473 = vmatpush1.bf16.msra.mxu0 0
        %474 = vmatprep.subr.bf16.mxu0 0
        %475 = vmatpush1.bf16.msra.mxu0 0
        %476 = vmatprep.subr.bf16.mxu0 0
        %477 = vmatpush1.bf16.msra.mxu0 0
        %478 = vmatprep.subr.bf16.mxu0 0
        %479 = vmatpush1.bf16.msra.mxu0 0
        %480 = vmatprep.mubr.bf16.mxu0 0
        %481 = vmatmul.mubr.bf16.gmra.mrb[0].mxu0 %v442
        %v482 = vpop.f32.mrb[0].mxu0
        %v483 = vadd.f32 0.0, %v482
        %v484 = vpop.f32.mrb[0].mxu0
        %v485 = vpop.f32.mrb[0].mxu0
        %v486 = vpop.f32.mrb[0].mxu0
        %487 = vdwg.mxu0
        %v488 = vadd.f32 %v439, %v483
        %489 = vst.msk [vmem:[#allocation4] sm:$0xff] %vm362, %v488
        %490 = vst.msk [vmem:[#allocation2] sm:$0xff] %vm431, %v413
        %v491 = vld [vmem:[%s297] sm:$0xf]
        %v492 = vld [vmem:[%s309] sm:$0xf]
        %v493 = vld [vmem:[%s323] sm:$0xf]
        %v495 = vunpack.c.l.b16 %v491
        %v496 = vpack.c.b16 %v495, %v495
        %497 = vrot.lane.b32.xlu0 %v496, 120
        %v498 = vpop.permute.xlu0 %497
        %v500 = vunpack.c.l.b16 %v492
        %v501 = vpack.c.b16 %v500, %v500
        %502 = vrot.lane.b32.xlu0 %v501, 120
        %v503 = vpop.permute.xlu0 %502
        %v505 = vsel %vm362, %v498, 0
        %v508 = vsel %vm362, %v503, 0
        %510 = vmatprep.subr.bf16.mxu0 0
        %511 = vmatpush1.bf16.xpose.msra.mxu0 %v508
        %512 = vmatprep.subr.bf16.mxu0 0
        %513 = vmatpush1.bf16.xpose.msra.mxu0 0
        %514 = vmatprep.subr.bf16.mxu0 0
        %515 = vmatpush1.bf16.xpose.msra.mxu0 0
        %516 = vmatprep.subr.bf16.mxu0 0
        %517 = vmatpush1.bf16.xpose.msra.mxu0 0
        %518 = vmatprep.subr.bf16.mxu0 0
        %519 = vmatpush1.bf16.xpose.msra.mxu0 0
        %520 = vmatprep.subr.bf16.mxu0 0
        %521 = vmatpush1.bf16.xpose.msra.mxu0 0
        %522 = vmatprep.subr.bf16.mxu0 0
        %523 = vmatpush1.bf16.xpose.msra.mxu0 0
        %524 = vmatprep.subr.bf16.mxu0 0
        %525 = vmatpush1.bf16.xpose.msra.mxu0 0
        %526 = vmatprep.subr.bf16.mxu0 0
        %527 = vmatpush1.bf16.xpose.msra.mxu0 0
        %528 = vmatprep.subr.bf16.mxu0 0
        %529 = vmatpush1.bf16.xpose.msra.mxu0 0
        %530 = vmatprep.subr.bf16.mxu0 0
        %531 = vmatpush1.bf16.xpose.msra.mxu0 0
        %532 = vmatprep.subr.bf16.mxu0 0
        %533 = vmatpush1.bf16.xpose.msra.mxu0 0
        %534 = vmatprep.subr.bf16.mxu0 0
        %535 = vmatpush1.bf16.xpose.msra.mxu0 0
        %536 = vmatprep.subr.bf16.mxu0 0
        %537 = vmatpush1.bf16.xpose.msra.mxu0 0
        %538 = vmatprep.subr.bf16.mxu0 0
        %539 = vmatpush1.bf16.xpose.msra.mxu0 0
        %540 = vmatprep.subr.bf16.mxu0 0
        %541 = vmatpush1.bf16.xpose.msra.mxu0 0
        %542 = vmatprep.mubr.bf16.mxu0 0
        %543 = vmatmul.mubr.bf16.gmra.mrb[0].mxu0 %v505
        %v544 = vpop.f32.mrb[0].mxu0
        %v545 = vadd.f32 0.0, %v544
        %v546 = vpop.f32.mrb[0].mxu0
        %v547 = vpop.f32.mrb[0].mxu0
        %v548 = vpop.f32.mrb[0].mxu0
        %549 = vdwg.mxu0
        %s550 = scalar_lea.vmem [#allocation2], 8
        %v551 = vld [vmem:[%s550] sm:$0xff]
        %v552 = vsel %vm362, %v545, -inf
        %553 = vmax.xlane.f32.xlu0 %v552
        %v554 = vpop.xlane.xlu0 %553
        %v555 = vmax.f32 %v551, %v554
        %v556 = vsub.f32 %v551, %v555
        %v557 = vmul.f32 %v556, 1.442695
        %v558 = vpow.pop %v557
        %560 = vset.pattern.permute.xlu0 0
        %561 = vperm.xlu0 %560, %v555
        %v562 = vpop.permute.xlu0 %561
        %v564 = vsub.f32 %v545, %v562
        %v565 = vmul.f32 %v564, 1.442695
        %v566 = vpow.pop %v565
        %s567 = scalar_lea.vmem [#allocation3], 8
        %v568 = vld [vmem:[%s567] sm:$0xff]
        %v569 = vmul.f32 %v558, %v568
        %v570 = vsel %vm362, %v566, 0.0
        %571 = vadd.xlane.f32.xlu0 %v570
        %v572 = vpop.xlane.xlu0 %571
        %v573 = vadd.f32 %v569, %v572
        %574 = vst.msk [vmem:[%s567] sm:$0xff] %vm431, %v573
        %s575 = scalar_lea.vmem [#allocation4], 8
        %v576 = vld [vmem:[%s575] sm:$0xff]
        %578 = vset.pattern.permute.xlu0 0
        %579 = vperm.xlu0 %578, %v558
        %v580 = vpop.permute.xlu0 %579
        %v582 = vmul.f32 %v580, %v576
        %v583 = vpack.c.bf16 %v566, %v566
        %v585 = vunpack.c.l.b16 %v493
        %v586 = vpack.c.b16 %v585, %v585
        %587 = vrot.lane.b32.xlu0 %v586, 120
        %v588 = vpop.permute.xlu0 %587
        %v590 = vsel %vm362, %v583, 0
        %v593 = vsel %vm444, %v588, 0
        %595 = vmatprep.subr.bf16.mxu0 0
        %596 = vmatpush1.bf16.msra.mxu0 %v593
        %597 = vmatprep.subr.bf16.mxu0 0
        %598 = vmatpush1.bf16.msra.mxu0 0
        %599 = vmatprep.subr.bf16.mxu0 0
        %600 = vmatpush1.bf16.msra.mxu0 0
        %601 = vmatprep.subr.bf16.mxu0 0
        %602 = vmatpush1.bf16.msra.mxu0 0
        %603 = vmatprep.subr.bf16.mxu0 0
        %604 = vmatpush1.bf16.msra.mxu0 0
        %605 = vmatprep.subr.bf16.mxu0 0
        %606 = vmatpush1.bf16.msra.mxu0 0
        %607 = vmatprep.subr.bf16.mxu0 0
        %608 = vmatpush1.bf16.msra.mxu0 0
        %609 = vmatprep.subr.bf16.mxu0 0
        %610 = vmatpush1.bf16.msra.mxu0 0
        %611 = vmatprep.subr.bf16.mxu0 0
        %612 = vmatpush1.bf16.msra.mxu0 0
        %613 = vmatprep.subr.bf16.mxu0 0
        %614 = vmatpush1.bf16.msra.mxu0 0
        %615 = vmatprep.subr.bf16.mxu0 0
        %616 = vmatpush1.bf16.msra.mxu0 0
        %617 = vmatprep.subr.bf16.mxu0 0
        %618 = vmatpush1.bf16.msra.mxu0 0
        %619 = vmatprep.subr.bf16.mxu0 0
        %620 = vmatpush1.bf16.msra.mxu0 0
        %621 = vmatprep.subr.bf16.mxu0 0
        %622 = vmatpush1.bf16.msra.mxu0 0
        %623 = vmatprep.subr.bf16.mxu0 0
        %624 = vmatpush1.bf16.msra.mxu0 0
        %625 = vmatprep.subr.bf16.mxu0 0
        %626 = vmatpush1.bf16.msra.mxu0 0
        %627 = vmatprep.mubr.bf16.mxu0 0
        %628 = vmatmul.mubr.bf16.gmra.mrb[0].mxu0 %v590
        %v629 = vpop.f32.mrb[0].mxu0
        %v630 = vadd.f32 0.0, %v629
        %v631 = vpop.f32.mrb[0].mxu0
        %v632 = vpop.f32.mrb[0].mxu0
        %v633 = vpop.f32.mrb[0].mxu0
        %634 = vdwg.mxu0
        %v635 = vadd.f32 %v582, %v630
        %636 = vst.msk [vmem:[%s575] sm:$0xff] %vm362, %v635
        %637 = vst.msk [vmem:[%s550] sm:$0xff] %vm431, %v555
        %v638 = vld [vmem:[%s297] sm:$0xf]
        %v639 = vld [vmem:[%s309] sm:$0xf]
        %v640 = vld [vmem:[%s323] sm:$0xf]
        %v642 = vunpack.c.l.b16 %v638
        %v643 = vpack.c.b16 %v642, %v642
        %644 = vrot.lane.b32.xlu0 %v643, 112
        %v645 = vpop.permute.xlu0 %644
        %v647 = vunpack.c.l.b16 %v639
        %v648 = vpack.c.b16 %v647, %v647
        %649 = vrot.lane.b32.xlu0 %v648, 112
        %v650 = vpop.permute.xlu0 %649
        %v652 = vsel %vm362, %v645, 0
        %v655 = vsel %vm362, %v650, 0
        %657 = vmatprep.subr.bf16.mxu0 0
        %658 = vmatpush1.bf16.xpose.msra.mxu0 %v655
        %659 = vmatprep.subr.bf16.mxu0 0
        %660 = vmatpush1.bf16.xpose.msra.mxu0 0
        %661 = vmatprep.subr.bf16.mxu0 0
        %662 = vmatpush1.bf16.xpose.msra.mxu0 0
        %663 = vmatprep.subr.bf16.mxu0 0
        %664 = vmatpush1.bf16.xpose.msra.mxu0 0
        %665 = vmatprep.subr.bf16.mxu0 0
        %666 = vmatpush1.bf16.xpose.msra.mxu0 0
        %667 = vmatprep.subr.bf16.mxu0 0
        %668 = vmatpush1.bf16.xpose.msra.mxu0 0
        %669 = vmatprep.subr.bf16.mxu0 0
        %670 = vmatpush1.bf16.xpose.msra.mxu0 0
        %671 = vmatprep.subr.bf16.mxu0 0
        %672 = vmatpush1.bf16.xpose.msra.mxu0 0
        %673 = vmatprep.subr.bf16.mxu0 0
        %674 = vmatpush1.bf16.xpose.msra.mxu0 0
        %675 = vmatprep.subr.bf16.mxu0 0
        %676 = vmatpush1.bf16.xpose.msra.mxu0 0
        %677 = vmatprep.subr.bf16.mxu0 0
        %678 = vmatpush1.bf16.xpose.msra.mxu0 0
        %679 = vmatprep.subr.bf16.mxu0 0
        %680 = vmatpush1.bf16.xpose.msra.mxu0 0
        %681 = vmatprep.subr.bf16.mxu0 0
        %682 = vmatpush1.bf16.xpose.msra.mxu0 0
        %683 = vmatprep.subr.bf16.mxu0 0
        %684 = vmatpush1.bf16.xpose.msra.mxu0 0
        %685 = vmatprep.subr.bf16.mxu0 0
        %686 = vmatpush1.bf16.xpose.msra.mxu0 0
        %687 = vmatprep.subr.bf16.mxu0 0
        %688 = vmatpush1.bf16.xpose.msra.mxu0 0
        %689 = vmatprep.mubr.bf16.mxu0 0
        %690 = vmatmul.mubr.bf16.gmra.mrb[0].mxu0 %v652
        %v691 = vpop.f32.mrb[0].mxu0
        %v692 = vadd.f32 0.0, %v691
        %v693 = vpop.f32.mrb[0].mxu0
        %v694 = vpop.f32.mrb[0].mxu0
        %v695 = vpop.f32.mrb[0].mxu0
        %696 = vdwg.mxu0
        %s697 = scalar_lea.vmem [#allocation2], 16
        %v698 = vld [vmem:[%s697] sm:$0xff]
        %v699 = vsel %vm362, %v692, -inf
        %700 = vmax.xlane.f32.xlu0 %v699
        %v701 = vpop.xlane.xlu0 %700
        %v702 = vmax.f32 %v698, %v701
        %v703 = vsub.f32 %v698, %v702
        %v704 = vmul.f32 %v703, 1.442695
        %v705 = vpow.pop %v704
        %707 = vset.pattern.permute.xlu0 0
        %708 = vperm.xlu0 %707, %v702
        %v709 = vpop.permute.xlu0 %708
        %v711 = vsub.f32 %v692, %v709
        %v712 = vmul.f32 %v711, 1.442695
        %v713 = vpow.pop %v712
        %s714 = scalar_lea.vmem [#allocation3], 16
        %v715 = vld [vmem:[%s714] sm:$0xff]
        %v716 = vmul.f32 %v705, %v715
        %v717 = vsel %vm362, %v713, 0.0
        %718 = vadd.xlane.f32.xlu0 %v717
        %v719 = vpop.xlane.xlu0 %718
        %v720 = vadd.f32 %v716, %v719
        %721 = vst.msk [vmem:[%s714] sm:$0xff] %vm431, %v720
        %s722 = scalar_lea.vmem [#allocation4], 16
        %v723 = vld [vmem:[%s722] sm:$0xff]
        %725 = vset.pattern.permute.xlu0 0
        %726 = vperm.xlu0 %725, %v705
        %v727 = vpop.permute.xlu0 %726
        %v729 = vmul.f32 %v727, %v723
        %v730 = vpack.c.bf16 %v713, %v713
        %v732 = vunpack.c.l.b16 %v640
        %v733 = vpack.c.b16 %v732, %v732
        %734 = vrot.lane.b32.xlu0 %v733, 112
        %v735 = vpop.permute.xlu0 %734
        %v737 = vsel %vm362, %v730, 0
        %v740 = vsel %vm444, %v735, 0
        %742 = vmatprep.subr.bf16.mxu0 0
        %743 = vmatpush1.bf16.msra.mxu0 %v740
        %744 = vmatprep.subr.bf16.mxu0 0
        %745 = vmatpush1.bf16.msra.mxu0 0
        %746 = vmatprep.subr.bf16.mxu0 0
        %747 = vmatpush1.bf16.msra.mxu0 0
        %748 = vmatprep.subr.bf16.mxu0 0
        %749 = vmatpush1.bf16.msra.mxu0 0
        %750 = vmatprep.subr.bf16.mxu0 0
        %751 = vmatpush1.bf16.msra.mxu0 0
        %752 = vmatprep.subr.bf16.mxu0 0
        %753 = vmatpush1.bf16.msra.mxu0 0
        %754 = vmatprep.subr.bf16.mxu0 0
        %755 = vmatpush1.bf16.msra.mxu0 0
        %756 = vmatprep.subr.bf16.mxu0 0
        %757 = vmatpush1.bf16.msra.mxu0 0
        %758 = vmatprep.subr.bf16.mxu0 0
        %759 = vmatpush1.bf16.msra.mxu0 0
        %760 = vmatprep.subr.bf16.mxu0 0
        %761 = vmatpush1.bf16.msra.mxu0 0
        %762 = vmatprep.subr.bf16.mxu0 0
        %763 = vmatpush1.bf16.msra.mxu0 0
        %764 = vmatprep.subr.bf16.mxu0 0
        %765 = vmatpush1.bf16.msra.mxu0 0
        %766 = vmatprep.subr.bf16.mxu0 0
        %767 = vmatpush1.bf16.msra.mxu0 0
        %768 = vmatprep.subr.bf16.mxu0 0
        %769 = vmatpush1.bf16.msra.mxu0 0
        %770 = vmatprep.subr.bf16.mxu0 0
        %771 = vmatpush1.bf16.msra.mxu0 0
        %772 = vmatprep.subr.bf16.mxu0 0
        %773 = vmatpush1.bf16.msra.mxu0 0
        %774 = vmatprep.mubr.bf16.mxu0 0
        %775 = vmatmul.mubr.bf16.gmra.mrb[0].mxu0 %v737
        %v776 = vpop.f32.mrb[0].mxu0
        %v777 = vadd.f32 0.0, %v776
        %v778 = vpop.f32.mrb[0].mxu0
        %v779 = vpop.f32.mrb[0].mxu0
        %v780 = vpop.f32.mrb[0].mxu0
        %781 = vdwg.mxu0
        %v782 = vadd.f32 %v729, %v777
        %783 = vst.msk [vmem:[%s722] sm:$0xff] %vm362, %v782
        %784 = vst.msk [vmem:[%s697] sm:$0xff] %vm431, %v702
        %v785 = vld [vmem:[%s297] sm:$0xf]
        %v786 = vld [vmem:[%s309] sm:$0xf]
        %v787 = vld [vmem:[%s323] sm:$0xf]
        %v789 = vunpack.c.l.b16 %v785
        %v790 = vpack.c.b16 %v789, %v789
        %791 = vrot.lane.b32.xlu0 %v790, 104
        %v792 = vpop.permute.xlu0 %791
        %v794 = vunpack.c.l.b16 %v786
        %v795 = vpack.c.b16 %v794, %v794
        %796 = vrot.lane.b32.xlu0 %v795, 104
        %v797 = vpop.permute.xlu0 %796
        %v799 = vsel %vm362, %v792, 0
        %v802 = vsel %vm362, %v797, 0
        %804 = vmatprep.subr.bf16.mxu0 0
        %805 = vmatpush1.bf16.xpose.msra.mxu0 %v802
        %806 = vmatprep.subr.bf16.mxu0 0
        %807 = vmatpush1.bf16.xpose.msra.mxu0 0
        %808 = vmatprep.subr.bf16.mxu0 0
        %809 = vmatpush1.bf16.xpose.msra.mxu0 0
        %810 = vmatprep.subr.bf16.mxu0 0
        %811 = vmatpush1.bf16.xpose.msra.mxu0 0
        %812 = vmatprep.subr.bf16.mxu0 0
        %813 = vmatpush1.bf16.xpose.msra.mxu0 0
        %814 = vmatprep.subr.bf16.mxu0 0
        %815 = vmatpush1.bf16.xpose.msra.mxu0 0
        %816 = vmatprep.subr.bf16.mxu0 0
        %817 = vmatpush1.bf16.xpose.msra.mxu0 0
        %818 = vmatprep.subr.bf16.mxu0 0
        %819 = vmatpush1.bf16.xpose.msra.mxu0 0
        %820 = vmatprep.subr.bf16.mxu0 0
        %821 = vmatpush1.bf16.xpose.msra.mxu0 0
        %822 = vmatprep.subr.bf16.mxu0 0
        %823 = vmatpush1.bf16.xpose.msra.mxu0 0
        %824 = vmatprep.subr.bf16.mxu0 0
        %825 = vmatpush1.bf16.xpose.msra.mxu0 0
        %826 = vmatprep.subr.bf16.mxu0 0
        %827 = vmatpush1.bf16.xpose.msra.mxu0 0
        %828 = vmatprep.subr.bf16.mxu0 0
        %829 = vmatpush1.bf16.xpose.msra.mxu0 0
        %830 = vmatprep.subr.bf16.mxu0 0
        %831 = vmatpush1.bf16.xpose.msra.mxu0 0
        %832 = vmatprep.subr.bf16.mxu0 0
        %833 = vmatpush1.bf16.xpose.msra.mxu0 0
        %834 = vmatprep.subr.bf16.mxu0 0
        %835 = vmatpush1.bf16.xpose.msra.mxu0 0
        %836 = vmatprep.mubr.bf16.mxu0 0
        %837 = vmatmul.mubr.bf16.gmra.mrb[0].mxu0 %v799
        %v838 = vpop.f32.mrb[0].mxu0
        %v839 = vadd.f32 0.0, %v838
        %v840 = vpop.f32.mrb[0].mxu0
        %v841 = vpop.f32.mrb[0].mxu0
        %v842 = vpop.f32.mrb[0].mxu0
        %843 = vdwg.mxu0
        %s844 = scalar_lea.vmem [#allocation2], 24
        %v845 = vld [vmem:[%s844] sm:$0xff]
        %v846 = vsel %vm362, %v839, -inf
        %847 = vmax.xlane.f32.xlu0 %v846
        %v848 = vpop.xlane.xlu0 %847
        %v849 = vmax.f32 %v845, %v848
        %v850 = vsub.f32 %v845, %v849
        %v851 = vmul.f32 %v850, 1.442695
        %v852 = vpow.pop %v851
        %854 = vset.pattern.permute.xlu0 0
        %855 = vperm.xlu0 %854, %v849
        %v856 = vpop.permute.xlu0 %855
        %v858 = vsub.f32 %v839, %v856
        %v859 = vmul.f32 %v858, 1.442695
        %v860 = vpow.pop %v859
        %s861 = scalar_lea.vmem [#allocation3], 24
        %v862 = vld [vmem:[%s861] sm:$0xff]
        %v863 = vmul.f32 %v852, %v862
        %v864 = vsel %vm362, %v860, 0.0
        %865 = vadd.xlane.f32.xlu0 %v864
        %v866 = vpop.xlane.xlu0 %865
        %v867 = vadd.f32 %v863, %v866
        %868 = vst.msk [vmem:[%s861] sm:$0xff] %vm431, %v867
        %s869 = scalar_lea.vmem [#allocation4], 24
        %v870 = vld [vmem:[%s869] sm:$0xff]
        %872 = vset.pattern.permute.xlu0 0
        %873 = vperm.xlu0 %872, %v852
        %v874 = vpop.permute.xlu0 %873
        %v876 = vmul.f32 %v874, %v870
        %v877 = vpack.c.bf16 %v860, %v860
        %v879 = vunpack.c.l.b16 %v787
        %v880 = vpack.c.b16 %v879, %v879
        %881 = vrot.lane.b32.xlu0 %v880, 104
        %v882 = vpop.permute.xlu0 %881
        %v884 = vsel %vm362, %v877, 0
        %v887 = vsel %vm444, %v882, 0
        %889 = vmatprep.subr.bf16.mxu0 0
        %890 = vmatpush1.bf16.msra.mxu0 %v887
        %891 = vmatprep.subr.bf16.mxu0 0
        %892 = vmatpush1.bf16.msra.mxu0 0
        %893 = vmatprep.subr.bf16.mxu0 0
        %894 = vmatpush1.bf16.msra.mxu0 0
        %895 = vmatprep.subr.bf16.mxu0 0
        %896 = vmatpush1.bf16.msra.mxu0 0
        %897 = vmatprep.subr.bf16.mxu0 0
        %898 = vmatpush1.bf16.msra.mxu0 0
        %899 = vmatprep.subr.bf16.mxu0 0
        %900 = vmatpush1.bf16.msra.mxu0 0
        %901 = vmatprep.subr.bf16.mxu0 0
        %902 = vmatpush1.bf16.msra.mxu0 0
        %903 = vmatprep.subr.bf16.mxu0 0
        %904 = vmatpush1.bf16.msra.mxu0 0
        %905 = vmatprep.subr.bf16.mxu0 0
        %906 = vmatpush1.bf16.msra.mxu0 0
        %907 = vmatprep.subr.bf16.mxu0 0
        %908 = vmatpush1.bf16.msra.mxu0 0
        %909 = vmatprep.subr.bf16.mxu0 0
        %910 = vmatpush1.bf16.msra.mxu0 0
        %911 = vmatprep.subr.bf16.mxu0 0
        %912 = vmatpush1.bf16.msra.mxu0 0
        %913 = vmatprep.subr.bf16.mxu0 0
        %914 = vmatpush1.bf16.msra.mxu0 0
        %915 = vmatprep.subr.bf16.mxu0 0
        %916 = vmatpush1.bf16.msra.mxu0 0
        %917 = vmatprep.subr.bf16.mxu0 0
        %918 = vmatpush1.bf16.msra.mxu0 0
        %919 = vmatprep.subr.bf16.mxu0 0
        %920 = vmatpush1.bf16.msra.mxu0 0
        %921 = vmatprep.mubr.bf16.mxu0 0
        %922 = vmatmul.mubr.bf16.gmra.mrb[0].mxu0 %v884
        %v923 = vpop.f32.mrb[0].mxu0
        %v924 = vadd.f32 0.0, %v923
        %v925 = vpop.f32.mrb[0].mxu0
        %v926 = vpop.f32.mrb[0].mxu0
        %v927 = vpop.f32.mrb[0].mxu0
        %928 = vdwg.mxu0
        %v929 = vadd.f32 %v876, %v924
        %930 = vst.msk [vmem:[%s869] sm:$0xff] %vm362, %v929
        %931 = vst.msk [vmem:[%s844] sm:$0xff] %vm431, %v849
      $region40: #{transformer_forward.12} parent=31 // pred_fallthru
        _
      %p932 = scmp.eq.s32.totalorder %s23, %s22
      // Predicated region
      $region41: #{transformer_forward.12} parent=31 // pred_check
        %p933 = pneg %p932
      $region42: #{transformer_forward.12} parent=31 // pred_check_branch
        %935 = sbr.rel (%p933) target = $region44
      $region43: #{transformer_forward.12} parent=31 // pred_region
        %v936 = vlaneseq
        %v937 = vand.u32 %v936, 127
        %v938 = vlaneseq
        %v939 = vshrl.u32 %v938, 7
        %vm940 = vcmp.le.s32.totalorder %v937, %v939
        %v941 = vld [vmem:[%s297] sm:$0xf]
        %v942 = vld [vmem:[%s309] sm:$0xf]
        %v943 = vld [vmem:[%s323] sm:$0xf]
        %vm944 = vcmask 64512
        %v946 = vsel %vm944, %v941, 0
        %v949 = vsel %vm944, %v942, 0
        %951 = vmatprep.subr.bf16.mxu0 0
        %952 = vmatpush1.bf16.xpose.msra.mxu0 %v949
        %953 = vmatprep.subr.bf16.mxu0 0
        %954 = vmatpush1.bf16.xpose.msra.mxu0 0
        %955 = vmatprep.subr.bf16.mxu0 0
        %956 = vmatpush1.bf16.xpose.msra.mxu0 0
        %957 = vmatprep.subr.bf16.mxu0 0
        %958 = vmatpush1.bf16.xpose.msra.mxu0 0
        %959 = vmatprep.subr.bf16.mxu0 0
        %960 = vmatpush1.bf16.xpose.msra.mxu0 0
        %961 = vmatprep.subr.bf16.mxu0 0
        %962 = vmatpush1.bf16.xpose.msra.mxu0 0
        %963 = vmatprep.subr.bf16.mxu0 0
        %964 = vmatpush1.bf16.xpose.msra.mxu0 0
        %965 = vmatprep.subr.bf16.mxu0 0
        %966 = vmatpush1.bf16.xpose.msra.mxu0 0
        %967 = vmatprep.subr.bf16.mxu0 0
        %968 = vmatpush1.bf16.xpose.msra.mxu0 0
        %969 = vmatprep.subr.bf16.mxu0 0
        %970 = vmatpush1.bf16.xpose.msra.mxu0 0
        %971 = vmatprep.subr.bf16.mxu0 0
        %972 = vmatpush1.bf16.xpose.msra.mxu0 0
        %973 = vmatprep.subr.bf16.mxu0 0
        %974 = vmatpush1.bf16.xpose.msra.mxu0 0
        %975 = vmatprep.subr.bf16.mxu0 0
        %976 = vmatpush1.bf16.xpose.msra.mxu0 0
        %977 = vmatprep.subr.bf16.mxu0 0
        %978 = vmatpush1.bf16.xpose.msra.mxu0 0
        %979 = vmatprep.subr.bf16.mxu0 0
        %980 = vmatpush1.bf16.xpose.msra.mxu0 0
        %981 = vmatprep.subr.bf16.mxu0 0
        %982 = vmatpush1.bf16.xpose.msra.mxu0 0
        %983 = vmatprep.mubr.bf16.mxu0 0
        %984 = vmatmul.mubr.bf16.gmra.mrb[0].mxu0 %v946
        %v985 = vpop.f32.mrb[0].mxu0
        %v986 = vadd.f32 0.0, %v985
        %v987 = vpop.f32.mrb[0].mxu0
        %v988 = vpop.f32.mrb[0].mxu0
        %v989 = vpop.f32.mrb[0].mxu0
        %990 = vdwg.mxu0
        %v991 = vsel %vm940, %v986, -1e+30
        %v992 = vld [vmem:[#allocation2] sm:$0xff]
        %v993 = vsel %vm944, %v991, -inf
        %994 = vmax.xlane.f32.xlu0 %v993
        %v995 = vpop.xlane.xlu0 %994
        %v996 = vmax.f32 %v992, %v995
        %v997 = vsub.f32 %v992, %v996
        %v998 = vmul.f32 %v997, 1.442695
        %v999 = vpow.pop %v998
        %1001 = vset.pattern.permute.xlu0 0
        %1002 = vperm.xlu0 %1001, %v996
        %v1003 = vpop.permute.xlu0 %1002
        %v1005 = vsub.f32 %v991, %v1003
        %v1006 = vmul.f32 %v1005, 1.442695
        %v1007 = vpow.pop %v1006
        %v1008 = vld [vmem:[#allocation3] sm:$0xff]
        %v1009 = vmul.f32 %v999, %v1008
        %v1010 = vsel %vm944, %v1007, 0.0
        %1011 = vadd.xlane.f32.xlu0 %v1010
        %v1012 = vpop.xlane.xlu0 %1011
        %v1013 = vadd.f32 %v1009, %v1012
        %vm1014 = vcmask 7168
        %1015 = vst.msk [vmem:[#allocation3] sm:$0xff] %vm1014, %v1013
        %v1016 = vld [vmem:[#allocation4] sm:$0xff]
        %1018 = vset.pattern.permute.xlu0 0
        %1019 = vperm.xlu0 %1018, %v999
        %v1020 = vpop.permute.xlu0 %1019
        %v1022 = vmul.f32 %v1020, %v1016
        %v1023 = vpack.c.bf16 %v1007, %v1007
        %v1025 = vsel %vm944, %v1023, 0
        %vm1027 = vcmask 1043456
        %v1029 = vsel %vm1027, %v943, 0
        %1031 = vmatprep.subr.bf16.mxu0 0
        %1032 = vmatpush1.bf16.msra.mxu0 %v1029
        %1033 = vmatprep.subr.bf16.mxu0 0
        %1034 = vmatpush1.bf16.msra.mxu0 0
        %1035 = vmatprep.subr.bf16.mxu0 0
        %1036 = vmatpush1.bf16.msra.mxu0 0
        %1037 = vmatprep.subr.bf16.mxu0 0
        %1038 = vmatpush1.bf16.msra.mxu0 0
        %1039 = vmatprep.subr.bf16.mxu0 0
        %1040 = vmatpush1.bf16.msra.mxu0 0
        %1041 = vmatprep.subr.bf16.mxu0 0
        %1042 = vmatpush1.bf16.msra.mxu0 0
        %1043 = vmatprep.subr.bf16.mxu0 0
        %1044 = vmatpush1.bf16.msra.mxu0 0
        %1045 = vmatprep.subr.bf16.mxu0 0
        %1046 = vmatpush1.bf16.msra.mxu0 0
        %1047 = vmatprep.subr.bf16.mxu0 0
        %1048 = vmatpush1.bf16.msra.mxu0 0
        %1049 = vmatprep.subr.bf16.mxu0 0
        %1050 = vmatpush1.bf16.msra.mxu0 0
        %1051 = vmatprep.subr.bf16.mxu0 0
        %1052 = vmatpush1.bf16.msra.mxu0 0
        %1053 = vmatprep.subr.bf16.mxu0 0
        %1054 = vmatpush1.bf16.msra.mxu0 0
        %1055 = vmatprep.subr.bf16.mxu0 0
        %1056 = vmatpush1.bf16.msra.mxu0 0
        %1057 = vmatprep.subr.bf16.mxu0 0
        %1058 = vmatpush1.bf16.msra.mxu0 0
        %1059 = vmatprep.subr.bf16.mxu0 0
        %1060 = vmatpush1.bf16.msra.mxu0 0
        %1061 = vmatprep.subr.bf16.mxu0 0
        %1062 = vmatpush1.bf16.msra.mxu0 0
        %1063 = vmatprep.mubr.bf16.mxu0 0
        %1064 = vmatmul.mubr.bf16.gmra.mrb[0].mxu0 %v1025
        %v1065 = vpop.f32.mrb[0].mxu0
        %v1066 = vadd.f32 0.0, %v1065
        %v1067 = vpop.f32.mrb[0].mxu0
        %v1068 = vpop.f32.mrb[0].mxu0
        %v1069 = vpop.f32.mrb[0].mxu0
        %1070 = vdwg.mxu0
        %v1071 = vadd.f32 %v1022, %v1066
        %1072 = vst.msk [vmem:[#allocation4] sm:$0xff] %vm944, %v1071
        %1073 = vst.msk [vmem:[#allocation2] sm:$0xff] %vm1014, %v996
        %v1074 = vld [vmem:[%s297] sm:$0xf]
        %v1075 = vld [vmem:[%s309] sm:$0xf]
        %v1076 = vld [vmem:[%s323] sm:$0xf]
        %v1078 = vunpack.c.l.b16 %v1074
        %v1079 = vpack.c.b16 %v1078, %v1078
        %1080 = vrot.lane.b32.xlu0 %v1079, 120
        %v1081 = vpop.permute.xlu0 %1080
        %v1083 = vunpack.c.l.b16 %v1075
        %v1084 = vpack.c.b16 %v1083, %v1083
        %1085 = vrot.lane.b32.xlu0 %v1084, 120
        %v1086 = vpop.permute.xlu0 %1085
        %v1088 = vsel %vm944, %v1081, 0
        %v1091 = vsel %vm944, %v1086, 0
        %1093 = vmatprep.subr.bf16.mxu0 0
        %1094 = vmatpush1.bf16.xpose.msra.mxu0 %v1091
        %1095 = vmatprep.subr.bf16.mxu0 0
        %1096 = vmatpush1.bf16.xpose.msra.mxu0 0
        %1097 = vmatprep.subr.bf16.mxu0 0
        %1098 = vmatpush1.bf16.xpose.msra.mxu0 0
        %1099 = vmatprep.subr.bf16.mxu0 0
        %1100 = vmatpush1.bf16.xpose.msra.mxu0 0
        %1101 = vmatprep.subr.bf16.mxu0 0
        %1102 = vmatpush1.bf16.xpose.msra.mxu0 0
        %1103 = vmatprep.subr.bf16.mxu0 0
        %1104 = vmatpush1.bf16.xpose.msra.mxu0 0
        %1105 = vmatprep.subr.bf16.mxu0 0
        %1106 = vmatpush1.bf16.xpose.msra.mxu0 0
        %1107 = vmatprep.subr.bf16.mxu0 0
        %1108 = vmatpush1.bf16.xpose.msra.mxu0 0
        %1109 = vmatprep.subr.bf16.mxu0 0
        %1110 = vmatpush1.bf16.xpose.msra.mxu0 0
        %1111 = vmatprep.subr.bf16.mxu0 0
        %1112 = vmatpush1.bf16.xpose.msra.mxu0 0
        %1113 = vmatprep.subr.bf16.mxu0 0
        %1114 = vmatpush1.bf16.xpose.msra.mxu0 0
        %1115 = vmatprep.subr.bf16.mxu0 0
        %1116 = vmatpush1.bf16.xpose.msra.mxu0 0
        %1117 = vmatprep.subr.bf16.mxu0 0
        %1118 = vmatpush1.bf16.xpose.msra.mxu0 0
        %1119 = vmatprep.subr.bf16.mxu0 0
        %1120 = vmatpush1.bf16.xpose.msra.mxu0 0
        %1121 = vmatprep.subr.bf16.mxu0 0
        %1122 = vmatpush1.bf16.xpose.msra.mxu0 0
        %1123 = vmatprep.subr.bf16.mxu0 0
        %1124 = vmatpush1.bf16.xpose.msra.mxu0 0
        %1125 = vmatprep.mubr.bf16.mxu0 0
        %1126 = vmatmul.mubr.bf16.gmra.mrb[0].mxu0 %v1088
        %v1127 = vpop.f32.mrb[0].mxu0
        %v1128 = vadd.f32 0.0, %v1127
        %v1129 = vpop.f32.mrb[0].mxu0
        %v1130 = vpop.f32.mrb[0].mxu0
        %v1131 = vpop.f32.mrb[0].mxu0
        %1132 = vdwg.mxu0
        %v1133 = vsel %vm940, %v1128, -1e+30
        %s1134 = scalar_lea.vmem [#allocation2], 8
        %v1135 = vld [vmem:[%s1134] sm:$0xff]
        %v1136 = vsel %vm944, %v1133, -inf
        %1137 = vmax.xlane.f32.xlu0 %v1136
        %v1138 = vpop.xlane.xlu0 %1137
        %v1139 = vmax.f32 %v1135, %v1138
        %v1140 = vsub.f32 %v1135, %v1139
        %v1141 = vmul.f32 %v1140, 1.442695
        %v1142 = vpow.pop %v1141
        %1144 = vset.pattern.permute.xlu0 0
        %1145 = vperm.xlu0 %1144, %v1139
        %v1146 = vpop.permute.xlu0 %1145
        %v1148 = vsub.f32 %v1133, %v1146
        %v1149 = vmul.f32 %v1148, 1.442695
        %v1150 = vpow.pop %v1149
        %s1151 = scalar_lea.vmem [#allocation3], 8
        %v1152 = vld [vmem:[%s1151] sm:$0xff]
        %v1153 = vmul.f32 %v1142, %v1152
        %v1154 = vsel %vm944, %v1150, 0.0
        %1155 = vadd.xlane.f32.xlu0 %v1154
        %v1156 = vpop.xlane.xlu0 %1155
        %v1157 = vadd.f32 %v1153, %v1156
        %1158 = vst.msk [vmem:[%s1151] sm:$0xff] %vm1014, %v1157
        %s1159 = scalar_lea.vmem [#allocation4], 8
        %v1160 = vld [vmem:[%s1159] sm:$0xff]
        %1162 = vset.pattern.permute.xlu0 0
        %1163 = vperm.xlu0 %1162, %v1142
        %v1164 = vpop.permute.xlu0 %1163
        %v1166 = vmul.f32 %v1164, %v1160
        %v1167 = vpack.c.bf16 %v1150, %v1150
        %v1169 = vunpack.c.l.b16 %v1076
        %v1170 = vpack.c.b16 %v1169, %v1169
        %1171 = vrot.lane.b32.xlu0 %v1170, 120
        %v1172 = vpop.permute.xlu0 %1171
        %v1174 = vsel %vm944, %v1167, 0
        %v1177 = vsel %vm1027, %v1172, 0
        %1179 = vmatprep.subr.bf16.mxu0 0
        %1180 = vmatpush1.bf16.msra.mxu0 %v1177
        %1181 = vmatprep.subr.bf16.mxu0 0
        %1182 = vmatpush1.bf16.msra.mxu0 0
        %1183 = vmatprep.subr.bf16.mxu0 0
        %1184 = vmatpush1.bf16.msra.mxu0 0
        %1185 = vmatprep.subr.bf16.mxu0 0
        %1186 = vmatpush1.bf16.msra.mxu0 0
        %1187 = vmatprep.subr.bf16.mxu0 0
        %1188 = vmatpush1.bf16.msra.mxu0 0
        %1189 = vmatprep.subr.bf16.mxu0 0
        %1190 = vmatpush1.bf16.msra.mxu0 0
        %1191 = vmatprep.subr.bf16.mxu0 0
        %1192 = vmatpush1.bf16.msra.mxu0 0
        %1193 = vmatprep.subr.bf16.mxu0 0
        %1194 = vmatpush1.bf16.msra.mxu0 0
        %1195 = vmatprep.subr.bf16.mxu0 0
        %1196 = vmatpush1.bf16.msra.mxu0 0
        %1197 = vmatprep.subr.bf16.mxu0 0
        %1198 = vmatpush1.bf16.msra.mxu0 0
        %1199 = vmatprep.subr.bf16.mxu0 0
        %1200 = vmatpush1.bf16.msra.mxu0 0
        %1201 = vmatprep.subr.bf16.mxu0 0
        %1202 = vmatpush1.bf16.msra.mxu0 0
        %1203 = vmatprep.subr.bf16.mxu0 0
        %1204 = vmatpush1.bf16.msra.mxu0 0
        %1205 = vmatprep.subr.bf16.mxu0 0
        %1206 = vmatpush1.bf16.msra.mxu0 0
        %1207 = vmatprep.subr.bf16.mxu0 0
        %1208 = vmatpush1.bf16.msra.mxu0 0
        %1209 = vmatprep.subr.bf16.mxu0 0
        %1210 = vmatpush1.bf16.msra.mxu0 0
        %1211 = vmatprep.mubr.bf16.mxu0 0
        %1212 = vmatmul.mubr.bf16.gmra.mrb[0].mxu0 %v1174
        %v1213 = vpop.f32.mrb[0].mxu0
        %v1214 = vadd.f32 0.0, %v1213
        %v1215 = vpop.f32.mrb[0].mxu0
        %v1216 = vpop.f32.mrb[0].mxu0
        %v1217 = vpop.f32.mrb[0].mxu0
        %1218 = vdwg.mxu0
        %v1219 = vadd.f32 %v1166, %v1214
        %1220 = vst.msk [vmem:[%s1159] sm:$0xff] %vm944, %v1219
        %1221 = vst.msk [vmem:[%s1134] sm:$0xff] %vm1014, %v1139
        %v1222 = vld [vmem:[%s297] sm:$0xf]
        %v1223 = vld [vmem:[%s309] sm:$0xf]
        %v1224 = vld [vmem:[%s323] sm:$0xf]
        %v1226 = vunpack.c.l.b16 %v1222
        %v1227 = vpack.c.b16 %v1226, %v1226
        %1228 = vrot.lane.b32.xlu0 %v1227, 112
        %v1229 = vpop.permute.xlu0 %1228
        %v1231 = vunpack.c.l.b16 %v1223
        %v1232 = vpack.c.b16 %v1231, %v1231
        %1233 = vrot.lane.b32.xlu0 %v1232, 112
        %v1234 = vpop.permute.xlu0 %1233
        %v1236 = vsel %vm944, %v1229, 0
        %v1239 = vsel %vm944, %v1234, 0
        %1241 = vmatprep.subr.bf16.mxu0 0
        %1242 = vmatpush1.bf16.xpose.msra.mxu0 %v1239
        %1243 = vmatprep.subr.bf16.mxu0 0
        %1244 = vmatpush1.bf16.xpose.msra.mxu0 0
        %1245 = vmatprep.subr.bf16.mxu0 0
        %1246 = vmatpush1.bf16.xpose.msra.mxu0 0
        %1247 = vmatprep.subr.bf16.mxu0 0
        %1248 = vmatpush1.bf16.xpose.msra.mxu0 0
        %1249 = vmatprep.subr.bf16.mxu0 0
        %1250 = vmatpush1.bf16.xpose.msra.mxu0 0
        %1251 = vmatprep.subr.bf16.mxu0 0
        %1252 = vmatpush1.bf16.xpose.msra.mxu0 0
        %1253 = vmatprep.subr.bf16.mxu0 0
        %1254 = vmatpush1.bf16.xpose.msra.mxu0 0
        %1255 = vmatprep.subr.bf16.mxu0 0
        %1256 = vmatpush1.bf16.xpose.msra.mxu0 0
        %1257 = vmatprep.subr.bf16.mxu0 0
        %1258 = vmatpush1.bf16.xpose.msra.mxu0 0
        %1259 = vmatprep.subr.bf16.mxu0 0
        %1260 = vmatpush1.bf16.xpose.msra.mxu0 0
        %1261 = vmatprep.subr.bf16.mxu0 0
        %1262 = vmatpush1.bf16.xpose.msra.mxu0 0
        %1263 = vmatprep.subr.bf16.mxu0 0
        %1264 = vmatpush1.bf16.xpose.msra.mxu0 0
        %1265 = vmatprep.subr.bf16.mxu0 0
        %1266 = vmatpush1.bf16.xpose.msra.mxu0 0
        %1267 = vmatprep.subr.bf16.mxu0 0
        %1268 = vmatpush1.bf16.xpose.msra.mxu0 0
        %1269 = vmatprep.subr.bf16.mxu0 0
        %1270 = vmatpush1.bf16.xpose.msra.mxu0 0
        %1271 = vmatprep.subr.bf16.mxu0 0
        %1272 = vmatpush1.bf16.xpose.msra.mxu0 0
        %1273 = vmatprep.mubr.bf16.mxu0 0
        %1274 = vmatmul.mubr.bf16.gmra.mrb[0].mxu0 %v1236
        %v1275 = vpop.f32.mrb[0].mxu0
        %v1276 = vadd.f32 0.0, %v1275
        %v1277 = vpop.f32.mrb[0].mxu0
        %v1278 = vpop.f32.mrb[0].mxu0
        %v1279 = vpop.f32.mrb[0].mxu0
        %1280 = vdwg.mxu0
        %v1281 = vsel %vm940, %v1276, -1e+30
        %s1282 = scalar_lea.vmem [#allocation2], 16
        %v1283 = vld [vmem:[%s1282] sm:$0xff]
        %v1284 = vsel %vm944, %v1281, -inf
        %1285 = vmax.xlane.f32.xlu0 %v1284
        %v1286 = vpop.xlane.xlu0 %1285
        %v1287 = vmax.f32 %v1283, %v1286
        %v1288 = vsub.f32 %v1283, %v1287
        %v1289 = vmul.f32 %v1288, 1.442695
        %v1290 = vpow.pop %v1289
        %1292 = vset.pattern.permute.xlu0 0
        %1293 = vperm.xlu0 %1292, %v1287
        %v1294 = vpop.permute.xlu0 %1293
        %v1296 = vsub.f32 %v1281, %v1294
        %v1297 = vmul.f32 %v1296, 1.442695
        %v1298 = vpow.pop %v1297
        %s1299 = scalar_lea.vmem [#allocation3], 16
        %v1300 = vld [vmem:[%s1299] sm:$0xff]
        %v1301 = vmul.f32 %v1290, %v1300
        %v1302 = vsel %vm944, %v1298, 0.0
        %1303 = vadd.xlane.f32.xlu0 %v1302
        %v1304 = vpop.xlane.xlu0 %1303
        %v1305 = vadd.f32 %v1301, %v1304
        %1306 = vst.msk [vmem:[%s1299] sm:$0xff] %vm1014, %v1305
        %s1307 = scalar_lea.vmem [#allocation4], 16
        %v1308 = vld [vmem:[%s1307] sm:$0xff]
        %1310 = vset.pattern.permute.xlu0 0
        %1311 = vperm.xlu0 %1310, %v1290
        %v1312 = vpop.permute.xlu0 %1311
        %v1314 = vmul.f32 %v1312, %v1308
        %v1315 = vpack.c.bf16 %v1298, %v1298
        %v1317 = vunpack.c.l.b16 %v1224
        %v1318 = vpack.c.b16 %v1317, %v1317
        %1319 = vrot.lane.b32.xlu0 %v1318, 112
        %v1320 = vpop.permute.xlu0 %1319
        %v1322 = vsel %vm944, %v1315, 0
        %v1325 = vsel %vm1027, %v1320, 0
        %1327 = vmatprep.subr.bf16.mxu0 0
        %1328 = vmatpush1.bf16.msra.mxu0 %v1325
        %1329 = vmatprep.subr.bf16.mxu0 0
        %1330 = vmatpush1.bf16.msra.mxu0 0
        %1331 = vmatprep.subr.bf16.mxu0 0
        %1332 = vmatpush1.bf16.msra.mxu0 0
        %1333 = vmatprep.subr.bf16.mxu0 0
        %1334 = vmatpush1.bf16.msra.mxu0 0
        %1335 = vmatprep.subr.bf16.mxu0 0
        %1336 = vmatpush1.bf16.msra.mxu0 0
        %1337 = vmatprep.subr.bf16.mxu0 0
        %1338 = vmatpush1.bf16.msra.mxu0 0
        %1339 = vmatprep.subr.bf16.mxu0 0
        %1340 = vmatpush1.bf16.msra.mxu0 0
        %1341 = vmatprep.subr.bf16.mxu0 0
        %1342 = vmatpush1.bf16.msra.mxu0 0
        %1343 = vmatprep.subr.bf16.mxu0 0
        %1344 = vmatpush1.bf16.msra.mxu0 0
        %1345 = vmatprep.subr.bf16.mxu0 0
        %1346 = vmatpush1.bf16.msra.mxu0 0
        %1347 = vmatprep.subr.bf16.mxu0 0
        %1348 = vmatpush1.bf16.msra.mxu0 0
        %1349 = vmatprep.subr.bf16.mxu0 0
        %1350 = vmatpush1.bf16.msra.mxu0 0
        %1351 = vmatprep.subr.bf16.mxu0 0
        %1352 = vmatpush1.bf16.msra.mxu0 0
        %1353 = vmatprep.subr.bf16.mxu0 0
        %1354 = vmatpush1.bf16.msra.mxu0 0
        %1355 = vmatprep.subr.bf16.mxu0 0
        %1356 = vmatpush1.bf16.msra.mxu0 0
        %1357 = vmatprep.subr.bf16.mxu0 0
        %1358 = vmatpush1.bf16.msra.mxu0 0
        %1359 = vmatprep.mubr.bf16.mxu0 0
        %1360 = vmatmul.mubr.bf16.gmra.mrb[0].mxu0 %v1322
        %v1361 = vpop.f32.mrb[0].mxu0
        %v1362 = vadd.f32 0.0, %v1361
        %v1363 = vpop.f32.mrb[0].mxu0
        %v1364 = vpop.f32.mrb[0].mxu0
        %v1365 = vpop.f32.mrb[0].mxu0
        %1366 = vdwg.mxu0
        %v1367 = vadd.f32 %v1314, %v1362
        %1368 = vst.msk [vmem:[%s1307] sm:$0xff] %vm944, %v1367
        %1369 = vst.msk [vmem:[%s1282] sm:$0xff] %vm1014, %v1287
        %v1370 = vld [vmem:[%s297] sm:$0xf]
        %v1371 = vld [vmem:[%s309] sm:$0xf]
        %v1372 = vld [vmem:[%s323] sm:$0xf]
        %v1374 = vunpack.c.l.b16 %v1370
        %v1375 = vpack.c.b16 %v1374, %v1374
        %1376 = vrot.lane.b32.xlu0 %v1375, 104
        %v1377 = vpop.permute.xlu0 %1376
        %v1379 = vunpack.c.l.b16 %v1371
        %v1380 = vpack.c.b16 %v1379, %v1379
        %1381 = vrot.lane.b32.xlu0 %v1380, 104
        %v1382 = vpop.permute.xlu0 %1381
        %v1384 = vsel %vm944, %v1377, 0
        %v1387 = vsel %vm944, %v1382, 0
        %1389 = vmatprep.subr.bf16.mxu0 0
        %1390 = vmatpush1.bf16.xpose.msra.mxu0 %v1387
        %1391 = vmatprep.subr.bf16.mxu0 0
        %1392 = vmatpush1.bf16.xpose.msra.mxu0 0
        %1393 = vmatprep.subr.bf16.mxu0 0
        %1394 = vmatpush1.bf16.xpose.msra.mxu0 0
        %1395 = vmatprep.subr.bf16.mxu0 0
        %1396 = vmatpush1.bf16.xpose.msra.mxu0 0
        %1397 = vmatprep.subr.bf16.mxu0 0
        %1398 = vmatpush1.bf16.xpose.msra.mxu0 0
        %1399 = vmatprep.subr.bf16.mxu0 0
        %1400 = vmatpush1.bf16.xpose.msra.mxu0 0
        %1401 = vmatprep.subr.bf16.mxu0 0
        %1402 = vmatpush1.bf16.xpose.msra.mxu0 0
        %1403 = vmatprep.subr.bf16.mxu0 0
        %1404 = vmatpush1.bf16.xpose.msra.mxu0 0
        %1405 = vmatprep.subr.bf16.mxu0 0
        %1406 = vmatpush1.bf16.xpose.msra.mxu0 0
        %1407 = vmatprep.subr.bf16.mxu0 0
        %1408 = vmatpush1.bf16.xpose.msra.mxu0 0
        %1409 = vmatprep.subr.bf16.mxu0 0
        %1410 = vmatpush1.bf16.xpose.msra.mxu0 0
        %1411 = vmatprep.subr.bf16.mxu0 0
        %1412 = vmatpush1.bf16.xpose.msra.mxu0 0
        %1413 = vmatprep.subr.bf16.mxu0 0
        %1414 = vmatpush1.bf16.xpose.msra.mxu0 0
        %1415 = vmatprep.subr.bf16.mxu0 0
        %1416 = vmatpush1.bf16.xpose.msra.mxu0 0
        %1417 = vmatprep.subr.bf16.mxu0 0
        %1418 = vmatpush1.bf16.xpose.msra.mxu0 0
        %1419 = vmatprep.subr.bf16.mxu0 0
        %1420 = vmatpush1.bf16.xpose.msra.mxu0 0
        %1421 = vmatprep.mubr.bf16.mxu0 0
        %1422 = vmatmul.mubr.bf16.gmra.mrb[0].mxu0 %v1384
        %v1423 = vpop.f32.mrb[0].mxu0
        %v1424 = vadd.f32 0.0, %v1423
        %v1425 = vpop.f32.mrb[0].mxu0
        %v1426 = vpop.f32.mrb[0].mxu0
        %v1427 = vpop.f32.mrb[0].mxu0
        %1428 = vdwg.mxu0
        %v1429 = vsel %vm940, %v1424, -1e+30
        %s1430 = scalar_lea.vmem [#allocation2], 24
        %v1431 = vld [vmem:[%s1430] sm:$0xff]
        %v1432 = vsel %vm944, %v1429, -inf
        %1433 = vmax.xlane.f32.xlu0 %v1432
        %v1434 = vpop.xlane.xlu0 %1433
        %v1435 = vmax.f32 %v1431, %v1434
        %v1436 = vsub.f32 %v1431, %v1435
        %v1437 = vmul.f32 %v1436, 1.442695
        %v1438 = vpow.pop %v1437
        %1440 = vset.pattern.permute.xlu0 0
        %1441 = vperm.xlu0 %1440, %v1435
        %v1442 = vpop.permute.xlu0 %1441
        %v1444 = vsub.f32 %v1429, %v1442
        %v1445 = vmul.f32 %v1444, 1.442695
        %v1446 = vpow.pop %v1445
        %s1447 = scalar_lea.vmem [#allocation3], 24
        %v1448 = vld [vmem:[%s1447] sm:$0xff]
        %v1449 = vmul.f32 %v1438, %v1448
        %v1450 = vsel %vm944, %v1446, 0.0
        %1451 = vadd.xlane.f32.xlu0 %v1450
        %v1452 = vpop.xlane.xlu0 %1451
        %v1453 = vadd.f32 %v1449, %v1452
        %1454 = vst.msk [vmem:[%s1447] sm:$0xff] %vm1014, %v1453
        %s1455 = scalar_lea.vmem [#allocation4], 24
        %v1456 = vld [vmem:[%s1455] sm:$0xff]
        %1458 = vset.pattern.permute.xlu0 0
        %1459 = vperm.xlu0 %1458, %v1438
        %v1460 = vpop.permute.xlu0 %1459
        %v1462 = vmul.f32 %v1460, %v1456
        %v1463 = vpack.c.bf16 %v1446, %v1446
        %v1465 = vunpack.c.l.b16 %v1372
        %v1466 = vpack.c.b16 %v1465, %v1465
        %1467 = vrot.lane.b32.xlu0 %v1466, 104
        %v1468 = vpop.permute.xlu0 %1467
        %v1470 = vsel %vm944, %v1463, 0
        %v1473 = vsel %vm1027, %v1468, 0
        %1475 = vmatprep.subr.bf16.mxu0 0
        %1476 = vmatpush1.bf16.msra.mxu0 %v1473
        %1477 = vmatprep.subr.bf16.mxu0 0
        %1478 = vmatpush1.bf16.msra.mxu0 0
        %1479 = vmatprep.subr.bf16.mxu0 0
        %1480 = vmatpush1.bf16.msra.mxu0 0
        %1481 = vmatprep.subr.bf16.mxu0 0
        %1482 = vmatpush1.bf16.msra.mxu0 0
        %1483 = vmatprep.subr.bf16.mxu0 0
        %1484 = vmatpush1.bf16.msra.mxu0 0
        %1485 = vmatprep.subr.bf16.mxu0 0
        %1486 = vmatpush1.bf16.msra.mxu0 0
        %1487 = vmatprep.subr.bf16.mxu0 0
        %1488 = vmatpush1.bf16.msra.mxu0 0
        %1489 = vmatprep.subr.bf16.mxu0 0
        %1490 = vmatpush1.bf16.msra.mxu0 0
        %1491 = vmatprep.subr.bf16.mxu0 0
        %1492 = vmatpush1.bf16.msra.mxu0 0
        %1493 = vmatprep.subr.bf16.mxu0 0
        %1494 = vmatpush1.bf16.msra.mxu0 0
        %1495 = vmatprep.subr.bf16.mxu0 0
        %1496 = vmatpush1.bf16.msra.mxu0 0
        %1497 = vmatprep.subr.bf16.mxu0 0
        %1498 = vmatpush1.bf16.msra.mxu0 0
        %1499 = vmatprep.subr.bf16.mxu0 0
        %1500 = vmatpush1.bf16.msra.mxu0 0
        %1501 = vmatprep.subr.bf16.mxu0 0
        %1502 = vmatpush1.bf16.msra.mxu0 0
        %1503 = vmatprep.subr.bf16.mxu0 0
        %1504 = vmatpush1.bf16.msra.mxu0 0
        %1505 = vmatprep.subr.bf16.mxu0 0
        %1506 = vmatpush1.bf16.msra.mxu0 0
        %1507 = vmatprep.mubr.bf16.mxu0 0
        %1508 = vmatmul.mubr.bf16.gmra.mrb[0].mxu0 %v1470
        %v1509 = vpop.f32.mrb[0].mxu0
        %v1510 = vadd.f32 0.0, %v1509
        %v1511 = vpop.f32.mrb[0].mxu0
        %v1512 = vpop.f32.mrb[0].mxu0
        %v1513 = vpop.f32.mrb[0].mxu0
        %1514 = vdwg.mxu0
        %v1515 = vadd.f32 %v1462, %v1510
        %1516 = vst.msk [vmem:[%s1455] sm:$0xff] %vm944, %v1515
        %1517 = vst.msk [vmem:[%s1430] sm:$0xff] %vm1014, %v1435
      $region44: #{transformer_forward.12} parent=31 // pred_fallthru
        _
      // Predicated region
      $region45: #{transformer_forward.12} parent=31 // pred_check
        %p1518 = pneg %p337
      $region46: #{transformer_forward.12} parent=31 // pred_check_branch
        %1520 = sbr.rel (%p1518) target = $region48
      $region47: #{transformer_forward.12} parent=31 // pred_region
        %v1521 = vld [vmem:[#allocation3] sm:$0xff]
        %v1522 = vrcp.pop %v1521
        %v1523 = vld [vmem:[#allocation4] sm:$0xff]
        %1525 = vset.pattern.permute.xlu0 0
        %1526 = vperm.xlu0 %1525, %v1522
        %v1527 = vpop.permute.xlu0 %1526
        %v1529 = vmul.f32 %v1523, %v1527
        %v1530 = vpack.c.bf16 %v1529, %v1529
        %vm1531 = vcmask 60416
        %1532 = vst.msk [vmem:[%s335] sm:$0xf] %vm1531, %v1530
        %s1533 = scalar_lea.vmem [#allocation3], 8
        %v1534 = vld [vmem:[%s1533] sm:$0xff]
        %v1535 = vrcp.pop %v1534
        %s1536 = scalar_lea.vmem [#allocation4], 8
        %v1537 = vld [vmem:[%s1536] sm:$0xff]
        %1539 = vset.pattern.permute.xlu0 0
        %1540 = vperm.xlu0 %1539, %v1535
        %v1541 = vpop.permute.xlu0 %1540
        %v1543 = vmul.f32 %v1537, %v1541
        %v1544 = vpack.c.bf16 %v1543, %v1543
        %v1546 = vunpack.c.l.b16 %v1544
        %v1547 = vpack.c.b16 %v1546, %v1546
        %1548 = vrot.lane.b32.xlu0 %v1547, 8
        %v1549 = vpop.permute.xlu0 %1548
        %vm1551 = vcmask 126016
        %1552 = vst.msk [vmem:[%s335] sm:$0xf] %vm1551, %v1549
        %s1553 = scalar_lea.vmem [#allocation3], 16
        %v1554 = vld [vmem:[%s1553] sm:$0xff]
        %v1555 = vrcp.pop %v1554
        %s1556 = scalar_lea.vmem [#allocation4], 16
        %v1557 = vld [vmem:[%s1556] sm:$0xff]
        %1559 = vset.pattern.permute.xlu0 0
        %1560 = vperm.xlu0 %1559, %v1555
        %v1561 = vpop.permute.xlu0 %1560
        %v1563 = vmul.f32 %v1557, %v1561
        %v1564 = vpack.c.bf16 %v1563, %v1563
        %v1566 = vunpack.c.l.b16 %v1564
        %v1567 = vpack.c.b16 %v1566, %v1566
        %1568 = vrot.lane.b32.xlu0 %v1567, 16
        %v1569 = vpop.permute.xlu0 %1568
        %vm1571 = vcmask 191616
        %1572 = vst.msk [vmem:[%s335] sm:$0xf] %vm1571, %v1569
        %s1573 = scalar_lea.vmem [#allocation3], 24
        %v1574 = vld [vmem:[%s1573] sm:$0xff]
        %v1575 = vrcp.pop %v1574
        %s1576 = scalar_lea.vmem [#allocation4], 24
        %v1577 = vld [vmem:[%s1576] sm:$0xff]
        %1579 = vset.pattern.permute.xlu0 0
        %1580 = vperm.xlu0 %1579, %v1575
        %v1581 = vpop.permute.xlu0 %1580
        %v1583 = vmul.f32 %v1577, %v1581
        %v1584 = vpack.c.bf16 %v1583, %v1583
        %v1586 = vunpack.c.l.b16 %v1584
        %v1587 = vpack.c.b16 %v1586, %v1586
        %1588 = vrot.lane.b32.xlu0 %v1587, 24
        %v1589 = vpop.permute.xlu0 %1588
        %vm1591 = vcmask 257216
        %1592 = vst.msk [vmem:[%s335] sm:$0xf] %vm1591, %v1589
      $region48: #{transformer_forward.12} parent=31 // pred_fallthru
        _
      %p1593 = scmp.lt.s32.totalorder %s20, 1
      %s1594 = scalar_select %p1593, %s20, 1
      %p1595 = scmp.lt.s32.totalorder %s22, 0
      %s1596 = scalar_select %p1595, %s22, 0
      %p1597 = scmp.lt.s32.totalorder %s21, 0
      %s1598 = scalar_select %p1597, %s21, 0
      %s1599 = sadd.s32 %s1598, %s1596
      %s1600 = sadd.s32 %s1599, %s1594
      %s1601 = smul.addr %s1600, 4
      %s1602 = scalar_lea.vmem %s3, %s1601
      // Predicated region
      $region49: #{transformer_forward.12} parent=31 // pred_check
        %p1603 = pneg %p160
      $region50: #{transformer_forward.12} parent=31 // pred_check_branch
        %1605 = sbr.rel (%p1603) target = $region52
      $region51: #{transformer_forward.12} parent=31 // pred_region
        _
      $region52: #{transformer_forward.12} parent=31 // pred_fallthru
        _
    $region32: #{transformer_forward.12} parent=5 // pred_fallthru
      _
    %p1606 = scmp.le.s32.totalorder 2, %s9
    // Predicated region
    $region53: #{transformer_forward.12} parent=5 // pred_check
      %p1607 = pneg %p1606
    $region54: #{transformer_forward.12} parent=5 // pred_check_branch
      %1609 = sbr.rel (%p1607) target = $region56
    $region55: #{transformer_forward.12} parent=5 // pred_region
      %s1610 = ssub.s32 %s9, 2
      // Predicated region
      $region57: #{transformer_forward.12} parent=55 // pred_check
        %p1611 = pneg %p166
      $region58: #{transformer_forward.12} parent=55 // pred_check_branch
        %1613 = sbr.rel (%p1611) target = $region60
      $region59: #{transformer_forward.12} parent=55 // pred_region
        %p1614 = scmp.lt.s32.totalorder %s24, 1
        %s1615 = scalar_select %p1614, %s24, 1
        %p1616 = scmp.lt.s32.totalorder %s26, 0
        %s1617 = scalar_select %p1616, %s26, 0
        %p1618 = scmp.lt.s32.totalorder %s25, 0
        %s1619 = scalar_select %p1618, %s25, 0
        %s1620 = sadd.s32 %s1619, %s1617
        %s1621 = sadd.s32 %s1620, %s1615
        %s1622 = smul.addr %s1621, 4
        %s1623 = scalar_lea.vmem %s3, %s1622
      $region60: #{transformer_forward.12} parent=55 // pred_fallthru
        _
    $region56: #{transformer_forward.12} parent=5 // pred_fallthru
      _
  $region6: #{transformer_forward.12} parent=0 // loop_footer
    %s13 = sadd.s32 1, %s9
  $region7: #{transformer_forward.12} parent=0 // loop_footer_branch
    %8 = sbr.rel target = $region3
  $region8: #{transformer_forward.12} parent=0 // loop_exit
    _

</llo_original>
